<compile_context>
chip_gen: v6e
topology: v6e:2x2x1
jax: 0.10.0
libtpu: 0.0.40
codegen_flags: <defaults>
</compile_context>

<pallas_src>
import functools

import numpy as np
import jax
import jax.numpy as jnp
from jax.experimental import pallas as pl
from jax.experimental.pallas import tpu as pltpu

BN_EPS = 1e-5
BN_SCALE = 1.0 / np.sqrt(1.0 + BN_EPS)   # eval BN with init stats: y = x / sqrt(1+eps)


# ----------------------------------------------------------------------------
# Deterministic parameter init (PyTorch nn.Linear default U(-1/sqrt(fan_in), .))
# ----------------------------------------------------------------------------
class ParamGen:
    def __init__(self, seed):
        self._key = jax.random.PRNGKey(seed)

    def next(self):
        self._key, sub = jax.random.split(self._key)
        return sub


def init_linear(pg, din, dout):
    lim = 1.0 / np.sqrt(din)
    w = jax.random.uniform(pg.next(), (din, dout), jnp.float32, -lim, lim)
    b = jax.random.uniform(pg.next(), (1, dout), jnp.float32, -lim, lim)
    return w, b


def fold_bn(w, b):
    """Fold the constant eval-BN scale into the preceding Linear."""
    return w * BN_SCALE, b * BN_SCALE


def init_feature(pg, din, H, n_fc):
    """Feature = in_layer Linear + n_fc residual BnLiear blocks (BN folded)."""
    return {"in": init_linear(pg, din, H),
            "blocks": [fold_bn(*init_linear(pg, H, H)) for _ in range(n_fc)]}


def init_merged_fc1(pg, dims_in, H, n_fc):
    """Merge the three independent fc1_* Feature branches into one Feature with
    block-diagonal weights: concat(branch outputs) == x @ W_blockdiag."""
    branches = [init_feature(pg, d, H, n_fc) for d in dims_in]
    D = int(sum(dims_in))
    n_br = len(dims_in)
    w_in = jnp.zeros((D, n_br * H), jnp.float32)
    b_in = jnp.zeros((1, n_br * H), jnp.float32)
    r = 0
    for bi, (d, br) in enumerate(zip(dims_in, branches)):
        w, b = br["in"]
        w_in = w_in.at[r:r + d, bi * H:(bi + 1) * H].set(w)
        b_in = b_in.at[:, bi * H:(bi + 1) * H].set(b)
        r += d
    blocks = []
    for li in range(n_fc):
        w_blk = jnp.zeros((n_br * H, n_br * H), jnp.float32)
        b_blk = jnp.zeros((1, n_br * H), jnp.float32)
        for bi, br in enumerate(branches):
            w, b = br["blocks"][li]          # already BN-folded
            w_blk = w_blk.at[bi * H:(bi + 1) * H, bi * H:(bi + 1) * H].set(w)
            b_blk = b_blk.at[:, bi * H:(bi + 1) * H].set(b)
        blocks.append((w_blk, b_blk))
    return {"in": (w_in, b_in), "blocks": blocks}


def init_gin(pg, H):
    # TODO(synk): torch_geometric GIN source not provided; approximated as
    # GINConv(eps=0) with MLP = Linear -> BatchNorm(eval) -> ReLU -> Linear.
    return {"lin1": fold_bn(*init_linear(pg, H, H)),
            "lin2": init_linear(pg, H, H)}


def init_head_fc2(pg, H, n_fc):
    """HeteroNet.fc2 Feature on concat([whole, top]); in_layer weight split so
    the kernel never materializes the concat."""
    w, b = init_linear(pg, 2 * H, H)
    return {"in_w_whole": w[:H, :], "in_w_top": w[H:, :], "in_b": b,
            "blocks": [fold_bn(*init_linear(pg, H, H)) for _ in range(n_fc)]}


def init_hetero(seed, H, n_fc, n_layers, feat_dim, num_classes=1):
    pg = ParamGen(seed)
    tree = {
        # StandardNet: only its active forward path (esmfc -> fc3) is used.
        "std": {"esmfc": init_linear(pg, 2560, H),
                "fc3": init_linear(pg, H, H)},
        "top": {"fc1": init_merged_fc1(pg, (feat_dim, 7, 1024), H, n_fc),
                "fc2": init_feature(pg, 3 * H, H, n_fc),
                "gin": [init_gin(pg, H) for _ in range(n_layers)],
                "fc3": init_linear(pg, H, H)},
        "head": {"fc2": init_head_fc2(pg, H, n_fc),
                 "fc3": init_linear(pg, H, num_classes)},
    }
    return {"tree": tree, "H": H, "num_classes": num_classes,
            "feat_dim": feat_dim}


# ----------------------------------------------------------------------------
# The single fused Pallas kernel: whole HeteroNet forward in VMEM.
# ----------------------------------------------------------------------------
def _hetero_kernel(*refs, treedef, n_data):
    out_ref = refs[-1]
    x_ref, esm_ref, adj_ref, pool_ref = refs[:n_data]
    p = jax.tree_util.tree_unflatten(treedef, refs[n_data:-1])

    f32 = jnp.float32

    def linear(x, wb):
        w_ref, b_ref = wb
        return jnp.dot(x, w_ref[...], preferred_element_type=f32) + b_ref[...]

    def feature(x, fp):
        # Feature: in_layer, then residual blocks  x = relu(bn(fc(x))) + x
        # (dropout = identity in eval; BN folded into the block weights).
        x = linear(x, fp["in"])
        for wb in fp["blocks"]:
            x = jnp.maximum(linear(x, wb), 0.0) + x
        return x

    # ---- StandardNet (whole_model) active path: esmfc -> fc3 --------------
    whole = linear(linear(esm_ref[...], p["std"]["esmfc"]), p["std"]["fc3"])

    # ---- ToplogyNet --------------------------------------------------------
    h = feature(x_ref[...], p["top"]["fc1"])      # 3 fc1 branches, block-diag
    h = feature(h, p["top"]["fc2"])               # (N, 3H) -> (N, H)
    adj = adj_ref[...]
    for gp in p["top"]["gin"]:
        agg = jnp.dot(adj, h, preferred_element_type=f32)       # (A+I) @ x
        m = jnp.maximum(linear(agg, gp["lin1"]), 0.0)           # Linear->BN->ReLU
        h = linear(m, gp["lin2"]) + h                           # GIN(x) + x
    pooled = jnp.dot(pool_ref[...], h, preferred_element_type=f32)  # mean pool
    top = linear(pooled, p["top"]["fc3"])

    # ---- HeteroNet head ----------------------------------------------------
    # relu(concat([whole, top])) @ W_in == relu(whole)@W_hi + relu(top)@W_lo
    hd = p["head"]["fc2"]
    z = (jnp.dot(jnp.maximum(whole, 0.0), hd["in_w_whole"][...],
                 preferred_element_type=f32)
         + jnp.dot(jnp.maximum(top, 0.0), hd["in_w_top"][...],
                   preferred_element_type=f32)
         + hd["in_b"][...])
    for wb in hd["blocks"]:
        z = jnp.maximum(linear(z, wb), 0.0) + z
    out_ref[...] = linear(z, p["head"]["fc3"])    # (B, num_classes)


def hetero_forward(params, data_x, adj_plus_eye, pool_mat, esm_flat):
    B = esm_flat.shape[0] // 2560
    nc = params["num_classes"]
    # torch.split(esm, 2560, dim=0) + torch.stack
    esm = esm_flat.reshape(B, 2560).astype(jnp.float32)

    leaves, treedef = jax.tree_util.tree_flatten(params["tree"])
    data_inputs = [data_x.astype(jnp.float32), esm,
                   adj_plus_eye.astype(jnp.float32),
                   pool_mat.astype(jnp.float32)]
    all_inputs = data_inputs + list(leaves)
    for a in all_inputs:
        assert a.ndim == 2, a.shape

    kernel = functools.partial(_hetero_kernel, treedef=treedef,
                               n_data=len(data_inputs))

    out = pl.pallas_call(
        kernel,
        out_shape=jax.ShapeDtypeStruct((B, nc), jnp.float32),
        grid=(1,),
        in_specs=[pl.BlockSpec(a.shape, lambda i: (0, 0)) for a in all_inputs],
        out_specs=pl.BlockSpec((B, nc), lambda i: (0, 0)),
        compiler_params=pltpu.CompilerParams(
            dimension_semantics=("arbitrary",),
            vmem_limit_bytes=32 * 1024 * 1024),
    )(*all_inputs)
    return out.reshape(-1)                         # x.flatten()


# ----------------------------------------------------------------------------
if __name__ == "__main__":
    # Small config: HeteroNet(input_size=5, hidden_dim=32, n_fc_layers=2,
    #                          n_layers=2, dropout=0.1, feat_dim=5, num_classes=1)
    H = 32
    n_fc_layers = 2
    n_layers = 2
    feat_dim = 5
    B = 2            # graphs in the batch
    N = 8            # total nodes in `data`

    params = init_hetero(0, H, n_fc_layers, n_layers, feat_dim, num_classes=1)

    key = jax.random.PRNGKey(0)
    kx, kesm = jax.random.split(key)
    # data.x: [bc_feature(feat_dim) | cf_feature(7) | fp_feature(1024)]
    data_x = jax.random.normal(kx, (N, feat_dim + 7 + 1024), jnp.float32)
    # whole_graph.esmfold: flat (B * 2560,) vector
    esm_flat = jax.random.normal(kesm, (B * 2560,), jnp.float32)

    batch = jnp.array([0, 0, 0, 0, 1, 1, 1, 1], jnp.int32)
    edge_index = jnp.array([[0, 1, 1, 2, 3, 4, 5, 6, 7],
                            [1, 0, 2, 1, 0, 5, 4, 7, 6]], jnp.int32)

    # Dense graph operators (glue): (A + I) for GIN sum-aggregation, P for mean pool.
    src, dst = edge_index
    A = jnp.zeros((N, N), jnp.float32).at[dst, src].add(1.0)
    adj_plus_eye = A + jnp.eye(N, dtype=jnp.float32)
    counts = jnp.bincount(batch, length=B).astype(jnp.float32)
    pool_mat = (batch[None, :] == jnp.arange(B)[:, None]).astype(jnp.float32)
    pool_mat = pool_mat / counts[:, None]

    out = hetero_forward(params, data_x, adj_plus_eye, pool_mat, esm_flat)
    out = jax.block_until_ready(out)
    assert out.shape == (B,), out.shape
    assert bool(jnp.all(jnp.isfinite(out)))
    print("KERNEL_OK")
</pallas_src>

<mosaic_0001>
module attributes {stable_mosaic.version = 11 : i64} {
  func.func @_hetero_kernel(%arg0: i32, %arg1: memref<8x1036xf32, #tpu.memory_space<vmem>>, %arg2: memref<2x2560xf32, #tpu.memory_space<vmem>>, %arg3: memref<8x8xf32, #tpu.memory_space<vmem>>, %arg4: memref<2x8xf32, #tpu.memory_space<vmem>>, %arg5: memref<32x32xf32, #tpu.memory_space<vmem>>, %arg6: memref<1x32xf32, #tpu.memory_space<vmem>>, %arg7: memref<32x32xf32, #tpu.memory_space<vmem>>, %arg8: memref<1x32xf32, #tpu.memory_space<vmem>>, %arg9: memref<1x32xf32, #tpu.memory_space<vmem>>, %arg10: memref<32x32xf32, #tpu.memory_space<vmem>>, %arg11: memref<32x32xf32, #tpu.memory_space<vmem>>, %arg12: memref<32x1xf32, #tpu.memory_space<vmem>>, %arg13: memref<1x1xf32, #tpu.memory_space<vmem>>, %arg14: memref<2560x32xf32, #tpu.memory_space<vmem>>, %arg15: memref<1x32xf32, #tpu.memory_space<vmem>>, %arg16: memref<32x32xf32, #tpu.memory_space<vmem>>, %arg17: memref<1x32xf32, #tpu.memory_space<vmem>>, %arg18: memref<96x96xf32, #tpu.memory_space<vmem>>, %arg19: memref<1x96xf32, #tpu.memory_space<vmem>>, %arg20: memref<96x96xf32, #tpu.memory_space<vmem>>, %arg21: memref<1x96xf32, #tpu.memory_space<vmem>>, %arg22: memref<1036x96xf32, #tpu.memory_space<vmem>>, %arg23: memref<1x96xf32, #tpu.memory_space<vmem>>, %arg24: memref<32x32xf32, #tpu.memory_space<vmem>>, %arg25: memref<1x32xf32, #tpu.memory_space<vmem>>, %arg26: memref<32x32xf32, #tpu.memory_space<vmem>>, %arg27: memref<1x32xf32, #tpu.memory_space<vmem>>, %arg28: memref<96x32xf32, #tpu.memory_space<vmem>>, %arg29: memref<1x32xf32, #tpu.memory_space<vmem>>, %arg30: memref<32x32xf32, #tpu.memory_space<vmem>>, %arg31: memref<1x32xf32, #tpu.memory_space<vmem>>, %arg32: memref<32x32xf32, #tpu.memory_space<vmem>>, %arg33: memref<1x32xf32, #tpu.memory_space<vmem>>, %arg34: memref<32x32xf32, #tpu.memory_space<vmem>>, %arg35: memref<1x32xf32, #tpu.memory_space<vmem>>, %arg36: memref<32x32xf32, #tpu.memory_space<vmem>>, %arg37: memref<1x32xf32, #tpu.memory_space<vmem>>, %arg38: memref<32x32xf32, #tpu.memory_space<vmem>>, %arg39: memref<1x32xf32, #tpu.memory_space<vmem>>, %arg40: memref<2x1xf32, #tpu.memory_space<vmem>>) attributes {dimension_semantics = [#tpu.dimension_semantics<arbitrary>], iteration_bounds = array<i64: 1>, scalar_prefetch = 0 : i64, scratch_operands = 0 : i64, tpu.core_type = #tpu.core_type<tc>, window_params = [{pipeline_mode = #tpu.pipeline_mode<synchronous>, transform_indices = @transform_0, window_bounds = array<i64: 8, 1036>}, {pipeline_mode = #tpu.pipeline_mode<synchronous>, transform_indices = @transform_1, window_bounds = array<i64: 2, 2560>}, {pipeline_mode = #tpu.pipeline_mode<synchronous>, transform_indices = @transform_2, window_bounds = array<i64: 8, 8>}, {pipeline_mode = #tpu.pipeline_mode<synchronous>, transform_indices = @transform_3, window_bounds = array<i64: 2, 8>}, {pipeline_mode = #tpu.pipeline_mode<synchronous>, transform_indices = @transform_4, window_bounds = array<i64: 32, 32>}, {pipeline_mode = #tpu.pipeline_mode<synchronous>, transform_indices = @transform_5, window_bounds = array<i64: 1, 32>}, {pipeline_mode = #tpu.pipeline_mode<synchronous>, transform_indices = @transform_6, window_bounds = array<i64: 32, 32>}, {pipeline_mode = #tpu.pipeline_mode<synchronous>, transform_indices = @transform_7, window_bounds = array<i64: 1, 32>}, {pipeline_mode = #tpu.pipeline_mode<synchronous>, transform_indices = @transform_8, window_bounds = array<i64: 1, 32>}, {pipeline_mode = #tpu.pipeline_mode<synchronous>, transform_indices = @transform_9, window_bounds = array<i64: 32, 32>}, {pipeline_mode = #tpu.pipeline_mode<synchronous>, transform_indices = @transform_10, window_bounds = array<i64: 32, 32>}, {pipeline_mode = #tpu.pipeline_mode<synchronous>, transform_indices = @transform_11, window_bounds = array<i64: 32, 1>}, {pipeline_mode = #tpu.pipeline_mode<synchronous>, transform_indices = @transform_12, window_bounds = array<i64: 1, 1>}, {pipeline_mode = #tpu.pipeline_mode<synchronous>, transform_indices = @transform_13, window_bounds = array<i64: 2560, 32>}, {pipeline_mode = #tpu.pipeline_mode<synchronous>, transform_indices = @transform_14, window_bounds = array<i64: 1, 32>}, {pipeline_mode = #tpu.pipeline_mode<synchronous>, transform_indices = @transform_15, window_bounds = array<i64: 32, 32>}, {pipeline_mode = #tpu.pipeline_mode<synchronous>, transform_indices = @transform_16, window_bounds = array<i64: 1, 32>}, {pipeline_mode = #tpu.pipeline_mode<synchronous>, transform_indices = @transform_17, window_bounds = array<i64: 96, 96>}, {pipeline_mode = #tpu.pipeline_mode<synchronous>, transform_indices = @transform_18, window_bounds = array<i64: 1, 96>}, {pipeline_mode = #tpu.pipeline_mode<synchronous>, transform_indices = @transform_19, window_bounds = array<i64: 96, 96>}, {pipeline_mode = #tpu.pipeline_mode<synchronous>, transform_indices = @transform_20, window_bounds = array<i64: 1, 96>}, {pipeline_mode = #tpu.pipeline_mode<synchronous>, transform_indices = @transform_21, window_bounds = array<i64: 1036, 96>}, {pipeline_mode = #tpu.pipeline_mode<synchronous>, transform_indices = @transform_22, window_bounds = array<i64: 1, 96>}, {pipeline_mode = #tpu.pipeline_mode<synchronous>, transform_indices = @transform_23, window_bounds = array<i64: 32, 32>}, {pipeline_mode = #tpu.pipeline_mode<synchronous>, transform_indices = @transform_24, window_bounds = array<i64: 1, 32>}, {pipeline_mode = #tpu.pipeline_mode<synchronous>, transform_indices = @transform_25, window_bounds = array<i64: 32, 32>}, {pipeline_mode = #tpu.pipeline_mode<synchronous>, transform_indices = @transform_26, window_bounds = array<i64: 1, 32>}, {pipeline_mode = #tpu.pipeline_mode<synchronous>, transform_indices = @transform_27, window_bounds = array<i64: 96, 32>}, {pipeline_mode = #tpu.pipeline_mode<synchronous>, transform_indices = @transform_28, window_bounds = array<i64: 1, 32>}, {pipeline_mode = #tpu.pipeline_mode<synchronous>, transform_indices = @transform_29, window_bounds = array<i64: 32, 32>}, {pipeline_mode = #tpu.pipeline_mode<synchronous>, transform_indices = @transform_30, window_bounds = array<i64: 1, 32>}, {pipeline_mode = #tpu.pipeline_mode<synchronous>, transform_indices = @transform_31, window_bounds = array<i64: 32, 32>}, {pipeline_mode = #tpu.pipeline_mode<synchronous>, transform_indices = @transform_32, window_bounds = array<i64: 1, 32>}, {pipeline_mode = #tpu.pipeline_mode<synchronous>, transform_indices = @transform_33, window_bounds = array<i64: 32, 32>}, {pipeline_mode = #tpu.pipeline_mode<synchronous>, transform_indices = @transform_34, window_bounds = array<i64: 1, 32>}, {pipeline_mode = #tpu.pipeline_mode<synchronous>, transform_indices = @transform_35, window_bounds = array<i64: 32, 32>}, {pipeline_mode = #tpu.pipeline_mode<synchronous>, transform_indices = @transform_36, window_bounds = array<i64: 1, 32>}, {pipeline_mode = #tpu.pipeline_mode<synchronous>, transform_indices = @transform_37, window_bounds = array<i64: 32, 32>}, {pipeline_mode = #tpu.pipeline_mode<synchronous>, transform_indices = @transform_38, window_bounds = array<i64: 1, 32>}, {pipeline_mode = #tpu.pipeline_mode<synchronous>, transform_indices = @transform_39, window_bounds = array<i64: 2, 1>}]} {
    %c0 = arith.constant 0 : index
    %c0_0 = arith.constant 0 : index
    %0 = vector.load %arg2[%c0, %c0_0] : memref<2x2560xf32, #tpu.memory_space<vmem>>, vector<2x2560xf32>
    %c0_1 = arith.constant 0 : index
    %c0_2 = arith.constant 0 : index
    %1 = vector.load %arg14[%c0_1, %c0_2] : memref<2560x32xf32, #tpu.memory_space<vmem>>, vector<2560x32xf32>
    %cst = arith.constant dense<0.000000e+00> : vector<2x32xf32>
    %2 = tpu.matmul %0, %1, %cst {dimension_numbers = #tpu.dot_dimension_numbers<[1], [0], [0], [1], [0, 0, 1, 1], [], []>} : vector<2x2560xf32>, vector<2560x32xf32>, vector<2x32xf32> -> vector<2x32xf32>
    %c0_3 = arith.constant 0 : index
    %c0_4 = arith.constant 0 : index
    %3 = vector.load %arg15[%c0_3, %c0_4] : memref<1x32xf32, #tpu.memory_space<vmem>>, vector<1x32xf32>
    %4 = vector.broadcast %3 : vector<1x32xf32> to vector<2x32xf32>
    %5 = arith.addf %2, %4 : vector<2x32xf32>
    %c0_5 = arith.constant 0 : index
    %c0_6 = arith.constant 0 : index
    %6 = vector.load %arg16[%c0_5, %c0_6] : memref<32x32xf32, #tpu.memory_space<vmem>>, vector<32x32xf32>
    %cst_7 = arith.constant dense<0.000000e+00> : vector<2x32xf32>
    %7 = tpu.matmul %5, %6, %cst_7 {dimension_numbers = #tpu.dot_dimension_numbers<[1], [0], [0], [1], [0, 0, 1, 1], [], []>} : vector<2x32xf32>, vector<32x32xf32>, vector<2x32xf32> -> vector<2x32xf32>
    %c0_8 = arith.constant 0 : index
    %c0_9 = arith.constant 0 : index
    %8 = vector.load %arg17[%c0_8, %c0_9] : memref<1x32xf32, #tpu.memory_space<vmem>>, vector<1x32xf32>
    %9 = vector.broadcast %8 : vector<1x32xf32> to vector<2x32xf32>
    %10 = arith.addf %7, %9 : vector<2x32xf32>
    %c0_10 = arith.constant 0 : index
    %c0_11 = arith.constant 0 : index
    %11 = vector.load %arg1[%c0_10, %c0_11] : memref<8x1036xf32, #tpu.memory_space<vmem>>, vector<8x1036xf32>
    %c0_12 = arith.constant 0 : index
    %c0_13 = arith.constant 0 : index
    %12 = vector.load %arg22[%c0_12, %c0_13] : memref<1036x96xf32, #tpu.memory_space<vmem>>, vector<1036x96xf32>
    %cst_14 = arith.constant dense<0.000000e+00> : vector<8x96xf32>
    %13 = tpu.matmul %11, %12, %cst_14 {dimension_numbers = #tpu.dot_dimension_numbers<[1], [0], [0], [1], [0, 0, 1, 1], [], []>} : vector<8x1036xf32>, vector<1036x96xf32>, vector<8x96xf32> -> vector<8x96xf32>
    %c0_15 = arith.constant 0 : index
    %c0_16 = arith.constant 0 : index
    %14 = vector.load %arg23[%c0_15, %c0_16] : memref<1x96xf32, #tpu.memory_space<vmem>>, vector<1x96xf32>
    %15 = vector.broadcast %14 : vector<1x96xf32> to vector<8x96xf32>
    %16 = arith.addf %13, %15 : vector<8x96xf32>
    %c0_17 = arith.constant 0 : index
    %c0_18 = arith.constant 0 : index
    %17 = vector.load %arg18[%c0_17, %c0_18] : memref<96x96xf32, #tpu.memory_space<vmem>>, vector<96x96xf32>
    %cst_19 = arith.constant dense<0.000000e+00> : vector<8x96xf32>
    %18 = tpu.matmul %16, %17, %cst_19 {dimension_numbers = #tpu.dot_dimension_numbers<[1], [0], [0], [1], [0, 0, 1, 1], [], []>} : vector<8x96xf32>, vector<96x96xf32>, vector<8x96xf32> -> vector<8x96xf32>
    %c0_20 = arith.constant 0 : index
    %c0_21 = arith.constant 0 : index
    %19 = vector.load %arg19[%c0_20, %c0_21] : memref<1x96xf32, #tpu.memory_space<vmem>>, vector<1x96xf32>
    %20 = vector.broadcast %19 : vector<1x96xf32> to vector<8x96xf32>
    %21 = arith.addf %18, %20 : vector<8x96xf32>
    %cst_22 = arith.constant 0.000000e+00 : f32
    %22 = vector.broadcast %cst_22 : f32 to vector<8x96xf32>
    %23 = arith.maximumf %21, %22 : vector<8x96xf32>
    %24 = arith.addf %23, %16 : vector<8x96xf32>
    %c0_23 = arith.constant 0 : index
    %c0_24 = arith.constant 0 : index
    %25 = vector.load %arg20[%c0_23, %c0_24] : memref<96x96xf32, #tpu.memory_space<vmem>>, vector<96x96xf32>
    %cst_25 = arith.constant dense<0.000000e+00> : vector<8x96xf32>
    %26 = tpu.matmul %24, %25, %cst_25 {dimension_numbers = #tpu.dot_dimension_numbers<[1], [0], [0], [1], [0, 0, 1, 1], [], []>} : vector<8x96xf32>, vector<96x96xf32>, vector<8x96xf32> -> vector<8x96xf32>
    %c0_26 = arith.constant 0 : index
    %c0_27 = arith.constant 0 : index
    %27 = vector.load %arg21[%c0_26, %c0_27] : memref<1x96xf32, #tpu.memory_space<vmem>>, vector<1x96xf32>
    %28 = vector.broadcast %27 : vector<1x96xf32> to vector<8x96xf32>
    %29 = arith.addf %26, %28 : vector<8x96xf32>
    %cst_28 = arith.constant 0.000000e+00 : f32
    %30 = vector.broadcast %cst_28 : f32 to vector<8x96xf32>
    %31 = arith.maximumf %29, %30 : vector<8x96xf32>
    %32 = arith.addf %31, %24 : vector<8x96xf32>
    %c0_29 = arith.constant 0 : index
    %c0_30 = arith.constant 0 : index
    %33 = vector.load %arg28[%c0_29, %c0_30] : memref<96x32xf32, #tpu.memory_space<vmem>>, vector<96x32xf32>
    %cst_31 = arith.constant dense<0.000000e+00> : vector<8x32xf32>
    %34 = tpu.matmul %32, %33, %cst_31 {dimension_numbers = #tpu.dot_dimension_numbers<[1], [0], [0], [1], [0, 0, 1, 1], [], []>} : vector<8x96xf32>, vector<96x32xf32>, vector<8x32xf32> -> vector<8x32xf32>
    %c0_32 = arith.constant 0 : index
    %c0_33 = arith.constant 0 : index
    %35 = vector.load %arg29[%c0_32, %c0_33] : memref<1x32xf32, #tpu.memory_space<vmem>>, vector<1x32xf32>
    %36 = vector.broadcast %35 : vector<1x32xf32> to vector<8x32xf32>
    %37 = arith.addf %34, %36 : vector<8x32xf32>
    %c0_34 = arith.constant 0 : index
    %c0_35 = arith.constant 0 : index
    %38 = vector.load %arg24[%c0_34, %c0_35] : memref<32x32xf32, #tpu.memory_space<vmem>>, vector<32x32xf32>
    %cst_36 = arith.constant dense<0.000000e+00> : vector<8x32xf32>
    %39 = tpu.matmul %37, %38, %cst_36 {dimension_numbers = #tpu.dot_dimension_numbers<[1], [0], [0], [1], [0, 0, 1, 1], [], []>} : vector<8x32xf32>, vector<32x32xf32>, vector<8x32xf32> -> vector<8x32xf32>
    %c0_37 = arith.constant 0 : index
    %c0_38 = arith.constant 0 : index
    %40 = vector.load %arg25[%c0_37, %c0_38] : memref<1x32xf32, #tpu.memory_space<vmem>>, vector<1x32xf32>
    %41 = vector.broadcast %40 : vector<1x32xf32> to vector<8x32xf32>
    %42 = arith.addf %39, %41 : vector<8x32xf32>
    %cst_39 = arith.constant 0.000000e+00 : f32
    %43 = vector.broadcast %cst_39 : f32 to vector<8x32xf32>
    %44 = arith.maximumf %42, %43 : vector<8x32xf32>
    %45 = arith.addf %44, %37 : vector<8x32xf32>
    %c0_40 = arith.constant 0 : index
    %c0_41 = arith.constant 0 : index
    %46 = vector.load %arg26[%c0_40, %c0_41] : memref<32x32xf32, #tpu.memory_space<vmem>>, vector<32x32xf32>
    %cst_42 = arith.constant dense<0.000000e+00> : vector<8x32xf32>
    %47 = tpu.matmul %45, %46, %cst_42 {dimension_numbers = #tpu.dot_dimension_numbers<[1], [0], [0], [1], [0, 0, 1, 1], [], []>} : vector<8x32xf32>, vector<32x32xf32>, vector<8x32xf32> -> vector<8x32xf32>
    %c0_43 = arith.constant 0 : index
    %c0_44 = arith.constant 0 : index
    %48 = vector.load %arg27[%c0_43, %c0_44] : memref<1x32xf32, #tpu.memory_space<vmem>>, vector<1x32xf32>
    %49 = vector.broadcast %48 : vector<1x32xf32> to vector<8x32xf32>
    %50 = arith.addf %47, %49 : vector<8x32xf32>
    %cst_45 = arith.constant 0.000000e+00 : f32
    %51 = vector.broadcast %cst_45 : f32 to vector<8x32xf32>
    %52 = arith.maximumf %50, %51 : vector<8x32xf32>
    %53 = arith.addf %52, %45 : vector<8x32xf32>
    %c0_46 = arith.constant 0 : index
    %c0_47 = arith.constant 0 : index
    %54 = vector.load %arg3[%c0_46, %c0_47] : memref<8x8xf32, #tpu.memory_space<vmem>>, vector<8x8xf32>
    %cst_48 = arith.constant dense<0.000000e+00> : vector<8x32xf32>
    %55 = tpu.matmul %54, %53, %cst_48 {dimension_numbers = #tpu.dot_dimension_numbers<[1], [0], [0], [1], [0, 0, 1, 1], [], []>} : vector<8x8xf32>, vector<8x32xf32>, vector<8x32xf32> -> vector<8x32xf32>
    %c0_49 = arith.constant 0 : index
    %c0_50 = arith.constant 0 : index
    %56 = vector.load %arg32[%c0_49, %c0_50] : memref<32x32xf32, #tpu.memory_space<vmem>>, vector<32x32xf32>
    %cst_51 = arith.constant dense<0.000000e+00> : vector<8x32xf32>
    %57 = tpu.matmul %55, %56, %cst_51 {dimension_numbers = #tpu.dot_dimension_numbers<[1], [0], [0], [1], [0, 0, 1, 1], [], []>} : vector<8x32xf32>, vector<32x32xf32>, vector<8x32xf32> -> vector<8x32xf32>
    %c0_52 = arith.constant 0 : index
    %c0_53 = arith.constant 0 : index
    %58 = vector.load %arg33[%c0_52, %c0_53] : memref<1x32xf32, #tpu.memory_space<vmem>>, vector<1x32xf32>
    %59 = vector.broadcast %58 : vector<1x32xf32> to vector<8x32xf32>
    %60 = arith.addf %57, %59 : vector<8x32xf32>
    %cst_54 = arith.constant 0.000000e+00 : f32
    %61 = vector.broadcast %cst_54 : f32 to vector<8x32xf32>
    %62 = arith.maximumf %60, %61 : vector<8x32xf32>
    %c0_55 = arith.constant 0 : index
    %c0_56 = arith.constant 0 : index
    %63 = vector.load %arg34[%c0_55, %c0_56] : memref<32x32xf32, #tpu.memory_space<vmem>>, vector<32x32xf32>
    %cst_57 = arith.constant dense<0.000000e+00> : vector<8x32xf32>
    %64 = tpu.matmul %62, %63, %cst_57 {dimension_numbers = #tpu.dot_dimension_numbers<[1], [0], [0], [1], [0, 0, 1, 1], [], []>} : vector<8x32xf32>, vector<32x32xf32>, vector<8x32xf32> -> vector<8x32xf32>
    %c0_58 = arith.constant 0 : index
    %c0_59 = arith.constant 0 : index
    %65 = vector.load %arg35[%c0_58, %c0_59] : memref<1x32xf32, #tpu.memory_space<vmem>>, vector<1x32xf32>
    %66 = vector.broadcast %65 : vector<1x32xf32> to vector<8x32xf32>
    %67 = arith.addf %64, %66 : vector<8x32xf32>
    %68 = arith.addf %67, %53 : vector<8x32xf32>
    %cst_60 = arith.constant dense<0.000000e+00> : vector<8x32xf32>
    %69 = tpu.matmul %54, %68, %cst_60 {dimension_numbers = #tpu.dot_dimension_numbers<[1], [0], [0], [1], [0, 0, 1, 1], [], []>} : vector<8x8xf32>, vector<8x32xf32>, vector<8x32xf32> -> vector<8x32xf32>
    %c0_61 = arith.constant 0 : index
    %c0_62 = arith.constant 0 : index
    %70 = vector.load %arg36[%c0_61, %c0_62] : memref<32x32xf32, #tpu.memory_space<vmem>>, vector<32x32xf32>
    %cst_63 = arith.constant dense<0.000000e+00> : vector<8x32xf32>
    %71 = tpu.matmul %69, %70, %cst_63 {dimension_numbers = #tpu.dot_dimension_numbers<[1], [0], [0], [1], [0, 0, 1, 1], [], []>} : vector<8x32xf32>, vector<32x32xf32>, vector<8x32xf32> -> vector<8x32xf32>
    %c0_64 = arith.constant 0 : index
    %c0_65 = arith.constant 0 : index
    %72 = vector.load %arg37[%c0_64, %c0_65] : memref<1x32xf32, #tpu.memory_space<vmem>>, vector<1x32xf32>
    %73 = vector.broadcast %72 : vector<1x32xf32> to vector<8x32xf32>
    %74 = arith.addf %71, %73 : vector<8x32xf32>
    %cst_66 = arith.constant 0.000000e+00 : f32
    %75 = vector.broadcast %cst_66 : f32 to vector<8x32xf32>
    %76 = arith.maximumf %74, %75 : vector<8x32xf32>
    %c0_67 = arith.constant 0 : index
    %c0_68 = arith.constant 0 : index
    %77 = vector.load %arg38[%c0_67, %c0_68] : memref<32x32xf32, #tpu.memory_space<vmem>>, vector<32x32xf32>
    %cst_69 = arith.constant dense<0.000000e+00> : vector<8x32xf32>
    %78 = tpu.matmul %76, %77, %cst_69 {dimension_numbers = #tpu.dot_dimension_numbers<[1], [0], [0], [1], [0, 0, 1, 1], [], []>} : vector<8x32xf32>, vector<32x32xf32>, vector<8x32xf32> -> vector<8x32xf32>
    %c0_70 = arith.constant 0 : index
    %c0_71 = arith.constant 0 : index
    %79 = vector.load %arg39[%c0_70, %c0_71] : memref<1x32xf32, #tpu.memory_space<vmem>>, vector<1x32xf32>
    %80 = vector.broadcast %79 : vector<1x32xf32> to vector<8x32xf32>
    %81 = arith.addf %78, %80 : vector<8x32xf32>
    %82 = arith.addf %81, %68 : vector<8x32xf32>
    %c0_72 = arith.constant 0 : index
    %c0_73 = arith.constant 0 : index
    %83 = vector.load %arg4[%c0_72, %c0_73] : memref<2x8xf32, #tpu.memory_space<vmem>>, vector<2x8xf32>
    %cst_74 = arith.constant dense<0.000000e+00> : vector<2x32xf32>
    %84 = tpu.matmul %83, %82, %cst_74 {dimension_numbers = #tpu.dot_dimension_numbers<[1], [0], [0], [1], [0, 0, 1, 1], [], []>} : vector<2x8xf32>, vector<8x32xf32>, vector<2x32xf32> -> vector<2x32xf32>
    %c0_75 = arith.constant 0 : index
    %c0_76 = arith.constant 0 : index
    %85 = vector.load %arg30[%c0_75, %c0_76] : memref<32x32xf32, #tpu.memory_space<vmem>>, vector<32x32xf32>
    %cst_77 = arith.constant dense<0.000000e+00> : vector<2x32xf32>
    %86 = tpu.matmul %84, %85, %cst_77 {dimension_numbers = #tpu.dot_dimension_numbers<[1], [0], [0], [1], [0, 0, 1, 1], [], []>} : vector<2x32xf32>, vector<32x32xf32>, vector<2x32xf32> -> vector<2x32xf32>
    %c0_78 = arith.constant 0 : index
    %c0_79 = arith.constant 0 : index
    %87 = vector.load %arg31[%c0_78, %c0_79] : memref<1x32xf32, #tpu.memory_space<vmem>>, vector<1x32xf32>
    %88 = vector.broadcast %87 : vector<1x32xf32> to vector<2x32xf32>
    %89 = arith.addf %86, %88 : vector<2x32xf32>
    %cst_80 = arith.constant 0.000000e+00 : f32
    %90 = vector.broadcast %cst_80 : f32 to vector<2x32xf32>
    %91 = arith.maximumf %10, %90 : vector<2x32xf32>
    %c0_81 = arith.constant 0 : index
    %c0_82 = arith.constant 0 : index
    %92 = vector.load %arg11[%c0_81, %c0_82] : memref<32x32xf32, #tpu.memory_space<vmem>>, vector<32x32xf32>
    %cst_83 = arith.constant dense<0.000000e+00> : vector<2x32xf32>
    %93 = tpu.matmul %91, %92, %cst_83 {dimension_numbers = #tpu.dot_dimension_numbers<[1], [0], [0], [1], [0, 0, 1, 1], [], []>} : vector<2x32xf32>, vector<32x32xf32>, vector<2x32xf32> -> vector<2x32xf32>
    %cst_84 = arith.constant 0.000000e+00 : f32
    %94 = vector.broadcast %cst_84 : f32 to vector<2x32xf32>
    %95 = arith.maximumf %89, %94 : vector<2x32xf32>
    %c0_85 = arith.constant 0 : index
    %c0_86 = arith.constant 0 : index
    %96 = vector.load %arg10[%c0_85, %c0_86] : memref<32x32xf32, #tpu.memory_space<vmem>>, vector<32x32xf32>
    %cst_87 = arith.constant dense<0.000000e+00> : vector<2x32xf32>
    %97 = tpu.matmul %95, %96, %cst_87 {dimension_numbers = #tpu.dot_dimension_numbers<[1], [0], [0], [1], [0, 0, 1, 1], [], []>} : vector<2x32xf32>, vector<32x32xf32>, vector<2x32xf32> -> vector<2x32xf32>
    %98 = arith.addf %93, %97 : vector<2x32xf32>
    %c0_88 = arith.constant 0 : index
    %c0_89 = arith.constant 0 : index
    %99 = vector.load %arg9[%c0_88, %c0_89] : memref<1x32xf32, #tpu.memory_space<vmem>>, vector<1x32xf32>
    %100 = vector.broadcast %99 : vector<1x32xf32> to vector<2x32xf32>
    %101 = arith.addf %98, %100 : vector<2x32xf32>
    %c0_90 = arith.constant 0 : index
    %c0_91 = arith.constant 0 : index
    %102 = vector.load %arg5[%c0_90, %c0_91] : memref<32x32xf32, #tpu.memory_space<vmem>>, vector<32x32xf32>
    %cst_92 = arith.constant dense<0.000000e+00> : vector<2x32xf32>
    %103 = tpu.matmul %101, %102, %cst_92 {dimension_numbers = #tpu.dot_dimension_numbers<[1], [0], [0], [1], [0, 0, 1, 1], [], []>} : vector<2x32xf32>, vector<32x32xf32>, vector<2x32xf32> -> vector<2x32xf32>
    %c0_93 = arith.constant 0 : index
    %c0_94 = arith.constant 0 : index
    %104 = vector.load %arg6[%c0_93, %c0_94] : memref<1x32xf32, #tpu.memory_space<vmem>>, vector<1x32xf32>
    %105 = vector.broadcast %104 : vector<1x32xf32> to vector<2x32xf32>
    %106 = arith.addf %103, %105 : vector<2x32xf32>
    %cst_95 = arith.constant 0.000000e+00 : f32
    %107 = vector.broadcast %cst_95 : f32 to vector<2x32xf32>
    %108 = arith.maximumf %106, %107 : vector<2x32xf32>
    %109 = arith.addf %108, %101 : vector<2x32xf32>
    %c0_96 = arith.constant 0 : index
    %c0_97 = arith.constant 0 : index
    %110 = vector.load %arg7[%c0_96, %c0_97] : memref<32x32xf32, #tpu.memory_space<vmem>>, vector<32x32xf32>
    %cst_98 = arith.constant dense<0.000000e+00> : vector<2x32xf32>
    %111 = tpu.matmul %109, %110, %cst_98 {dimension_numbers = #tpu.dot_dimension_numbers<[1], [0], [0], [1], [0, 0, 1, 1], [], []>} : vector<2x32xf32>, vector<32x32xf32>, vector<2x32xf32> -> vector<2x32xf32>
    %c0_99 = arith.constant 0 : index
    %c0_100 = arith.constant 0 : index
    %112 = vector.load %arg8[%c0_99, %c0_100] : memref<1x32xf32, #tpu.memory_space<vmem>>, vector<1x32xf32>
    %113 = vector.broadcast %112 : vector<1x32xf32> to vector<2x32xf32>
    %114 = arith.addf %111, %113 : vector<2x32xf32>
    %cst_101 = arith.constant 0.000000e+00 : f32
    %115 = vector.broadcast %cst_101 : f32 to vector<2x32xf32>
    %116 = arith.maximumf %114, %115 : vector<2x32xf32>
    %117 = arith.addf %116, %109 : vector<2x32xf32>
    %c0_102 = arith.constant 0 : index
    %c0_103 = arith.constant 0 : index
    %118 = vector.load %arg12[%c0_102, %c0_103] : memref<32x1xf32, #tpu.memory_space<vmem>>, vector<32x1xf32>
    %cst_104 = arith.constant dense<0.000000e+00> : vector<2x1xf32>
    %119 = tpu.matmul %117, %118, %cst_104 {dimension_numbers = #tpu.dot_dimension_numbers<[1], [0], [0], [1], [0, 0, 1, 1], [], []>} : vector<2x32xf32>, vector<32x1xf32>, vector<2x1xf32> -> vector<2x1xf32>
    %c0_105 = arith.constant 0 : index
    %c0_106 = arith.constant 0 : index
    %120 = vector.load %arg13[%c0_105, %c0_106] : memref<1x1xf32, #tpu.memory_space<vmem>>, vector<1x1xf32>
    %121 = vector.broadcast %120 : vector<1x1xf32> to vector<2x1xf32>
    %122 = arith.addf %119, %121 : vector<2x1xf32>
    %c0_107 = arith.constant 0 : index
    %c0_108 = arith.constant 0 : index
    %123 = vector.load %arg40[%c0_107, %c0_108] : memref<2x1xf32, #tpu.memory_space<vmem>>, vector<2x1xf32>
    tpu.vector_store %arg40[%c0_107, %c0_108], %122 {strides = array<i32>} : memref<2x1xf32, #tpu.memory_space<vmem>>, vector<2x1xf32>,
    return
  }
  func.func @transform_0(%arg0: i32) -> (i32, i32) {
    %c0_i32 = arith.constant 0 : i32
    %c0_i32_0 = arith.constant 0 : i32
    %c0_i32_1 = arith.constant 0 : i32
    return %c0_i32, %c0_i32_0 : i32, i32
  }
  func.func @transform_1(%arg0: i32) -> (i32, i32) {
    %c0_i32 = arith.constant 0 : i32
    %c0_i32_0 = arith.constant 0 : i32
    %c0_i32_1 = arith.constant 0 : i32
    return %c0_i32, %c0_i32_0 : i32, i32
  }
  func.func @transform_2(%arg0: i32) -> (i32, i32) {
    %c0_i32 = arith.constant 0 : i32
    %c0_i32_0 = arith.constant 0 : i32
    %c0_i32_1 = arith.constant 0 : i32
    return %c0_i32, %c0_i32_0 : i32, i32
  }
  func.func @transform_3(%arg0: i32) -> (i32, i32) {
    %c0_i32 = arith.constant 0 : i32
    %c0_i32_0 = arith.constant 0 : i32
    %c0_i32_1 = arith.constant 0 : i32
    return %c0_i32, %c0_i32_0 : i32, i32
  }
  func.func @transform_4(%arg0: i32) -> (i32, i32) {
    %c0_i32 = arith.constant 0 : i32
    %c0_i32_0 = arith.constant 0 : i32
    %c0_i32_1 = arith.constant 0 : i32
    return %c0_i32, %c0_i32_0 : i32, i32
  }
  func.func @transform_5(%arg0: i32) -> (i32, i32) {
    %c0_i32 = arith.constant 0 : i32
    %c0_i32_0 = arith.constant 0 : i32
    %c0_i32_1 = arith.constant 0 : i32
    return %c0_i32, %c0_i32_0 : i32, i32
  }
  func.func @transform_6(%arg0: i32) -> (i32, i32) {
    %c0_i32 = arith.constant 0 : i32
    %c0_i32_0 = arith.constant 0 : i32
    %c0_i32_1 = arith.constant 0 : i32
    return %c0_i32, %c0_i32_0 : i32, i32
  }
  func.func @transform_7(%arg0: i32) -> (i32, i32) {
    %c0_i32 = arith.constant 0 : i32
    %c0_i32_0 = arith.constant 0 : i32
    %c0_i32_1 = arith.constant 0 : i32
    return %c0_i32, %c0_i32_0 : i32, i32
  }
  func.func @transform_8(%arg0: i32) -> (i32, i32) {
    %c0_i32 = arith.constant 0 : i32
    %c0_i32_0 = arith.constant 0 : i32
    %c0_i32_1 = arith.constant 0 : i32
    return %c0_i32, %c0_i32_0 : i32, i32
  }
  func.func @transform_9(%arg0: i32) -> (i32, i32) {
    %c0_i32 = arith.constant 0 : i32
    %c0_i32_0 = arith.constant 0 : i32
    %c0_i32_1 = arith.constant 0 : i32
    return %c0_i32, %c0_i32_0 : i32, i32
  }
  func.func @transform_10(%arg0: i32) -> (i32, i32) {
    %c0_i32 = arith.constant 0 : i32
    %c0_i32_0 = arith.constant 0 : i32
    %c0_i32_1 = arith.constant 0 : i32
    return %c0_i32, %c0_i32_0 : i32, i32
  }
  func.func @transform_11(%arg0: i32) -> (i32, i32) {
    %c0_i32 = arith.constant 0 : i32
    %c0_i32_0 = arith.constant 0 : i32
    %c0_i32_1 = arith.constant 0 : i32
    return %c0_i32, %c0_i32_0 : i32, i32
  }
  func.func @transform_12(%arg0: i32) -> (i32, i32) {
    %c0_i32 = arith.constant 0 : i32
    %c0_i32_0 = arith.constant 0 : i32
    %c0_i32_1 = arith.constant 0 : i32
    return %c0_i32, %c0_i32_0 : i32, i32
  }
  func.func @transform_13(%arg0: i32) -> (i32, i32) {
    %c0_i32 = arith.constant 0 : i32
    %c0_i32_0 = arith.constant 0 : i32
    %c0_i32_1 = arith.constant 0 : i32
    return %c0_i32, %c0_i32_0 : i32, i32
  }
  func.func @transform_14(%arg0: i32) -> (i32, i32) {
    %c0_i32 = arith.constant 0 : i32
    %c0_i32_0 = arith.constant 0 : i32
    %c0_i32_1 = arith.constant 0 : i32
    return %c0_i32, %c0_i32_0 : i32, i32
  }
  func.func @transform_15(%arg0: i32) -> (i32, i32) {
    %c0_i32 = arith.constant 0 : i32
    %c0_i32_0 = arith.constant 0 : i32
    %c0_i32_1 = arith.constant 0 : i32
    return %c0_i32, %c0_i32_0 : i32, i32
  }
  func.func @transform_16(%arg0: i32) -> (i32, i32) {
    %c0_i32 = arith.constant 0 : i32
    %c0_i32_0 = arith.constant 0 : i32
    %c0_i32_1 = arith.constant 0 : i32
    return %c0_i32, %c0_i32_0 : i32, i32
  }
  func.func @transform_17(%arg0: i32) -> (i32, i32) {
    %c0_i32 = arith.constant 0 : i32
    %c0_i32_0 = arith.constant 0 : i32
    %c0_i32_1 = arith.constant 0 : i32
    return %c0_i32, %c0_i32_0 : i32, i32
  }
  func.func @transform_18(%arg0: i32) -> (i32, i32) {
    %c0_i32 = arith.constant 0 : i32
    %c0_i32_0 = arith.constant 0 : i32
    %c0_i32_1 = arith.constant 0 : i32
    return %c0_i32, %c0_i32_0 : i32, i32
  }
  func.func @transform_19(%arg0: i32) -> (i32, i32) {
    %c0_i32 = arith.constant 0 : i32
    %c0_i32_0 = arith.constant 0 : i32
    %c0_i32_1 = arith.constant 0 : i32
    return %c0_i32, %c0_i32_0 : i32, i32
  }
  func.func @transform_20(%arg0: i32) -> (i32, i32) {
    %c0_i32 = arith.constant 0 : i32
    %c0_i32_0 = arith.constant 0 : i32
    %c0_i32_1 = arith.constant 0 : i32
    return %c0_i32, %c0_i32_0 : i32, i32
  }
  func.func @transform_21(%arg0: i32) -> (i32, i32) {
    %c0_i32 = arith.constant 0 : i32
    %c0_i32_0 = arith.constant 0 : i32
    %c0_i32_1 = arith.constant 0 : i32
    return %c0_i32, %c0_i32_0 : i32, i32
  }
  func.func @transform_22(%arg0: i32) -> (i32, i32) {
    %c0_i32 = arith.constant 0 : i32
    %c0_i32_0 = arith.constant 0 : i32
    %c0_i32_1 = arith.constant 0 : i32
    return %c0_i32, %c0_i32_0 : i32, i32
  }
  func.func @transform_23(%arg0: i32) -> (i32, i32) {
    %c0_i32 = arith.constant 0 : i32
    %c0_i32_0 = arith.constant 0 : i32
    %c0_i32_1 = arith.constant 0 : i32
    return %c0_i32, %c0_i32_0 : i32, i32
  }
  func.func @transform_24(%arg0: i32) -> (i32, i32) {
    %c0_i32 = arith.constant 0 : i32
    %c0_i32_0 = arith.constant 0 : i32
    %c0_i32_1 = arith.constant 0 : i32
    return %c0_i32, %c0_i32_0 : i32, i32
  }
  func.func @transform_25(%arg0: i32) -> (i32, i32) {
    %c0_i32 = arith.constant 0 : i32
    %c0_i32_0 = arith.constant 0 : i32
    %c0_i32_1 = arith.constant 0 : i32
    return %c0_i32, %c0_i32_0 : i32, i32
  }
  func.func @transform_26(%arg0: i32) -> (i32, i32) {
    %c0_i32 = arith.constant 0 : i32
    %c0_i32_0 = arith.constant 0 : i32
    %c0_i32_1 = arith.constant 0 : i32
    return %c0_i32, %c0_i32_0 : i32, i32
  }
  func.func @transform_27(%arg0: i32) -> (i32, i32) {
    %c0_i32 = arith.constant 0 : i32
    %c0_i32_0 = arith.constant 0 : i32
    %c0_i32_1 = arith.constant 0 : i32
    return %c0_i32, %c0_i32_0 : i32, i32
  }
  func.func @transform_28(%arg0: i32) -> (i32, i32) {
    %c0_i32 = arith.constant 0 : i32
    %c0_i32_0 = arith.constant 0 : i32
    %c0_i32_1 = arith.constant 0 : i32
    return %c0_i32, %c0_i32_0 : i32, i32
  }
  func.func @transform_29(%arg0: i32) -> (i32, i32) {
    %c0_i32 = arith.constant 0 : i32
    %c0_i32_0 = arith.constant 0 : i32
    %c0_i32_1 = arith.constant 0 : i32
    return %c0_i32, %c0_i32_0 : i32, i32
  }
  func.func @transform_30(%arg0: i32) -> (i32, i32) {
    %c0_i32 = arith.constant 0 : i32
    %c0_i32_0 = arith.constant 0 : i32
    %c0_i32_1 = arith.constant 0 : i32
    return %c0_i32, %c0_i32_0 : i32, i32
  }
  func.func @transform_31(%arg0: i32) -> (i32, i32) {
    %c0_i32 = arith.constant 0 : i32
    %c0_i32_0 = arith.constant 0 : i32
    %c0_i32_1 = arith.constant 0 : i32
    return %c0_i32, %c0_i32_0 : i32, i32
  }
  func.func @transform_32(%arg0: i32) -> (i32, i32) {
    %c0_i32 = arith.constant 0 : i32
    %c0_i32_0 = arith.constant 0 : i32
    %c0_i32_1 = arith.constant 0 : i32
    return %c0_i32, %c0_i32_0 : i32, i32
  }
  func.func @transform_33(%arg0: i32) -> (i32, i32) {
    %c0_i32 = arith.constant 0 : i32
    %c0_i32_0 = arith.constant 0 : i32
    %c0_i32_1 = arith.constant 0 : i32
    return %c0_i32, %c0_i32_0 : i32, i32
  }
  func.func @transform_34(%arg0: i32) -> (i32, i32) {
    %c0_i32 = arith.constant 0 : i32
    %c0_i32_0 = arith.constant 0 : i32
    %c0_i32_1 = arith.constant 0 : i32
    return %c0_i32, %c0_i32_0 : i32, i32
  }
  func.func @transform_35(%arg0: i32) -> (i32, i32) {
    %c0_i32 = arith.constant 0 : i32
    %c0_i32_0 = arith.constant 0 : i32
    %c0_i32_1 = arith.constant 0 : i32
    return %c0_i32, %c0_i32_0 : i32, i32
  }
  func.func @transform_36(%arg0: i32) -> (i32, i32) {
    %c0_i32 = arith.constant 0 : i32
    %c0_i32_0 = arith.constant 0 : i32
    %c0_i32_1 = arith.constant 0 : i32
    return %c0_i32, %c0_i32_0 : i32, i32
  }
  func.func @transform_37(%arg0: i32) -> (i32, i32) {
    %c0_i32 = arith.constant 0 : i32
    %c0_i32_0 = arith.constant 0 : i32
    %c0_i32_1 = arith.constant 0 : i32
    return %c0_i32, %c0_i32_0 : i32, i32
  }
  func.func @transform_38(%arg0: i32) -> (i32, i32) {
    %c0_i32 = arith.constant 0 : i32
    %c0_i32_0 = arith.constant 0 : i32
    %c0_i32_1 = arith.constant 0 : i32
    return %c0_i32, %c0_i32_0 : i32, i32
  }
  func.func @transform_39(%arg0: i32) -> (i32, i32) {
    %c0_i32 = arith.constant 0 : i32
    %c0_i32_0 = arith.constant 0 : i32
    %c0_i32_1 = arith.constant 0 : i32
    return %c0_i32, %c0_i32_0 : i32, i32
  }
}

</mosaic_0001>

<llo_original>
// kernel: tpu_custom_call.1
$region0: #{tpu_custom_call.1}
  #allocation0 [shape = 'u32[]', space=smem, size = 0x4, offset = 0x4, fixed_abs, tag = 'smem constant byte address 0x4 - core index']
  #allocation1 [shape = 'u32[144,128]{1,0:T(1,128)}', space=vmem, size = 0x12000, scoped, tag = 'internal scratch']
  #allocation2 [shape = 'f32[1,1]{1,0:T(1,128)S(1)}', space=vmem, size = 0x200, scoped, tag = 'scoped memory for tpu_custom_call.1']
  %s0 = inlined_call_operand.smem [shape: u32[40], index: -1, kind: input, shape index: {}]
  %s1 = sld [smem:[%s0]]
  %s2 = scalar_lea.smem %s0, 1
  %s3 = sld [smem:[%s2]]
  %s4 = scalar_lea.smem %s0, 2
  %s5 = sld [smem:[%s4]]
  %s6 = scalar_lea.smem %s0, 3
  %s7 = sld [smem:[%s6]]
  %s8 = scalar_lea.smem %s0, 4
  %s9 = sld [smem:[%s8]]
  %s10 = scalar_lea.smem %s0, 5
  %s11 = sld [smem:[%s10]]
  %s12 = scalar_lea.smem %s0, 6
  %s13 = sld [smem:[%s12]]
  %s14 = scalar_lea.smem %s0, 7
  %s15 = sld [smem:[%s14]]
  %s16 = scalar_lea.smem %s0, 8
  %s17 = sld [smem:[%s16]]
  %s18 = scalar_lea.smem %s0, 9
  %s19 = sld [smem:[%s18]]
  %s20 = scalar_lea.smem %s0, 10
  %s21 = sld [smem:[%s20]]
  %s22 = scalar_lea.smem %s0, 11
  %s23 = sld [smem:[%s22]]
  %s24 = scalar_lea.smem %s0, 12
  %s25 = sld [smem:[%s24]]
  %s26 = scalar_lea.smem %s0, 13
  %s27 = sld [smem:[%s26]]
  %s28 = scalar_lea.smem %s0, 14
  %s29 = sld [smem:[%s28]]
  %s30 = scalar_lea.smem %s0, 15
  %s31 = sld [smem:[%s30]]
  %s32 = scalar_lea.smem %s0, 16
  %s33 = sld [smem:[%s32]]
  %s34 = scalar_lea.smem %s0, 17
  %s35 = sld [smem:[%s34]]
  %s36 = scalar_lea.smem %s0, 18
  %s37 = sld [smem:[%s36]]
  %s38 = scalar_lea.smem %s0, 19
  %s39 = sld [smem:[%s38]]
  %s40 = scalar_lea.smem %s0, 20
  %s41 = sld [smem:[%s40]]
  %s42 = scalar_lea.smem %s0, 21
  %s43 = sld [smem:[%s42]]
  %s44 = scalar_lea.smem %s0, 22
  %s45 = sld [smem:[%s44]]
  %s46 = scalar_lea.smem %s0, 23
  %s47 = sld [smem:[%s46]]
  %s48 = scalar_lea.smem %s0, 24
  %s49 = sld [smem:[%s48]]
  %s50 = scalar_lea.smem %s0, 25
  %s51 = sld [smem:[%s50]]
  %s52 = scalar_lea.smem %s0, 26
  %s53 = sld [smem:[%s52]]
  %s54 = scalar_lea.smem %s0, 27
  %s55 = sld [smem:[%s54]]
  %s56 = scalar_lea.smem %s0, 28
  %s57 = sld [smem:[%s56]]
  %s58 = scalar_lea.smem %s0, 29
  %s59 = sld [smem:[%s58]]
  %s60 = scalar_lea.smem %s0, 30
  %s61 = sld [smem:[%s60]]
  %s62 = scalar_lea.smem %s0, 31
  %s63 = sld [smem:[%s62]]
  %s64 = scalar_lea.smem %s0, 32
  %s65 = sld [smem:[%s64]]
  %s66 = scalar_lea.smem %s0, 33
  %s67 = sld [smem:[%s66]]
  %s68 = scalar_lea.smem %s0, 34
  %s69 = sld [smem:[%s68]]
  %s70 = scalar_lea.smem %s0, 35
  %s71 = sld [smem:[%s70]]
  %s72 = scalar_lea.smem %s0, 36
  %s73 = sld [smem:[%s72]]
  %s74 = scalar_lea.smem %s0, 37
  %s75 = sld [smem:[%s74]]
  %s76 = scalar_lea.smem %s0, 38
  %s77 = sld [smem:[%s76]]
  %s78 = scalar_lea.smem %s0, 39
  %s79 = sld [smem:[%s78]]
  %s80 = sld [smem:[#allocation0]]
  $region166: #{tpu_custom_call.1} parent=0
    _
  %s82 = ssub.s32 1, %s80
  %s83 = scalar_select 0, %s82, %s80
  %v84 = vstv %s25
  %85 = vst [vmem:[#allocation2] sm:$0x1] %v84
  // Predicated region
  $region2: #{tpu_custom_call.1} parent=0 // pred_check
    _
  $region3: #{tpu_custom_call.1} parent=0 // pred_check_branch
    %87 = sbr.rel (0) target = $region5
  $region4: #{tpu_custom_call.1} parent=0 // pred_region
    _
  $region5: #{tpu_custom_call.1} parent=0 // pred_fallthru
    _
  // Predicated region
  $region6: #{tpu_custom_call.1} parent=0 // pred_check
    _
  $region7: #{tpu_custom_call.1} parent=0 // pred_check_branch
    %89 = sbr.rel (0) target = $region9
  $region8: #{tpu_custom_call.1} parent=0 // pred_region
    _
  $region9: #{tpu_custom_call.1} parent=0 // pred_fallthru
    _
  // Predicated region
  $region10: #{tpu_custom_call.1} parent=0 // pred_check
    _
  $region11: #{tpu_custom_call.1} parent=0 // pred_check_branch
    %91 = sbr.rel (0) target = $region13
  $region12: #{tpu_custom_call.1} parent=0 // pred_region
    _
  $region13: #{tpu_custom_call.1} parent=0 // pred_fallthru
    _
  // Predicated region
  $region14: #{tpu_custom_call.1} parent=0 // pred_check
    _
  $region15: #{tpu_custom_call.1} parent=0 // pred_check_branch
    %93 = sbr.rel (0) target = $region17
  $region16: #{tpu_custom_call.1} parent=0 // pred_region
    _
  $region17: #{tpu_custom_call.1} parent=0 // pred_fallthru
    _
  // Predicated region
  $region18: #{tpu_custom_call.1} parent=0 // pred_check
    _
  $region19: #{tpu_custom_call.1} parent=0 // pred_check_branch
    %95 = sbr.rel (0) target = $region21
  $region20: #{tpu_custom_call.1} parent=0 // pred_region
    _
  $region21: #{tpu_custom_call.1} parent=0 // pred_fallthru
    _
  // Predicated region
  $region22: #{tpu_custom_call.1} parent=0 // pred_check
    _
  $region23: #{tpu_custom_call.1} parent=0 // pred_check_branch
    %97 = sbr.rel (0) target = $region25
  $region24: #{tpu_custom_call.1} parent=0 // pred_region
    _
  $region25: #{tpu_custom_call.1} parent=0 // pred_fallthru
    _
  // Predicated region
  $region26: #{tpu_custom_call.1} parent=0 // pred_check
    _
  $region27: #{tpu_custom_call.1} parent=0 // pred_check_branch
    %99 = sbr.rel (0) target = $region29
  $region28: #{tpu_custom_call.1} parent=0 // pred_region
    _
  $region29: #{tpu_custom_call.1} parent=0 // pred_fallthru
    _
  // Predicated region
  $region30: #{tpu_custom_call.1} parent=0 // pred_check
    _
  $region31: #{tpu_custom_call.1} parent=0 // pred_check_branch
    %101 = sbr.rel (0) target = $region33
  $region32: #{tpu_custom_call.1} parent=0 // pred_region
    _
  $region33: #{tpu_custom_call.1} parent=0 // pred_fallthru
    _
  // Predicated region
  $region34: #{tpu_custom_call.1} parent=0 // pred_check
    _
  $region35: #{tpu_custom_call.1} parent=0 // pred_check_branch
    %103 = sbr.rel (0) target = $region37
  $region36: #{tpu_custom_call.1} parent=0 // pred_region
    _
  $region37: #{tpu_custom_call.1} parent=0 // pred_fallthru
    _
  // Predicated region
  $region38: #{tpu_custom_call.1} parent=0 // pred_check
    _
  $region39: #{tpu_custom_call.1} parent=0 // pred_check_branch
    %105 = sbr.rel (0) target = $region41
  $region40: #{tpu_custom_call.1} parent=0 // pred_region
    _
  $region41: #{tpu_custom_call.1} parent=0 // pred_fallthru
    _
  // Predicated region
  $region42: #{tpu_custom_call.1} parent=0 // pred_check
    _
  $region43: #{tpu_custom_call.1} parent=0 // pred_check_branch
    %107 = sbr.rel (0) target = $region45
  $region44: #{tpu_custom_call.1} parent=0 // pred_region
    _
  $region45: #{tpu_custom_call.1} parent=0 // pred_fallthru
    _
  // Predicated region
  $region46: #{tpu_custom_call.1} parent=0 // pred_check
    _
  $region47: #{tpu_custom_call.1} parent=0 // pred_check_branch
    %109 = sbr.rel (0) target = $region49
  $region48: #{tpu_custom_call.1} parent=0 // pred_region
    _
  $region49: #{tpu_custom_call.1} parent=0 // pred_fallthru
    _
  // Predicated region
  $region50: #{tpu_custom_call.1} parent=0 // pred_check
    _
  $region51: #{tpu_custom_call.1} parent=0 // pred_check_branch
    %111 = sbr.rel (0) target = $region53
  $region52: #{tpu_custom_call.1} parent=0 // pred_region
    _
  $region53: #{tpu_custom_call.1} parent=0 // pred_fallthru
    _
  // Predicated region
  $region54: #{tpu_custom_call.1} parent=0 // pred_check
    _
  $region55: #{tpu_custom_call.1} parent=0 // pred_check_branch
    %113 = sbr.rel (0) target = $region57
  $region56: #{tpu_custom_call.1} parent=0 // pred_region
    _
  $region57: #{tpu_custom_call.1} parent=0 // pred_fallthru
    _
  // Predicated region
  $region58: #{tpu_custom_call.1} parent=0 // pred_check
    _
  $region59: #{tpu_custom_call.1} parent=0 // pred_check_branch
    %115 = sbr.rel (0) target = $region61
  $region60: #{tpu_custom_call.1} parent=0 // pred_region
    _
  $region61: #{tpu_custom_call.1} parent=0 // pred_fallthru
    _
  // Predicated region
  $region62: #{tpu_custom_call.1} parent=0 // pred_check
    _
  $region63: #{tpu_custom_call.1} parent=0 // pred_check_branch
    %117 = sbr.rel (0) target = $region65
  $region64: #{tpu_custom_call.1} parent=0 // pred_region
    _
  $region65: #{tpu_custom_call.1} parent=0 // pred_fallthru
    _
  // Predicated region
  $region66: #{tpu_custom_call.1} parent=0 // pred_check
    _
  $region67: #{tpu_custom_call.1} parent=0 // pred_check_branch
    %119 = sbr.rel (0) target = $region69
  $region68: #{tpu_custom_call.1} parent=0 // pred_region
    _
  $region69: #{tpu_custom_call.1} parent=0 // pred_fallthru
    _
  // Predicated region
  $region70: #{tpu_custom_call.1} parent=0 // pred_check
    _
  $region71: #{tpu_custom_call.1} parent=0 // pred_check_branch
    %121 = sbr.rel (0) target = $region73
  $region72: #{tpu_custom_call.1} parent=0 // pred_region
    _
  $region73: #{tpu_custom_call.1} parent=0 // pred_fallthru
    _
  // Predicated region
  $region74: #{tpu_custom_call.1} parent=0 // pred_check
    _
  $region75: #{tpu_custom_call.1} parent=0 // pred_check_branch
    %123 = sbr.rel (0) target = $region77
  $region76: #{tpu_custom_call.1} parent=0 // pred_region
    _
  $region77: #{tpu_custom_call.1} parent=0 // pred_fallthru
    _
  // Predicated region
  $region78: #{tpu_custom_call.1} parent=0 // pred_check
    _
  $region79: #{tpu_custom_call.1} parent=0 // pred_check_branch
    %125 = sbr.rel (0) target = $region81
  $region80: #{tpu_custom_call.1} parent=0 // pred_region
    _
  $region81: #{tpu_custom_call.1} parent=0 // pred_fallthru
    _
  // Predicated region
  $region82: #{tpu_custom_call.1} parent=0 // pred_check
    _
  $region83: #{tpu_custom_call.1} parent=0 // pred_check_branch
    %127 = sbr.rel (0) target = $region85
  $region84: #{tpu_custom_call.1} parent=0 // pred_region
    _
  $region85: #{tpu_custom_call.1} parent=0 // pred_fallthru
    _
  // Predicated region
  $region86: #{tpu_custom_call.1} parent=0 // pred_check
    _
  $region87: #{tpu_custom_call.1} parent=0 // pred_check_branch
    %129 = sbr.rel (0) target = $region89
  $region88: #{tpu_custom_call.1} parent=0 // pred_region
    _
  $region89: #{tpu_custom_call.1} parent=0 // pred_fallthru
    _
  // Predicated region
  $region90: #{tpu_custom_call.1} parent=0 // pred_check
    _
  $region91: #{tpu_custom_call.1} parent=0 // pred_check_branch
    %131 = sbr.rel (0) target = $region93
  $region92: #{tpu_custom_call.1} parent=0 // pred_region
    _
  $region93: #{tpu_custom_call.1} parent=0 // pred_fallthru
    _
  // Predicated region
  $region94: #{tpu_custom_call.1} parent=0 // pred_check
    _
  $region95: #{tpu_custom_call.1} parent=0 // pred_check_branch
    %133 = sbr.rel (0) target = $region97
  $region96: #{tpu_custom_call.1} parent=0 // pred_region
    _
  $region97: #{tpu_custom_call.1} parent=0 // pred_fallthru
    _
  // Predicated region
  $region98: #{tpu_custom_call.1} parent=0 // pred_check
    _
  $region99: #{tpu_custom_call.1} parent=0 // pred_check_branch
    %135 = sbr.rel (0) target = $region101
  $region100: #{tpu_custom_call.1} parent=0 // pred_region
    _
  $region101: #{tpu_custom_call.1} parent=0 // pred_fallthru
    _
  // Predicated region
  $region102: #{tpu_custom_call.1} parent=0 // pred_check
    _
  $region103: #{tpu_custom_call.1} parent=0 // pred_check_branch
    %137 = sbr.rel (0) target = $region105
  $region104: #{tpu_custom_call.1} parent=0 // pred_region
    _
  $region105: #{tpu_custom_call.1} parent=0 // pred_fallthru
    _
  // Predicated region
  $region106: #{tpu_custom_call.1} parent=0 // pred_check
    _
  $region107: #{tpu_custom_call.1} parent=0 // pred_check_branch
    %139 = sbr.rel (0) target = $region109
  $region108: #{tpu_custom_call.1} parent=0 // pred_region
    _
  $region109: #{tpu_custom_call.1} parent=0 // pred_fallthru
    _
  // Predicated region
  $region110: #{tpu_custom_call.1} parent=0 // pred_check
    _
  $region111: #{tpu_custom_call.1} parent=0 // pred_check_branch
    %141 = sbr.rel (0) target = $region113
  $region112: #{tpu_custom_call.1} parent=0 // pred_region
    _
  $region113: #{tpu_custom_call.1} parent=0 // pred_fallthru
    _
  // Predicated region
  $region114: #{tpu_custom_call.1} parent=0 // pred_check
    _
  $region115: #{tpu_custom_call.1} parent=0 // pred_check_branch
    %143 = sbr.rel (0) target = $region117
  $region116: #{tpu_custom_call.1} parent=0 // pred_region
    _
  $region117: #{tpu_custom_call.1} parent=0 // pred_fallthru
    _
  // Predicated region
  $region118: #{tpu_custom_call.1} parent=0 // pred_check
    _
  $region119: #{tpu_custom_call.1} parent=0 // pred_check_branch
    %145 = sbr.rel (0) target = $region121
  $region120: #{tpu_custom_call.1} parent=0 // pred_region
    _
  $region121: #{tpu_custom_call.1} parent=0 // pred_fallthru
    _
  // Predicated region
  $region122: #{tpu_custom_call.1} parent=0 // pred_check
    _
  $region123: #{tpu_custom_call.1} parent=0 // pred_check_branch
    %147 = sbr.rel (0) target = $region125
  $region124: #{tpu_custom_call.1} parent=0 // pred_region
    _
  $region125: #{tpu_custom_call.1} parent=0 // pred_fallthru
    _
  // Predicated region
  $region126: #{tpu_custom_call.1} parent=0 // pred_check
    _
  $region127: #{tpu_custom_call.1} parent=0 // pred_check_branch
    %149 = sbr.rel (0) target = $region129
  $region128: #{tpu_custom_call.1} parent=0 // pred_region
    _
  $region129: #{tpu_custom_call.1} parent=0 // pred_fallthru
    _
  // Predicated region
  $region130: #{tpu_custom_call.1} parent=0 // pred_check
    _
  $region131: #{tpu_custom_call.1} parent=0 // pred_check_branch
    %151 = sbr.rel (0) target = $region133
  $region132: #{tpu_custom_call.1} parent=0 // pred_region
    _
  $region133: #{tpu_custom_call.1} parent=0 // pred_fallthru
    _
  // Predicated region
  $region134: #{tpu_custom_call.1} parent=0 // pred_check
    _
  $region135: #{tpu_custom_call.1} parent=0 // pred_check_branch
    %153 = sbr.rel (0) target = $region137
  $region136: #{tpu_custom_call.1} parent=0 // pred_region
    _
  $region137: #{tpu_custom_call.1} parent=0 // pred_fallthru
    _
  // Predicated region
  $region138: #{tpu_custom_call.1} parent=0 // pred_check
    _
  $region139: #{tpu_custom_call.1} parent=0 // pred_check_branch
    %155 = sbr.rel (0) target = $region141
  $region140: #{tpu_custom_call.1} parent=0 // pred_region
    _
  $region141: #{tpu_custom_call.1} parent=0 // pred_fallthru
    _
  // Predicated region
  $region142: #{tpu_custom_call.1} parent=0 // pred_check
    _
  $region143: #{tpu_custom_call.1} parent=0 // pred_check_branch
    %157 = sbr.rel (0) target = $region145
  $region144: #{tpu_custom_call.1} parent=0 // pred_region
    _
  $region145: #{tpu_custom_call.1} parent=0 // pred_fallthru
    _
  // Predicated region
  $region146: #{tpu_custom_call.1} parent=0 // pred_check
    _
  $region147: #{tpu_custom_call.1} parent=0 // pred_check_branch
    %159 = sbr.rel (0) target = $region149
  $region148: #{tpu_custom_call.1} parent=0 // pred_region
    _
  $region149: #{tpu_custom_call.1} parent=0 // pred_fallthru
    _
  // Predicated region
  $region150: #{tpu_custom_call.1} parent=0 // pred_check
    _
  $region151: #{tpu_custom_call.1} parent=0 // pred_check_branch
    %161 = sbr.rel (0) target = $region153
  $region152: #{tpu_custom_call.1} parent=0 // pred_region
    _
  $region153: #{tpu_custom_call.1} parent=0 // pred_fallthru
    _
  // Predicated region
  $region154: #{tpu_custom_call.1} parent=0 // pred_check
    _
  $region155: #{tpu_custom_call.1} parent=0 // pred_check_branch
    %163 = sbr.rel (0) target = $region157
  $region156: #{tpu_custom_call.1} parent=0 // pred_region
    _
  $region157: #{tpu_custom_call.1} parent=0 // pred_fallthru
    _
  %v164 = vld [vmem:[%s3] sm:$0xff]
  %v165 = vld [vmem:[%s3 + $0x8] sm:$0xff]
  %v166 = vld [vmem:[%s3 + $0x10] sm:$0xff]
  %v167 = vld [vmem:[%s3 + $0x18] sm:$0xff]
  %v168 = vld [vmem:[%s3 + $0x20] sm:$0xff]
  %v169 = vld [vmem:[%s27] sm:$0xff]
  %v170 = vld [vmem:[%s27 + $0x8] sm:$0xff]
  %v171 = vld [vmem:[%s27 + $0x10] sm:$0xff]
  %v172 = vld [vmem:[%s27 + $0x18] sm:$0xff]
  %v173 = vld [vmem:[%s27 + $0x20] sm:$0xff]
  %v174 = vld [vmem:[%s27 + $0x28] sm:$0xff]
  %v175 = vld [vmem:[%s27 + $0x30] sm:$0xff]
  %v176 = vld [vmem:[%s27 + $0x38] sm:$0xff]
  %v177 = vld [vmem:[%s27 + $0x40] sm:$0xff]
  %v178 = vld [vmem:[%s27 + $0x48] sm:$0xff]
  %v179 = vld [vmem:[%s27 + $0x50] sm:$0xff]
  %v180 = vld [vmem:[%s27 + $0x58] sm:$0xff]
  %v181 = vld [vmem:[%s27 + $0x60] sm:$0xff]
  %v182 = vld [vmem:[%s27 + $0x68] sm:$0xff]
  %v183 = vld [vmem:[%s27 + $0x70] sm:$0xff]
  %v184 = vld [vmem:[%s27 + $0x78] sm:$0xff]
  %v185 = vld [vmem:[%s27 + $0x80] sm:$0xff]
  %v186 = vld [vmem:[%s27 + $0x88] sm:$0xff]
  %v187 = vld [vmem:[%s27 + $0x90] sm:$0xff]
  %v188 = vld [vmem:[%s27 + $0x98] sm:$0xff]
  %v189 = vld [vmem:[%s27 + $0xa0] sm:$0xff]
  %v190 = vld [vmem:[%s27 + $0xa8] sm:$0xff]
  %v191 = vld [vmem:[%s27 + $0xb0] sm:$0xff]
  %v192 = vld [vmem:[%s27 + $0xb8] sm:$0xff]
  %v193 = vld [vmem:[%s27 + $0xc0] sm:$0xff]
  %v194 = vld [vmem:[%s27 + $0xc8] sm:$0xff]
  %v195 = vld [vmem:[%s27 + $0xd0] sm:$0xff]
  %v196 = vld [vmem:[%s27 + $0xd8] sm:$0xff]
  %v197 = vld [vmem:[%s27 + $0xe0] sm:$0xff]
  %v198 = vld [vmem:[%s27 + $0xe8] sm:$0xff]
  %v199 = vld [vmem:[%s27 + $0xf0] sm:$0xff]
  %v200 = vld [vmem:[%s27 + $0xf8] sm:$0xff]
  %v201 = vld [vmem:[%s27 + $0x100] sm:$0xff]
  %v202 = vld [vmem:[%s27 + $0x108] sm:$0xff]
  %v203 = vld [vmem:[%s27 + $0x110] sm:$0xff]
  %v204 = vld [vmem:[%s27 + $0x118] sm:$0xff]
  %v205 = vld [vmem:[%s27 + $0x120] sm:$0xff]
  %v206 = vld [vmem:[%s27 + $0x128] sm:$0xff]
  %v207 = vld [vmem:[%s27 + $0x130] sm:$0xff]
  %v208 = vld [vmem:[%s27 + $0x138] sm:$0xff]
  %v209 = vld [vmem:[%s27 + $0x140] sm:$0xff]
  %v210 = vld [vmem:[%s27 + $0x148] sm:$0xff]
  %v211 = vld [vmem:[%s27 + $0x150] sm:$0xff]
  %v212 = vld [vmem:[%s27 + $0x158] sm:$0xff]
  %v213 = vld [vmem:[%s27 + $0x160] sm:$0xff]
  %v214 = vld [vmem:[%s27 + $0x168] sm:$0xff]
  %v215 = vld [vmem:[%s27 + $0x170] sm:$0xff]
  %v216 = vld [vmem:[%s27 + $0x178] sm:$0xff]
  %v217 = vld [vmem:[%s27 + $0x180] sm:$0xff]
  %v218 = vld [vmem:[%s27 + $0x188] sm:$0xff]
  %v219 = vld [vmem:[%s27 + $0x190] sm:$0xff]
  %v220 = vld [vmem:[%s27 + $0x198] sm:$0xff]
  %v221 = vld [vmem:[%s27 + $0x1a0] sm:$0xff]
  %v222 = vld [vmem:[%s27 + $0x1a8] sm:$0xff]
  %v223 = vld [vmem:[%s27 + $0x1b0] sm:$0xff]
  %v224 = vld [vmem:[%s27 + $0x1b8] sm:$0xff]
  %v225 = vld [vmem:[%s27 + $0x1c0] sm:$0xff]
  %v226 = vld [vmem:[%s27 + $0x1c8] sm:$0xff]
  %v227 = vld [vmem:[%s27 + $0x1d0] sm:$0xff]
  %v228 = vld [vmem:[%s27 + $0x1d8] sm:$0xff]
  %v229 = vld [vmem:[%s27 + $0x1e0] sm:$0xff]
  %v230 = vld [vmem:[%s27 + $0x1e8] sm:$0xff]
  %v231 = vld [vmem:[%s27 + $0x1f0] sm:$0xff]
  %v232 = vld [vmem:[%s27 + $0x1f8] sm:$0xff]
  %v233 = vld [vmem:[%s27 + $0x200] sm:$0xff]
  %v234 = vld [vmem:[%s27 + $0x208] sm:$0xff]
  %v235 = vld [vmem:[%s27 + $0x210] sm:$0xff]
  %v236 = vld [vmem:[%s27 + $0x218] sm:$0xff]
  %v237 = vld [vmem:[%s27 + $0x220] sm:$0xff]
  %v238 = vld [vmem:[%s27 + $0x228] sm:$0xff]
  %v239 = vld [vmem:[%s27 + $0x230] sm:$0xff]
  %v240 = vld [vmem:[%s27 + $0x238] sm:$0xff]
  %v241 = vld [vmem:[%s27 + $0x240] sm:$0xff]
  %v242 = vld [vmem:[%s27 + $0x248] sm:$0xff]
  %v243 = vld [vmem:[%s27 + $0x250] sm:$0xff]
  %v244 = vld [vmem:[%s27 + $0x258] sm:$0xff]
  %v245 = vld [vmem:[%s27 + $0x260] sm:$0xff]
  %v246 = vld [vmem:[%s27 + $0x268] sm:$0xff]
  %v247 = vld [vmem:[%s27 + $0x270] sm:$0xff]
  %v248 = vld [vmem:[%s27 + $0x278] sm:$0xff]
  %v249 = vld [vmem:[%s27 + $0x280] sm:$0xff]
  %v250 = vld [vmem:[%s27 + $0x288] sm:$0xff]
  %v251 = vld [vmem:[%s27 + $0x290] sm:$0xff]
  %v252 = vld [vmem:[%s27 + $0x298] sm:$0xff]
  %v253 = vld [vmem:[%s27 + $0x2a0] sm:$0xff]
  %v254 = vld [vmem:[%s27 + $0x2a8] sm:$0xff]
  %v255 = vld [vmem:[%s27 + $0x2b0] sm:$0xff]
  %v256 = vld [vmem:[%s27 + $0x2b8] sm:$0xff]
  %v257 = vld [vmem:[%s27 + $0x2c0] sm:$0xff]
  %v258 = vld [vmem:[%s27 + $0x2c8] sm:$0xff]
  %v259 = vld [vmem:[%s27 + $0x2d0] sm:$0xff]
  %v260 = vld [vmem:[%s27 + $0x2d8] sm:$0xff]
  %v261 = vld [vmem:[%s27 + $0x2e0] sm:$0xff]
  %v262 = vld [vmem:[%s27 + $0x2e8] sm:$0xff]
  %v263 = vld [vmem:[%s27 + $0x2f0] sm:$0xff]
  %v264 = vld [vmem:[%s27 + $0x2f8] sm:$0xff]
  %v265 = vld [vmem:[%s27 + $0x300] sm:$0xff]
  %v266 = vld [vmem:[%s27 + $0x308] sm:$0xff]
  %v267 = vld [vmem:[%s27 + $0x310] sm:$0xff]
  %v268 = vld [vmem:[%s27 + $0x318] sm:$0xff]
  %v269 = vld [vmem:[%s27 + $0x320] sm:$0xff]
  %v270 = vld [vmem:[%s27 + $0x328] sm:$0xff]
  %v271 = vld [vmem:[%s27 + $0x330] sm:$0xff]
  %v272 = vld [vmem:[%s27 + $0x338] sm:$0xff]
  %v273 = vld [vmem:[%s27 + $0x340] sm:$0xff]
  %v274 = vld [vmem:[%s27 + $0x348] sm:$0xff]
  %v275 = vld [vmem:[%s27 + $0x350] sm:$0xff]
  %v276 = vld [vmem:[%s27 + $0x358] sm:$0xff]
  %v277 = vld [vmem:[%s27 + $0x360] sm:$0xff]
  %v278 = vld [vmem:[%s27 + $0x368] sm:$0xff]
  %v279 = vld [vmem:[%s27 + $0x370] sm:$0xff]
  %v280 = vld [vmem:[%s27 + $0x378] sm:$0xff]
  %v281 = vld [vmem:[%s27 + $0x380] sm:$0xff]
  %v282 = vld [vmem:[%s27 + $0x388] sm:$0xff]
  %v283 = vld [vmem:[%s27 + $0x390] sm:$0xff]
  %v284 = vld [vmem:[%s27 + $0x398] sm:$0xff]
  %v285 = vld [vmem:[%s27 + $0x3a0] sm:$0xff]
  %v286 = vld [vmem:[%s27 + $0x3a8] sm:$0xff]
  %v287 = vld [vmem:[%s27 + $0x3b0] sm:$0xff]
  %v288 = vld [vmem:[%s27 + $0x3b8] sm:$0xff]
  %v289 = vld [vmem:[%s27 + $0x3c0] sm:$0xff]
  %v290 = vld [vmem:[%s27 + $0x3c8] sm:$0xff]
  %v291 = vld [vmem:[%s27 + $0x3d0] sm:$0xff]
  %v292 = vld [vmem:[%s27 + $0x3d8] sm:$0xff]
  %v293 = vld [vmem:[%s27 + $0x3e0] sm:$0xff]
  %v294 = vld [vmem:[%s27 + $0x3e8] sm:$0xff]
  %v295 = vld [vmem:[%s27 + $0x3f0] sm:$0xff]
  %v296 = vld [vmem:[%s27 + $0x3f8] sm:$0xff]
  %v297 = vld [vmem:[%s27 + $0x400] sm:$0xff]
  %v298 = vld [vmem:[%s27 + $0x408] sm:$0xff]
  %v299 = vld [vmem:[%s27 + $0x410] sm:$0xff]
  %v300 = vld [vmem:[%s27 + $0x418] sm:$0xff]
  %v301 = vld [vmem:[%s27 + $0x420] sm:$0xff]
  %v302 = vld [vmem:[%s27 + $0x428] sm:$0xff]
  %v303 = vld [vmem:[%s27 + $0x430] sm:$0xff]
  %v304 = vld [vmem:[%s27 + $0x438] sm:$0xff]
  %v305 = vld [vmem:[%s27 + $0x440] sm:$0xff]
  %v306 = vld [vmem:[%s27 + $0x448] sm:$0xff]
  %v307 = vld [vmem:[%s27 + $0x450] sm:$0xff]
  %v308 = vld [vmem:[%s27 + $0x458] sm:$0xff]
  %v309 = vld [vmem:[%s27 + $0x460] sm:$0xff]
  %v310 = vld [vmem:[%s27 + $0x468] sm:$0xff]
  %v311 = vld [vmem:[%s27 + $0x470] sm:$0xff]
  %v312 = vld [vmem:[%s27 + $0x478] sm:$0xff]
  %v313 = vld [vmem:[%s27 + $0x480] sm:$0xff]
  %v314 = vld [vmem:[%s27 + $0x488] sm:$0xff]
  %v315 = vld [vmem:[%s27 + $0x490] sm:$0xff]
  %v316 = vld [vmem:[%s27 + $0x498] sm:$0xff]
  %v317 = vld [vmem:[%s27 + $0x4a0] sm:$0xff]
  %v318 = vld [vmem:[%s27 + $0x4a8] sm:$0xff]
  %v319 = vld [vmem:[%s27 + $0x4b0] sm:$0xff]
  %v320 = vld [vmem:[%s27 + $0x4b8] sm:$0xff]
  %v321 = vld [vmem:[%s27 + $0x4c0] sm:$0xff]
  %v322 = vld [vmem:[%s27 + $0x4c8] sm:$0xff]
  %v323 = vld [vmem:[%s27 + $0x4d0] sm:$0xff]
  %v324 = vld [vmem:[%s27 + $0x4d8] sm:$0xff]
  %v325 = vld [vmem:[%s27 + $0x4e0] sm:$0xff]
  %v326 = vld [vmem:[%s27 + $0x4e8] sm:$0xff]
  %v327 = vld [vmem:[%s27 + $0x4f0] sm:$0xff]
  %v328 = vld [vmem:[%s27 + $0x4f8] sm:$0xff]
  %v329 = vld [vmem:[%s27 + $0x500] sm:$0xff]
  %v330 = vld [vmem:[%s27 + $0x508] sm:$0xff]
  %v331 = vld [vmem:[%s27 + $0x510] sm:$0xff]
  %v332 = vld [vmem:[%s27 + $0x518] sm:$0xff]
  %v333 = vld [vmem:[%s27 + $0x520] sm:$0xff]
  %v334 = vld [vmem:[%s27 + $0x528] sm:$0xff]
  %v335 = vld [vmem:[%s27 + $0x530] sm:$0xff]
  %v336 = vld [vmem:[%s27 + $0x538] sm:$0xff]
  %v337 = vld [vmem:[%s27 + $0x540] sm:$0xff]
  %v338 = vld [vmem:[%s27 + $0x548] sm:$0xff]
  %v339 = vld [vmem:[%s27 + $0x550] sm:$0xff]
  %v340 = vld [vmem:[%s27 + $0x558] sm:$0xff]
  %v341 = vld [vmem:[%s27 + $0x560] sm:$0xff]
  %v342 = vld [vmem:[%s27 + $0x568] sm:$0xff]
  %v343 = vld [vmem:[%s27 + $0x570] sm:$0xff]
  %v344 = vld [vmem:[%s27 + $0x578] sm:$0xff]
  %v345 = vld [vmem:[%s27 + $0x580] sm:$0xff]
  %v346 = vld [vmem:[%s27 + $0x588] sm:$0xff]
  %v347 = vld [vmem:[%s27 + $0x590] sm:$0xff]
  %v348 = vld [vmem:[%s27 + $0x598] sm:$0xff]
  %v349 = vld [vmem:[%s27 + $0x5a0] sm:$0xff]
  %v350 = vld [vmem:[%s27 + $0x5a8] sm:$0xff]
  %v351 = vld [vmem:[%s27 + $0x5b0] sm:$0xff]
  %v352 = vld [vmem:[%s27 + $0x5b8] sm:$0xff]
  %v353 = vld [vmem:[%s27 + $0x5c0] sm:$0xff]
  %v354 = vld [vmem:[%s27 + $0x5c8] sm:$0xff]
  %v355 = vld [vmem:[%s27 + $0x5d0] sm:$0xff]
  %v356 = vld [vmem:[%s27 + $0x5d8] sm:$0xff]
  %v357 = vld [vmem:[%s27 + $0x5e0] sm:$0xff]
  %v358 = vld [vmem:[%s27 + $0x5e8] sm:$0xff]
  %v359 = vld [vmem:[%s27 + $0x5f0] sm:$0xff]
  %v360 = vld [vmem:[%s27 + $0x5f8] sm:$0xff]
  %v361 = vld [vmem:[%s27 + $0x600] sm:$0xff]
  %v362 = vld [vmem:[%s27 + $0x608] sm:$0xff]
  %v363 = vld [vmem:[%s27 + $0x610] sm:$0xff]
  %v364 = vld [vmem:[%s27 + $0x618] sm:$0xff]
  %v365 = vld [vmem:[%s27 + $0x620] sm:$0xff]
  %v366 = vld [vmem:[%s27 + $0x628] sm:$0xff]
  %v367 = vld [vmem:[%s27 + $0x630] sm:$0xff]
  %v368 = vld [vmem:[%s27 + $0x638] sm:$0xff]
  %v369 = vld [vmem:[%s27 + $0x640] sm:$0xff]
  %v370 = vld [vmem:[%s27 + $0x648] sm:$0xff]
  %v371 = vld [vmem:[%s27 + $0x650] sm:$0xff]
  %v372 = vld [vmem:[%s27 + $0x658] sm:$0xff]
  %v373 = vld [vmem:[%s27 + $0x660] sm:$0xff]
  %v374 = vld [vmem:[%s27 + $0x668] sm:$0xff]
  %v375 = vld [vmem:[%s27 + $0x670] sm:$0xff]
  %v376 = vld [vmem:[%s27 + $0x678] sm:$0xff]
  %v377 = vld [vmem:[%s27 + $0x680] sm:$0xff]
  %v378 = vld [vmem:[%s27 + $0x688] sm:$0xff]
  %v379 = vld [vmem:[%s27 + $0x690] sm:$0xff]
  %v380 = vld [vmem:[%s27 + $0x698] sm:$0xff]
  %v381 = vld [vmem:[%s27 + $0x6a0] sm:$0xff]
  %v382 = vld [vmem:[%s27 + $0x6a8] sm:$0xff]
  %v383 = vld [vmem:[%s27 + $0x6b0] sm:$0xff]
  %v384 = vld [vmem:[%s27 + $0x6b8] sm:$0xff]
  %v385 = vld [vmem:[%s27 + $0x6c0] sm:$0xff]
  %v386 = vld [vmem:[%s27 + $0x6c8] sm:$0xff]
  %v387 = vld [vmem:[%s27 + $0x6d0] sm:$0xff]
  %v388 = vld [vmem:[%s27 + $0x6d8] sm:$0xff]
  %v389 = vld [vmem:[%s27 + $0x6e0] sm:$0xff]
  %v390 = vld [vmem:[%s27 + $0x6e8] sm:$0xff]
  %v391 = vld [vmem:[%s27 + $0x6f0] sm:$0xff]
  %v392 = vld [vmem:[%s27 + $0x6f8] sm:$0xff]
  %v393 = vld [vmem:[%s27 + $0x700] sm:$0xff]
  %v394 = vld [vmem:[%s27 + $0x708] sm:$0xff]
  %v395 = vld [vmem:[%s27 + $0x710] sm:$0xff]
  %v396 = vld [vmem:[%s27 + $0x718] sm:$0xff]
  %v397 = vld [vmem:[%s27 + $0x720] sm:$0xff]
  %v398 = vld [vmem:[%s27 + $0x728] sm:$0xff]
  %v399 = vld [vmem:[%s27 + $0x730] sm:$0xff]
  %v400 = vld [vmem:[%s27 + $0x738] sm:$0xff]
  %v401 = vld [vmem:[%s27 + $0x740] sm:$0xff]
  %v402 = vld [vmem:[%s27 + $0x748] sm:$0xff]
  %v403 = vld [vmem:[%s27 + $0x750] sm:$0xff]
  %v404 = vld [vmem:[%s27 + $0x758] sm:$0xff]
  %v405 = vld [vmem:[%s27 + $0x760] sm:$0xff]
  %v406 = vld [vmem:[%s27 + $0x768] sm:$0xff]
  %v407 = vld [vmem:[%s27 + $0x770] sm:$0xff]
  %v408 = vld [vmem:[%s27 + $0x778] sm:$0xff]
  %v409 = vld [vmem:[%s27 + $0x780] sm:$0xff]
  %v410 = vld [vmem:[%s27 + $0x788] sm:$0xff]
  %v411 = vld [vmem:[%s27 + $0x790] sm:$0xff]
  %v412 = vld [vmem:[%s27 + $0x798] sm:$0xff]
  %v413 = vld [vmem:[%s27 + $0x7a0] sm:$0xff]
  %v414 = vld [vmem:[%s27 + $0x7a8] sm:$0xff]
  %v415 = vld [vmem:[%s27 + $0x7b0] sm:$0xff]
  %v416 = vld [vmem:[%s27 + $0x7b8] sm:$0xff]
  %v417 = vld [vmem:[%s27 + $0x7c0] sm:$0xff]
  %v418 = vld [vmem:[%s27 + $0x7c8] sm:$0xff]
  %v419 = vld [vmem:[%s27 + $0x7d0] sm:$0xff]
  %v420 = vld [vmem:[%s27 + $0x7d8] sm:$0xff]
  %v421 = vld [vmem:[%s27 + $0x7e0] sm:$0xff]
  %v422 = vld [vmem:[%s27 + $0x7e8] sm:$0xff]
  %v423 = vld [vmem:[%s27 + $0x7f0] sm:$0xff]
  %v424 = vld [vmem:[%s27 + $0x7f8] sm:$0xff]
  %v425 = vld [vmem:[%s27 + $0x800] sm:$0xff]
  %v426 = vld [vmem:[%s27 + $0x808] sm:$0xff]
  %v427 = vld [vmem:[%s27 + $0x810] sm:$0xff]
  %v428 = vld [vmem:[%s27 + $0x818] sm:$0xff]
  %v429 = vld [vmem:[%s27 + $0x820] sm:$0xff]
  %v430 = vld [vmem:[%s27 + $0x828] sm:$0xff]
  %v431 = vld [vmem:[%s27 + $0x830] sm:$0xff]
  %v432 = vld [vmem:[%s27 + $0x838] sm:$0xff]
  %v433 = vld [vmem:[%s27 + $0x840] sm:$0xff]
  %v434 = vld [vmem:[%s27 + $0x848] sm:$0xff]
  %v435 = vld [vmem:[%s27 + $0x850] sm:$0xff]
  %v436 = vld [vmem:[%s27 + $0x858] sm:$0xff]
  %v437 = vld [vmem:[%s27 + $0x860] sm:$0xff]
  %v438 = vld [vmem:[%s27 + $0x868] sm:$0xff]
  %v439 = vld [vmem:[%s27 + $0x870] sm:$0xff]
  %v440 = vld [vmem:[%s27 + $0x878] sm:$0xff]
  %v441 = vld [vmem:[%s27 + $0x880] sm:$0xff]
  %v442 = vld [vmem:[%s27 + $0x888] sm:$0xff]
  %v443 = vld [vmem:[%s27 + $0x890] sm:$0xff]
  %v444 = vld [vmem:[%s27 + $0x898] sm:$0xff]
  %v445 = vld [vmem:[%s27 + $0x8a0] sm:$0xff]
  %v446 = vld [vmem:[%s27 + $0x8a8] sm:$0xff]
  %v447 = vld [vmem:[%s27 + $0x8b0] sm:$0xff]
  %v448 = vld [vmem:[%s27 + $0x8b8] sm:$0xff]
  %v449 = vld [vmem:[%s27 + $0x8c0] sm:$0xff]
  %v450 = vld [vmem:[%s27 + $0x8c8] sm:$0xff]
  %v451 = vld [vmem:[%s27 + $0x8d0] sm:$0xff]
  %v452 = vld [vmem:[%s27 + $0x8d8] sm:$0xff]
  %v453 = vld [vmem:[%s27 + $0x8e0] sm:$0xff]
  %v454 = vld [vmem:[%s27 + $0x8e8] sm:$0xff]
  %v455 = vld [vmem:[%s27 + $0x8f0] sm:$0xff]
  %v456 = vld [vmem:[%s27 + $0x8f8] sm:$0xff]
  %v457 = vld [vmem:[%s27 + $0x900] sm:$0xff]
  %v458 = vld [vmem:[%s27 + $0x908] sm:$0xff]
  %v459 = vld [vmem:[%s27 + $0x910] sm:$0xff]
  %v460 = vld [vmem:[%s27 + $0x918] sm:$0xff]
  %v461 = vld [vmem:[%s27 + $0x920] sm:$0xff]
  %v462 = vld [vmem:[%s27 + $0x928] sm:$0xff]
  %v463 = vld [vmem:[%s27 + $0x930] sm:$0xff]
  %v464 = vld [vmem:[%s27 + $0x938] sm:$0xff]
  %v465 = vld [vmem:[%s27 + $0x940] sm:$0xff]
  %v466 = vld [vmem:[%s27 + $0x948] sm:$0xff]
  %v467 = vld [vmem:[%s27 + $0x950] sm:$0xff]
  %v468 = vld [vmem:[%s27 + $0x958] sm:$0xff]
  %v469 = vld [vmem:[%s27 + $0x960] sm:$0xff]
  %v470 = vld [vmem:[%s27 + $0x968] sm:$0xff]
  %v471 = vld [vmem:[%s27 + $0x970] sm:$0xff]
  %v472 = vld [vmem:[%s27 + $0x978] sm:$0xff]
  %v473 = vld [vmem:[%s27 + $0x980] sm:$0xff]
  %v474 = vld [vmem:[%s27 + $0x988] sm:$0xff]
  %v475 = vld [vmem:[%s27 + $0x990] sm:$0xff]
  %v476 = vld [vmem:[%s27 + $0x998] sm:$0xff]
  %v477 = vld [vmem:[%s27 + $0x9a0] sm:$0xff]
  %v478 = vld [vmem:[%s27 + $0x9a8] sm:$0xff]
  %v479 = vld [vmem:[%s27 + $0x9b0] sm:$0xff]
  %v480 = vld [vmem:[%s27 + $0x9b8] sm:$0xff]
  %v481 = vld [vmem:[%s27 + $0x9c0] sm:$0xff]
  %v482 = vld [vmem:[%s27 + $0x9c8] sm:$0xff]
  %v483 = vld [vmem:[%s27 + $0x9d0] sm:$0xff]
  %v484 = vld [vmem:[%s27 + $0x9d8] sm:$0xff]
  %v485 = vld [vmem:[%s27 + $0x9e0] sm:$0xff]
  %v486 = vld [vmem:[%s27 + $0x9e8] sm:$0xff]
  %v487 = vld [vmem:[%s27 + $0x9f0] sm:$0xff]
  %v488 = vld [vmem:[%s27 + $0x9f8] sm:$0xff]
  %v489 = vld [vmem:[%s29] sm:$0x1]
  %v491 = vlaneseq
  %v492 = vshrl.u32 %v491, 7
  %v493 = vsub.s32 0, %v492
  %v494 = vrot.slane %v489, %v493
  %v501 = vcombine.high %v164, %v164
  %v503 = vunpack.c.l.s4 1983009808
  %v504 = vunpack.c.0.s8 %v503
  %v505 = vlaneseq
  %v506 = vshrl.u32 %v505, 7
  %v507 = vsub.s32 %v504, %v506
  %v508 = vrot.slane %v164, %v507
  %v510 = vunpack.c.l.s4 1983009808
  %v511 = vunpack.c.0.s8 %v510
  %v512 = vlaneseq
  %v513 = vshrl.u32 %v512, 7
  %v514 = vsub.s32 %v511, %v513
  %v515 = vrot.slane %v501, %v514
  %v516 = vcombine.high %v508, %v508
  %v517 = vcombine.high %v515, %v515
  %v518 = vcombine.high %v165, %v165
  %v520 = vunpack.c.l.s4 1983009808
  %v521 = vunpack.c.0.s8 %v520
  %v522 = vlaneseq
  %v523 = vshrl.u32 %v522, 7
  %v524 = vsub.s32 %v521, %v523
  %v525 = vrot.slane %v165, %v524
  %v527 = vunpack.c.l.s4 1983009808
  %v528 = vunpack.c.0.s8 %v527
  %v529 = vlaneseq
  %v530 = vshrl.u32 %v529, 7
  %v531 = vsub.s32 %v528, %v530
  %v532 = vrot.slane %v518, %v531
  %v533 = vcombine.high %v525, %v525
  %v534 = vcombine.high %v532, %v532
  %v535 = vcombine.high %v166, %v166
  %v537 = vunpack.c.l.s4 1983009808
  %v538 = vunpack.c.0.s8 %v537
  %v539 = vlaneseq
  %v540 = vshrl.u32 %v539, 7
  %v541 = vsub.s32 %v538, %v540
  %v542 = vrot.slane %v166, %v541
  %v544 = vunpack.c.l.s4 1983009808
  %v545 = vunpack.c.0.s8 %v544
  %v546 = vlaneseq
  %v547 = vshrl.u32 %v546, 7
  %v548 = vsub.s32 %v545, %v547
  %v549 = vrot.slane %v535, %v548
  %v550 = vcombine.high %v542, %v542
  %v551 = vcombine.high %v549, %v549
  %v552 = vcombine.high %v167, %v167
  %v554 = vunpack.c.l.s4 1983009808
  %v555 = vunpack.c.0.s8 %v554
  %v556 = vlaneseq
  %v557 = vshrl.u32 %v556, 7
  %v558 = vsub.s32 %v555, %v557
  %v559 = vrot.slane %v167, %v558
  %v561 = vunpack.c.l.s4 1983009808
  %v562 = vunpack.c.0.s8 %v561
  %v563 = vlaneseq
  %v564 = vshrl.u32 %v563, 7
  %v565 = vsub.s32 %v562, %v564
  %v566 = vrot.slane %v552, %v565
  %v567 = vcombine.high %v559, %v559
  %v568 = vcombine.high %v566, %v566
  %v569 = vcombine.high %v168, %v168
  %v571 = vunpack.c.l.s4 1983009808
  %v572 = vunpack.c.0.s8 %v571
  %v573 = vlaneseq
  %v574 = vshrl.u32 %v573, 7
  %v575 = vsub.s32 %v572, %v574
  %v576 = vrot.slane %v168, %v575
  %v578 = vunpack.c.l.s4 1983009808
  %v579 = vunpack.c.0.s8 %v578
  %v580 = vlaneseq
  %v581 = vshrl.u32 %v580, 7
  %v582 = vsub.s32 %v579, %v581
  %v583 = vrot.slane %v569, %v582
  %v584 = vcombine.high %v576, %v576
  %v585 = vcombine.high %v583, %v583
  %606 = vmatprep.subr.mxu0 0.0
  %607 = vmatpush1.msra.mxu0 %v184
  %608 = vmatprep.subr.mxu0 0.0
  %609 = vmatpush1.msra.mxu0 %v183
  %610 = vmatprep.subr.mxu0 0.0
  %611 = vmatpush1.msra.mxu0 %v182
  %612 = vmatprep.subr.mxu0 0.0
  %613 = vmatpush1.msra.mxu0 %v181
  %614 = vmatprep.subr.mxu0 0.0
  %615 = vmatpush1.msra.mxu0 %v180
  %616 = vmatprep.subr.mxu0 0.0
  %617 = vmatpush1.msra.mxu0 %v179
  %618 = vmatprep.subr.mxu0 0.0
  %619 = vmatpush1.msra.mxu0 %v178
  %620 = vmatprep.subr.mxu0 0.0
  %621 = vmatpush1.msra.mxu0 %v177
  %622 = vmatprep.subr.mxu0 0.0
  %623 = vmatpush1.msra.mxu0 %v176
  %624 = vmatprep.subr.mxu0 0.0
  %625 = vmatpush1.msra.mxu0 %v175
  %626 = vmatprep.subr.mxu0 0.0
  %627 = vmatpush1.msra.mxu0 %v174
  %628 = vmatprep.subr.mxu0 0.0
  %629 = vmatpush1.msra.mxu0 %v173
  %630 = vmatprep.subr.mxu0 0.0
  %631 = vmatpush1.msra.mxu0 %v172
  %632 = vmatprep.subr.mxu0 0.0
  %633 = vmatpush1.msra.mxu0 %v171
  %634 = vmatprep.subr.mxu0 0.0
  %635 = vmatpush1.msra.mxu0 %v170
  %636 = vmatprep.subr.mxu0 0.0
  %637 = vmatpush1.msra.mxu0 %v169
  %638 = vmatprep.subr.mxu0 0.0
  %639 = vmatpush2.msra.mxu0 %v200
  %640 = vmatprep.subr.mxu0 0.0
  %641 = vmatpush2.msra.mxu0 %v199
  %642 = vmatprep.subr.mxu0 0.0
  %643 = vmatpush2.msra.mxu0 %v198
  %644 = vmatprep.subr.mxu0 0.0
  %645 = vmatpush2.msra.mxu0 %v197
  %646 = vmatprep.subr.mxu0 0.0
  %647 = vmatpush2.msra.mxu0 %v196
  %648 = vmatprep.subr.mxu0 0.0
  %649 = vmatpush2.msra.mxu0 %v195
  %650 = vmatprep.subr.mxu0 0.0
  %651 = vmatpush2.msra.mxu0 %v194
  %652 = vmatprep.subr.mxu0 0.0
  %653 = vmatpush2.msra.mxu0 %v193
  %654 = vmatprep.subr.mxu0 0.0
  %655 = vmatpush2.msra.mxu0 %v192
  %656 = vmatprep.subr.mxu0 0.0
  %657 = vmatpush2.msra.mxu0 %v191
  %658 = vmatprep.subr.mxu0 0.0
  %659 = vmatpush2.msra.mxu0 %v190
  %660 = vmatprep.subr.mxu0 0.0
  %661 = vmatpush2.msra.mxu0 %v189
  %662 = vmatprep.subr.mxu0 0.0
  %663 = vmatpush2.msra.mxu0 %v188
  %664 = vmatprep.subr.mxu0 0.0
  %665 = vmatpush2.msra.mxu0 %v187
  %666 = vmatprep.subr.mxu0 0.0
  %667 = vmatpush2.msra.mxu0 %v186
  %668 = vmatprep.subr.mxu0 0.0
  %669 = vmatpush2.msra.mxu0 %v185
  %670 = vmatprep.mubr.f32.mxu0 %v516
  %671 = vmatmul.mubr.f32.gmra.mxu0 %v508
  %v672 = vpop.f32.mrf.mxu0
  %v673 = vadd.f32 %v494, %v672
  %v674 = vpop.f32.mrf.mxu0
  %675 = vdwg.mxu0
  %676 = vmatprep.subr.mxu0 0.0
  %677 = vmatpush1.msra.mxu0 %v216
  %678 = vmatprep.subr.mxu0 0.0
  %679 = vmatpush1.msra.mxu0 %v215
  %680 = vmatprep.subr.mxu0 0.0
  %681 = vmatpush1.msra.mxu0 %v214
  %682 = vmatprep.subr.mxu0 0.0
  %683 = vmatpush1.msra.mxu0 %v213
  %684 = vmatprep.subr.mxu0 0.0
  %685 = vmatpush1.msra.mxu0 %v212
  %686 = vmatprep.subr.mxu0 0.0
  %687 = vmatpush1.msra.mxu0 %v211
  %688 = vmatprep.subr.mxu0 0.0
  %689 = vmatpush1.msra.mxu0 %v210
  %690 = vmatprep.subr.mxu0 0.0
  %691 = vmatpush1.msra.mxu0 %v209
  %692 = vmatprep.subr.mxu0 0.0
  %693 = vmatpush1.msra.mxu0 %v208
  %694 = vmatprep.subr.mxu0 0.0
  %695 = vmatpush1.msra.mxu0 %v207
  %696 = vmatprep.subr.mxu0 0.0
  %697 = vmatpush1.msra.mxu0 %v206
  %698 = vmatprep.subr.mxu0 0.0
  %699 = vmatpush1.msra.mxu0 %v205
  %700 = vmatprep.subr.mxu0 0.0
  %701 = vmatpush1.msra.mxu0 %v204
  %702 = vmatprep.subr.mxu0 0.0
  %703 = vmatpush1.msra.mxu0 %v203
  %704 = vmatprep.subr.mxu0 0.0
  %705 = vmatpush1.msra.mxu0 %v202
  %706 = vmatprep.subr.mxu0 0.0
  %707 = vmatpush1.msra.mxu0 %v201
  %708 = vmatprep.subr.mxu0 0.0
  %709 = vmatpush2.msra.mxu0 %v232
  %710 = vmatprep.subr.mxu0 0.0
  %711 = vmatpush2.msra.mxu0 %v231
  %712 = vmatprep.subr.mxu0 0.0
  %713 = vmatpush2.msra.mxu0 %v230
  %714 = vmatprep.subr.mxu0 0.0
  %715 = vmatpush2.msra.mxu0 %v229
  %716 = vmatprep.subr.mxu0 0.0
  %717 = vmatpush2.msra.mxu0 %v228
  %718 = vmatprep.subr.mxu0 0.0
  %719 = vmatpush2.msra.mxu0 %v227
  %720 = vmatprep.subr.mxu0 0.0
  %721 = vmatpush2.msra.mxu0 %v226
  %722 = vmatprep.subr.mxu0 0.0
  %723 = vmatpush2.msra.mxu0 %v225
  %724 = vmatprep.subr.mxu0 0.0
  %725 = vmatpush2.msra.mxu0 %v224
  %726 = vmatprep.subr.mxu0 0.0
  %727 = vmatpush2.msra.mxu0 %v223
  %728 = vmatprep.subr.mxu0 0.0
  %729 = vmatpush2.msra.mxu0 %v222
  %730 = vmatprep.subr.mxu0 0.0
  %731 = vmatpush2.msra.mxu0 %v221
  %732 = vmatprep.subr.mxu0 0.0
  %733 = vmatpush2.msra.mxu0 %v220
  %734 = vmatprep.subr.mxu0 0.0
  %735 = vmatpush2.msra.mxu0 %v219
  %736 = vmatprep.subr.mxu0 0.0
  %737 = vmatpush2.msra.mxu0 %v218
  %738 = vmatprep.subr.mxu0 0.0
  %739 = vmatpush2.msra.mxu0 %v217
  %740 = vmatprep.mubr.f32.mxu0 %v517
  %741 = vmatmul.mubr.f32.gmra.mxu0 %v515
  %v742 = vpop.f32.mrf.mxu0
  %v743 = vadd.f32 %v673, %v742
  %v744 = vpop.f32.mrf.mxu0
  %745 = vdwg.mxu0
  %746 = vmatprep.subr.mxu0 0.0
  %747 = vmatpush1.msra.mxu0 %v248
  %748 = vmatprep.subr.mxu0 0.0
  %749 = vmatpush1.msra.mxu0 %v247
  %750 = vmatprep.subr.mxu0 0.0
  %751 = vmatpush1.msra.mxu0 %v246
  %752 = vmatprep.subr.mxu0 0.0
  %753 = vmatpush1.msra.mxu0 %v245
  %754 = vmatprep.subr.mxu0 0.0
  %755 = vmatpush1.msra.mxu0 %v244
  %756 = vmatprep.subr.mxu0 0.0
  %757 = vmatpush1.msra.mxu0 %v243
  %758 = vmatprep.subr.mxu0 0.0
  %759 = vmatpush1.msra.mxu0 %v242
  %760 = vmatprep.subr.mxu0 0.0
  %761 = vmatpush1.msra.mxu0 %v241
  %762 = vmatprep.subr.mxu0 0.0
  %763 = vmatpush1.msra.mxu0 %v240
  %764 = vmatprep.subr.mxu0 0.0
  %765 = vmatpush1.msra.mxu0 %v239
  %766 = vmatprep.subr.mxu0 0.0
  %767 = vmatpush1.msra.mxu0 %v238
  %768 = vmatprep.subr.mxu0 0.0
  %769 = vmatpush1.msra.mxu0 %v237
  %770 = vmatprep.subr.mxu0 0.0
  %771 = vmatpush1.msra.mxu0 %v236
  %772 = vmatprep.subr.mxu0 0.0
  %773 = vmatpush1.msra.mxu0 %v235
  %774 = vmatprep.subr.mxu0 0.0
  %775 = vmatpush1.msra.mxu0 %v234
  %776 = vmatprep.subr.mxu0 0.0
  %777 = vmatpush1.msra.mxu0 %v233
  %778 = vmatprep.subr.mxu0 0.0
  %779 = vmatpush2.msra.mxu0 %v264
  %780 = vmatprep.subr.mxu0 0.0
  %781 = vmatpush2.msra.mxu0 %v263
  %782 = vmatprep.subr.mxu0 0.0
  %783 = vmatpush2.msra.mxu0 %v262
  %784 = vmatprep.subr.mxu0 0.0
  %785 = vmatpush2.msra.mxu0 %v261
  %786 = vmatprep.subr.mxu0 0.0
  %787 = vmatpush2.msra.mxu0 %v260
  %788 = vmatprep.subr.mxu0 0.0
  %789 = vmatpush2.msra.mxu0 %v259
  %790 = vmatprep.subr.mxu0 0.0
  %791 = vmatpush2.msra.mxu0 %v258
  %792 = vmatprep.subr.mxu0 0.0
  %793 = vmatpush2.msra.mxu0 %v257
  %794 = vmatprep.subr.mxu0 0.0
  %795 = vmatpush2.msra.mxu0 %v256
  %796 = vmatprep.subr.mxu0 0.0
  %797 = vmatpush2.msra.mxu0 %v255
  %798 = vmatprep.subr.mxu0 0.0
  %799 = vmatpush2.msra.mxu0 %v254
  %800 = vmatprep.subr.mxu0 0.0
  %801 = vmatpush2.msra.mxu0 %v253
  %802 = vmatprep.subr.mxu0 0.0
  %803 = vmatpush2.msra.mxu0 %v252
  %804 = vmatprep.subr.mxu0 0.0
  %805 = vmatpush2.msra.mxu0 %v251
  %806 = vmatprep.subr.mxu0 0.0
  %807 = vmatpush2.msra.mxu0 %v250
  %808 = vmatprep.subr.mxu0 0.0
  %809 = vmatpush2.msra.mxu0 %v249
  %810 = vmatprep.mubr.f32.mxu0 %v533
  %811 = vmatmul.mubr.f32.gmra.mxu0 %v525
  %v812 = vpop.f32.mrf.mxu0
  %v813 = vadd.f32 %v743, %v812
  %v814 = vpop.f32.mrf.mxu0
  %815 = vdwg.mxu0
  %816 = vmatprep.subr.mxu0 0.0
  %817 = vmatpush1.msra.mxu0 %v280
  %818 = vmatprep.subr.mxu0 0.0
  %819 = vmatpush1.msra.mxu0 %v279
  %820 = vmatprep.subr.mxu0 0.0
  %821 = vmatpush1.msra.mxu0 %v278
  %822 = vmatprep.subr.mxu0 0.0
  %823 = vmatpush1.msra.mxu0 %v277
  %824 = vmatprep.subr.mxu0 0.0
  %825 = vmatpush1.msra.mxu0 %v276
  %826 = vmatprep.subr.mxu0 0.0
  %827 = vmatpush1.msra.mxu0 %v275
  %828 = vmatprep.subr.mxu0 0.0
  %829 = vmatpush1.msra.mxu0 %v274
  %830 = vmatprep.subr.mxu0 0.0
  %831 = vmatpush1.msra.mxu0 %v273
  %832 = vmatprep.subr.mxu0 0.0
  %833 = vmatpush1.msra.mxu0 %v272
  %834 = vmatprep.subr.mxu0 0.0
  %835 = vmatpush1.msra.mxu0 %v271
  %836 = vmatprep.subr.mxu0 0.0
  %837 = vmatpush1.msra.mxu0 %v270
  %838 = vmatprep.subr.mxu0 0.0
  %839 = vmatpush1.msra.mxu0 %v269
  %840 = vmatprep.subr.mxu0 0.0
  %841 = vmatpush1.msra.mxu0 %v268
  %842 = vmatprep.subr.mxu0 0.0
  %843 = vmatpush1.msra.mxu0 %v267
  %844 = vmatprep.subr.mxu0 0.0
  %845 = vmatpush1.msra.mxu0 %v266
  %846 = vmatprep.subr.mxu0 0.0
  %847 = vmatpush1.msra.mxu0 %v265
  %848 = vmatprep.subr.mxu0 0.0
  %849 = vmatpush2.msra.mxu0 %v296
  %850 = vmatprep.subr.mxu0 0.0
  %851 = vmatpush2.msra.mxu0 %v295
  %852 = vmatprep.subr.mxu0 0.0
  %853 = vmatpush2.msra.mxu0 %v294
  %854 = vmatprep.subr.mxu0 0.0
  %855 = vmatpush2.msra.mxu0 %v293
  %856 = vmatprep.subr.mxu0 0.0
  %857 = vmatpush2.msra.mxu0 %v292
  %858 = vmatprep.subr.mxu0 0.0
  %859 = vmatpush2.msra.mxu0 %v291
  %860 = vmatprep.subr.mxu0 0.0
  %861 = vmatpush2.msra.mxu0 %v290
  %862 = vmatprep.subr.mxu0 0.0
  %863 = vmatpush2.msra.mxu0 %v289
  %864 = vmatprep.subr.mxu0 0.0
  %865 = vmatpush2.msra.mxu0 %v288
  %866 = vmatprep.subr.mxu0 0.0
  %867 = vmatpush2.msra.mxu0 %v287
  %868 = vmatprep.subr.mxu0 0.0
  %869 = vmatpush2.msra.mxu0 %v286
  %870 = vmatprep.subr.mxu0 0.0
  %871 = vmatpush2.msra.mxu0 %v285
  %872 = vmatprep.subr.mxu0 0.0
  %873 = vmatpush2.msra.mxu0 %v284
  %874 = vmatprep.subr.mxu0 0.0
  %875 = vmatpush2.msra.mxu0 %v283
  %876 = vmatprep.subr.mxu0 0.0
  %877 = vmatpush2.msra.mxu0 %v282
  %878 = vmatprep.subr.mxu0 0.0
  %879 = vmatpush2.msra.mxu0 %v281
  %880 = vmatprep.mubr.f32.mxu0 %v534
  %881 = vmatmul.mubr.f32.gmra.mxu0 %v532
  %v882 = vpop.f32.mrf.mxu0
  %v883 = vadd.f32 %v813, %v882
  %v884 = vpop.f32.mrf.mxu0
  %885 = vdwg.mxu0
  %886 = vmatprep.subr.mxu0 0.0
  %887 = vmatpush1.msra.mxu0 %v312
  %888 = vmatprep.subr.mxu0 0.0
  %889 = vmatpush1.msra.mxu0 %v311
  %890 = vmatprep.subr.mxu0 0.0
  %891 = vmatpush1.msra.mxu0 %v310
  %892 = vmatprep.subr.mxu0 0.0
  %893 = vmatpush1.msra.mxu0 %v309
  %894 = vmatprep.subr.mxu0 0.0
  %895 = vmatpush1.msra.mxu0 %v308
  %896 = vmatprep.subr.mxu0 0.0
  %897 = vmatpush1.msra.mxu0 %v307
  %898 = vmatprep.subr.mxu0 0.0
  %899 = vmatpush1.msra.mxu0 %v306
  %900 = vmatprep.subr.mxu0 0.0
  %901 = vmatpush1.msra.mxu0 %v305
  %902 = vmatprep.subr.mxu0 0.0
  %903 = vmatpush1.msra.mxu0 %v304
  %904 = vmatprep.subr.mxu0 0.0
  %905 = vmatpush1.msra.mxu0 %v303
  %906 = vmatprep.subr.mxu0 0.0
  %907 = vmatpush1.msra.mxu0 %v302
  %908 = vmatprep.subr.mxu0 0.0
  %909 = vmatpush1.msra.mxu0 %v301
  %910 = vmatprep.subr.mxu0 0.0
  %911 = vmatpush1.msra.mxu0 %v300
  %912 = vmatprep.subr.mxu0 0.0
  %913 = vmatpush1.msra.mxu0 %v299
  %914 = vmatprep.subr.mxu0 0.0
  %915 = vmatpush1.msra.mxu0 %v298
  %916 = vmatprep.subr.mxu0 0.0
  %917 = vmatpush1.msra.mxu0 %v297
  %918 = vmatprep.subr.mxu0 0.0
  %919 = vmatpush2.msra.mxu0 %v328
  %920 = vmatprep.subr.mxu0 0.0
  %921 = vmatpush2.msra.mxu0 %v327
  %922 = vmatprep.subr.mxu0 0.0
  %923 = vmatpush2.msra.mxu0 %v326
  %924 = vmatprep.subr.mxu0 0.0
  %925 = vmatpush2.msra.mxu0 %v325
  %926 = vmatprep.subr.mxu0 0.0
  %927 = vmatpush2.msra.mxu0 %v324
  %928 = vmatprep.subr.mxu0 0.0
  %929 = vmatpush2.msra.mxu0 %v323
  %930 = vmatprep.subr.mxu0 0.0
  %931 = vmatpush2.msra.mxu0 %v322
  %932 = vmatprep.subr.mxu0 0.0
  %933 = vmatpush2.msra.mxu0 %v321
  %934 = vmatprep.subr.mxu0 0.0
  %935 = vmatpush2.msra.mxu0 %v320
  %936 = vmatprep.subr.mxu0 0.0
  %937 = vmatpush2.msra.mxu0 %v319
  %938 = vmatprep.subr.mxu0 0.0
  %939 = vmatpush2.msra.mxu0 %v318
  %940 = vmatprep.subr.mxu0 0.0
  %941 = vmatpush2.msra.mxu0 %v317
  %942 = vmatprep.subr.mxu0 0.0
  %943 = vmatpush2.msra.mxu0 %v316
  %944 = vmatprep.subr.mxu0 0.0
  %945 = vmatpush2.msra.mxu0 %v315
  %946 = vmatprep.subr.mxu0 0.0
  %947 = vmatpush2.msra.mxu0 %v314
  %948 = vmatprep.subr.mxu0 0.0
  %949 = vmatpush2.msra.mxu0 %v313
  %950 = vmatprep.mubr.f32.mxu0 %v550
  %951 = vmatmul.mubr.f32.gmra.mxu0 %v542
  %v952 = vpop.f32.mrf.mxu0
  %v953 = vadd.f32 %v883, %v952
  %v954 = vpop.f32.mrf.mxu0
  %955 = vdwg.mxu0
  %956 = vmatprep.subr.mxu0 0.0
  %957 = vmatpush1.msra.mxu0 %v344
  %958 = vmatprep.subr.mxu0 0.0
  %959 = vmatpush1.msra.mxu0 %v343
  %960 = vmatprep.subr.mxu0 0.0
  %961 = vmatpush1.msra.mxu0 %v342
  %962 = vmatprep.subr.mxu0 0.0
  %963 = vmatpush1.msra.mxu0 %v341
  %964 = vmatprep.subr.mxu0 0.0
  %965 = vmatpush1.msra.mxu0 %v340
  %966 = vmatprep.subr.mxu0 0.0
  %967 = vmatpush1.msra.mxu0 %v339
  %968 = vmatprep.subr.mxu0 0.0
  %969 = vmatpush1.msra.mxu0 %v338
  %970 = vmatprep.subr.mxu0 0.0
  %971 = vmatpush1.msra.mxu0 %v337
  %972 = vmatprep.subr.mxu0 0.0
  %973 = vmatpush1.msra.mxu0 %v336
  %974 = vmatprep.subr.mxu0 0.0
  %975 = vmatpush1.msra.mxu0 %v335
  %976 = vmatprep.subr.mxu0 0.0
  %977 = vmatpush1.msra.mxu0 %v334
  %978 = vmatprep.subr.mxu0 0.0
  %979 = vmatpush1.msra.mxu0 %v333
  %980 = vmatprep.subr.mxu0 0.0
  %981 = vmatpush1.msra.mxu0 %v332
  %982 = vmatprep.subr.mxu0 0.0
  %983 = vmatpush1.msra.mxu0 %v331
  %984 = vmatprep.subr.mxu0 0.0
  %985 = vmatpush1.msra.mxu0 %v330
  %986 = vmatprep.subr.mxu0 0.0
  %987 = vmatpush1.msra.mxu0 %v329
  %988 = vmatprep.subr.mxu0 0.0
  %989 = vmatpush2.msra.mxu0 %v360
  %990 = vmatprep.subr.mxu0 0.0
  %991 = vmatpush2.msra.mxu0 %v359
  %992 = vmatprep.subr.mxu0 0.0
  %993 = vmatpush2.msra.mxu0 %v358
  %994 = vmatprep.subr.mxu0 0.0
  %995 = vmatpush2.msra.mxu0 %v357
  %996 = vmatprep.subr.mxu0 0.0
  %997 = vmatpush2.msra.mxu0 %v356
  %998 = vmatprep.subr.mxu0 0.0
  %999 = vmatpush2.msra.mxu0 %v355
  %1000 = vmatprep.subr.mxu0 0.0
  %1001 = vmatpush2.msra.mxu0 %v354
  %1002 = vmatprep.subr.mxu0 0.0
  %1003 = vmatpush2.msra.mxu0 %v353
  %1004 = vmatprep.subr.mxu0 0.0
  %1005 = vmatpush2.msra.mxu0 %v352
  %1006 = vmatprep.subr.mxu0 0.0
  %1007 = vmatpush2.msra.mxu0 %v351
  %1008 = vmatprep.subr.mxu0 0.0
  %1009 = vmatpush2.msra.mxu0 %v350
  %1010 = vmatprep.subr.mxu0 0.0
  %1011 = vmatpush2.msra.mxu0 %v349
  %1012 = vmatprep.subr.mxu0 0.0
  %1013 = vmatpush2.msra.mxu0 %v348
  %1014 = vmatprep.subr.mxu0 0.0
  %1015 = vmatpush2.msra.mxu0 %v347
  %1016 = vmatprep.subr.mxu0 0.0
  %1017 = vmatpush2.msra.mxu0 %v346
  %1018 = vmatprep.subr.mxu0 0.0
  %1019 = vmatpush2.msra.mxu0 %v345
  %1020 = vmatprep.mubr.f32.mxu0 %v551
  %1021 = vmatmul.mubr.f32.gmra.mxu0 %v549
  %v1022 = vpop.f32.mrf.mxu0
  %v1023 = vadd.f32 %v953, %v1022
  %v1024 = vpop.f32.mrf.mxu0
  %1025 = vdwg.mxu0
  %1026 = vmatprep.subr.mxu0 0.0
  %1027 = vmatpush1.msra.mxu0 %v376
  %1028 = vmatprep.subr.mxu0 0.0
  %1029 = vmatpush1.msra.mxu0 %v375
  %1030 = vmatprep.subr.mxu0 0.0
  %1031 = vmatpush1.msra.mxu0 %v374
  %1032 = vmatprep.subr.mxu0 0.0
  %1033 = vmatpush1.msra.mxu0 %v373
  %1034 = vmatprep.subr.mxu0 0.0
  %1035 = vmatpush1.msra.mxu0 %v372
  %1036 = vmatprep.subr.mxu0 0.0
  %1037 = vmatpush1.msra.mxu0 %v371
  %1038 = vmatprep.subr.mxu0 0.0
  %1039 = vmatpush1.msra.mxu0 %v370
  %1040 = vmatprep.subr.mxu0 0.0
  %1041 = vmatpush1.msra.mxu0 %v369
  %1042 = vmatprep.subr.mxu0 0.0
  %1043 = vmatpush1.msra.mxu0 %v368
  %1044 = vmatprep.subr.mxu0 0.0
  %1045 = vmatpush1.msra.mxu0 %v367
  %1046 = vmatprep.subr.mxu0 0.0
  %1047 = vmatpush1.msra.mxu0 %v366
  %1048 = vmatprep.subr.mxu0 0.0
  %1049 = vmatpush1.msra.mxu0 %v365
  %1050 = vmatprep.subr.mxu0 0.0
  %1051 = vmatpush1.msra.mxu0 %v364
  %1052 = vmatprep.subr.mxu0 0.0
  %1053 = vmatpush1.msra.mxu0 %v363
  %1054 = vmatprep.subr.mxu0 0.0
  %1055 = vmatpush1.msra.mxu0 %v362
  %1056 = vmatprep.subr.mxu0 0.0
  %1057 = vmatpush1.msra.mxu0 %v361
  %1058 = vmatprep.subr.mxu0 0.0
  %1059 = vmatpush2.msra.mxu0 %v392
  %1060 = vmatprep.subr.mxu0 0.0
  %1061 = vmatpush2.msra.mxu0 %v391
  %1062 = vmatprep.subr.mxu0 0.0
  %1063 = vmatpush2.msra.mxu0 %v390
  %1064 = vmatprep.subr.mxu0 0.0
  %1065 = vmatpush2.msra.mxu0 %v389
  %1066 = vmatprep.subr.mxu0 0.0
  %1067 = vmatpush2.msra.mxu0 %v388
  %1068 = vmatprep.subr.mxu0 0.0
  %1069 = vmatpush2.msra.mxu0 %v387
  %1070 = vmatprep.subr.mxu0 0.0
  %1071 = vmatpush2.msra.mxu0 %v386
  %1072 = vmatprep.subr.mxu0 0.0
  %1073 = vmatpush2.msra.mxu0 %v385
  %1074 = vmatprep.subr.mxu0 0.0
  %1075 = vmatpush2.msra.mxu0 %v384
  %1076 = vmatprep.subr.mxu0 0.0
  %1077 = vmatpush2.msra.mxu0 %v383
  %1078 = vmatprep.subr.mxu0 0.0
  %1079 = vmatpush2.msra.mxu0 %v382
  %1080 = vmatprep.subr.mxu0 0.0
  %1081 = vmatpush2.msra.mxu0 %v381
  %1082 = vmatprep.subr.mxu0 0.0
  %1083 = vmatpush2.msra.mxu0 %v380
  %1084 = vmatprep.subr.mxu0 0.0
  %1085 = vmatpush2.msra.mxu0 %v379
  %1086 = vmatprep.subr.mxu0 0.0
  %1087 = vmatpush2.msra.mxu0 %v378
  %1088 = vmatprep.subr.mxu0 0.0
  %1089 = vmatpush2.msra.mxu0 %v377
  %1090 = vmatprep.mubr.f32.mxu0 %v567
  %1091 = vmatmul.mubr.f32.gmra.mxu0 %v559
  %v1092 = vpop.f32.mrf.mxu0
  %v1093 = vadd.f32 %v1023, %v1092
  %v1094 = vpop.f32.mrf.mxu0
  %1095 = vdwg.mxu0
  %1096 = vmatprep.subr.mxu0 0.0
  %1097 = vmatpush1.msra.mxu0 %v408
  %1098 = vmatprep.subr.mxu0 0.0
  %1099 = vmatpush1.msra.mxu0 %v407
  %1100 = vmatprep.subr.mxu0 0.0
  %1101 = vmatpush1.msra.mxu0 %v406
  %1102 = vmatprep.subr.mxu0 0.0
  %1103 = vmatpush1.msra.mxu0 %v405
  %1104 = vmatprep.subr.mxu0 0.0
  %1105 = vmatpush1.msra.mxu0 %v404
  %1106 = vmatprep.subr.mxu0 0.0
  %1107 = vmatpush1.msra.mxu0 %v403
  %1108 = vmatprep.subr.mxu0 0.0
  %1109 = vmatpush1.msra.mxu0 %v402
  %1110 = vmatprep.subr.mxu0 0.0
  %1111 = vmatpush1.msra.mxu0 %v401
  %1112 = vmatprep.subr.mxu0 0.0
  %1113 = vmatpush1.msra.mxu0 %v400
  %1114 = vmatprep.subr.mxu0 0.0
  %1115 = vmatpush1.msra.mxu0 %v399
  %1116 = vmatprep.subr.mxu0 0.0
  %1117 = vmatpush1.msra.mxu0 %v398
  %1118 = vmatprep.subr.mxu0 0.0
  %1119 = vmatpush1.msra.mxu0 %v397
  %1120 = vmatprep.subr.mxu0 0.0
  %1121 = vmatpush1.msra.mxu0 %v396
  %1122 = vmatprep.subr.mxu0 0.0
  %1123 = vmatpush1.msra.mxu0 %v395
  %1124 = vmatprep.subr.mxu0 0.0
  %1125 = vmatpush1.msra.mxu0 %v394
  %1126 = vmatprep.subr.mxu0 0.0
  %1127 = vmatpush1.msra.mxu0 %v393
  %1128 = vmatprep.subr.mxu0 0.0
  %1129 = vmatpush2.msra.mxu0 %v424
  %1130 = vmatprep.subr.mxu0 0.0
  %1131 = vmatpush2.msra.mxu0 %v423
  %1132 = vmatprep.subr.mxu0 0.0
  %1133 = vmatpush2.msra.mxu0 %v422
  %1134 = vmatprep.subr.mxu0 0.0
  %1135 = vmatpush2.msra.mxu0 %v421
  %1136 = vmatprep.subr.mxu0 0.0
  %1137 = vmatpush2.msra.mxu0 %v420
  %1138 = vmatprep.subr.mxu0 0.0
  %1139 = vmatpush2.msra.mxu0 %v419
  %1140 = vmatprep.subr.mxu0 0.0
  %1141 = vmatpush2.msra.mxu0 %v418
  %1142 = vmatprep.subr.mxu0 0.0
  %1143 = vmatpush2.msra.mxu0 %v417
  %1144 = vmatprep.subr.mxu0 0.0
  %1145 = vmatpush2.msra.mxu0 %v416
  %1146 = vmatprep.subr.mxu0 0.0
  %1147 = vmatpush2.msra.mxu0 %v415
  %1148 = vmatprep.subr.mxu0 0.0
  %1149 = vmatpush2.msra.mxu0 %v414
  %1150 = vmatprep.subr.mxu0 0.0
  %1151 = vmatpush2.msra.mxu0 %v413
  %1152 = vmatprep.subr.mxu0 0.0
  %1153 = vmatpush2.msra.mxu0 %v412
  %1154 = vmatprep.subr.mxu0 0.0
  %1155 = vmatpush2.msra.mxu0 %v411
  %1156 = vmatprep.subr.mxu0 0.0
  %1157 = vmatpush2.msra.mxu0 %v410
  %1158 = vmatprep.subr.mxu0 0.0
  %1159 = vmatpush2.msra.mxu0 %v409
  %1160 = vmatprep.mubr.f32.mxu0 %v568
  %1161 = vmatmul.mubr.f32.gmra.mxu0 %v566
  %v1162 = vpop.f32.mrf.mxu0
  %v1163 = vadd.f32 %v1093, %v1162
  %v1164 = vpop.f32.mrf.mxu0
  %1165 = vdwg.mxu0
  %1166 = vmatprep.subr.mxu0 0.0
  %1167 = vmatpush1.msra.mxu0 %v440
  %1168 = vmatprep.subr.mxu0 0.0
  %1169 = vmatpush1.msra.mxu0 %v439
  %1170 = vmatprep.subr.mxu0 0.0
  %1171 = vmatpush1.msra.mxu0 %v438
  %1172 = vmatprep.subr.mxu0 0.0
  %1173 = vmatpush1.msra.mxu0 %v437
  %1174 = vmatprep.subr.mxu0 0.0
  %1175 = vmatpush1.msra.mxu0 %v436
  %1176 = vmatprep.subr.mxu0 0.0
  %1177 = vmatpush1.msra.mxu0 %v435
  %1178 = vmatprep.subr.mxu0 0.0
  %1179 = vmatpush1.msra.mxu0 %v434
  %1180 = vmatprep.subr.mxu0 0.0
  %1181 = vmatpush1.msra.mxu0 %v433
  %1182 = vmatprep.subr.mxu0 0.0
  %1183 = vmatpush1.msra.mxu0 %v432
  %1184 = vmatprep.subr.mxu0 0.0
  %1185 = vmatpush1.msra.mxu0 %v431
  %1186 = vmatprep.subr.mxu0 0.0
  %1187 = vmatpush1.msra.mxu0 %v430
  %1188 = vmatprep.subr.mxu0 0.0
  %1189 = vmatpush1.msra.mxu0 %v429
  %1190 = vmatprep.subr.mxu0 0.0
  %1191 = vmatpush1.msra.mxu0 %v428
  %1192 = vmatprep.subr.mxu0 0.0
  %1193 = vmatpush1.msra.mxu0 %v427
  %1194 = vmatprep.subr.mxu0 0.0
  %1195 = vmatpush1.msra.mxu0 %v426
  %1196 = vmatprep.subr.mxu0 0.0
  %1197 = vmatpush1.msra.mxu0 %v425
  %1198 = vmatprep.subr.mxu0 0.0
  %1199 = vmatpush2.msra.mxu0 %v456
  %1200 = vmatprep.subr.mxu0 0.0
  %1201 = vmatpush2.msra.mxu0 %v455
  %1202 = vmatprep.subr.mxu0 0.0
  %1203 = vmatpush2.msra.mxu0 %v454
  %1204 = vmatprep.subr.mxu0 0.0
  %1205 = vmatpush2.msra.mxu0 %v453
  %1206 = vmatprep.subr.mxu0 0.0
  %1207 = vmatpush2.msra.mxu0 %v452
  %1208 = vmatprep.subr.mxu0 0.0
  %1209 = vmatpush2.msra.mxu0 %v451
  %1210 = vmatprep.subr.mxu0 0.0
  %1211 = vmatpush2.msra.mxu0 %v450
  %1212 = vmatprep.subr.mxu0 0.0
  %1213 = vmatpush2.msra.mxu0 %v449
  %1214 = vmatprep.subr.mxu0 0.0
  %1215 = vmatpush2.msra.mxu0 %v448
  %1216 = vmatprep.subr.mxu0 0.0
  %1217 = vmatpush2.msra.mxu0 %v447
  %1218 = vmatprep.subr.mxu0 0.0
  %1219 = vmatpush2.msra.mxu0 %v446
  %1220 = vmatprep.subr.mxu0 0.0
  %1221 = vmatpush2.msra.mxu0 %v445
  %1222 = vmatprep.subr.mxu0 0.0
  %1223 = vmatpush2.msra.mxu0 %v444
  %1224 = vmatprep.subr.mxu0 0.0
  %1225 = vmatpush2.msra.mxu0 %v443
  %1226 = vmatprep.subr.mxu0 0.0
  %1227 = vmatpush2.msra.mxu0 %v442
  %1228 = vmatprep.subr.mxu0 0.0
  %1229 = vmatpush2.msra.mxu0 %v441
  %1230 = vmatprep.mubr.f32.mxu0 %v584
  %1231 = vmatmul.mubr.f32.gmra.mxu0 %v576
  %v1232 = vpop.f32.mrf.mxu0
  %v1233 = vadd.f32 %v1163, %v1232
  %v1234 = vpop.f32.mrf.mxu0
  %1235 = vdwg.mxu0
  %1236 = vmatprep.subr.mxu0 0.0
  %1237 = vmatpush1.msra.mxu0 %v472
  %1238 = vmatprep.subr.mxu0 0.0
  %1239 = vmatpush1.msra.mxu0 %v471
  %1240 = vmatprep.subr.mxu0 0.0
  %1241 = vmatpush1.msra.mxu0 %v470
  %1242 = vmatprep.subr.mxu0 0.0
  %1243 = vmatpush1.msra.mxu0 %v469
  %1244 = vmatprep.subr.mxu0 0.0
  %1245 = vmatpush1.msra.mxu0 %v468
  %1246 = vmatprep.subr.mxu0 0.0
  %1247 = vmatpush1.msra.mxu0 %v467
  %1248 = vmatprep.subr.mxu0 0.0
  %1249 = vmatpush1.msra.mxu0 %v466
  %1250 = vmatprep.subr.mxu0 0.0
  %1251 = vmatpush1.msra.mxu0 %v465
  %1252 = vmatprep.subr.mxu0 0.0
  %1253 = vmatpush1.msra.mxu0 %v464
  %1254 = vmatprep.subr.mxu0 0.0
  %1255 = vmatpush1.msra.mxu0 %v463
  %1256 = vmatprep.subr.mxu0 0.0
  %1257 = vmatpush1.msra.mxu0 %v462
  %1258 = vmatprep.subr.mxu0 0.0
  %1259 = vmatpush1.msra.mxu0 %v461
  %1260 = vmatprep.subr.mxu0 0.0
  %1261 = vmatpush1.msra.mxu0 %v460
  %1262 = vmatprep.subr.mxu0 0.0
  %1263 = vmatpush1.msra.mxu0 %v459
  %1264 = vmatprep.subr.mxu0 0.0
  %1265 = vmatpush1.msra.mxu0 %v458
  %1266 = vmatprep.subr.mxu0 0.0
  %1267 = vmatpush1.msra.mxu0 %v457
  %1268 = vmatprep.subr.mxu0 0.0
  %1269 = vmatpush2.msra.mxu0 %v488
  %1270 = vmatprep.subr.mxu0 0.0
  %1271 = vmatpush2.msra.mxu0 %v487
  %1272 = vmatprep.subr.mxu0 0.0
  %1273 = vmatpush2.msra.mxu0 %v486
  %1274 = vmatprep.subr.mxu0 0.0
  %1275 = vmatpush2.msra.mxu0 %v485
  %1276 = vmatprep.subr.mxu0 0.0
  %1277 = vmatpush2.msra.mxu0 %v484
  %1278 = vmatprep.subr.mxu0 0.0
  %1279 = vmatpush2.msra.mxu0 %v483
  %1280 = vmatprep.subr.mxu0 0.0
  %1281 = vmatpush2.msra.mxu0 %v482
  %1282 = vmatprep.subr.mxu0 0.0
  %1283 = vmatpush2.msra.mxu0 %v481
  %1284 = vmatprep.subr.mxu0 0.0
  %1285 = vmatpush2.msra.mxu0 %v480
  %1286 = vmatprep.subr.mxu0 0.0
  %1287 = vmatpush2.msra.mxu0 %v479
  %1288 = vmatprep.subr.mxu0 0.0
  %1289 = vmatpush2.msra.mxu0 %v478
  %1290 = vmatprep.subr.mxu0 0.0
  %1291 = vmatpush2.msra.mxu0 %v477
  %1292 = vmatprep.subr.mxu0 0.0
  %1293 = vmatpush2.msra.mxu0 %v476
  %1294 = vmatprep.subr.mxu0 0.0
  %1295 = vmatpush2.msra.mxu0 %v475
  %1296 = vmatprep.subr.mxu0 0.0
  %1297 = vmatpush2.msra.mxu0 %v474
  %1298 = vmatprep.subr.mxu0 0.0
  %1299 = vmatpush2.msra.mxu0 %v473
  %1300 = vmatprep.mubr.f32.mxu0 %v585
  %1301 = vmatmul.mubr.f32.gmra.mxu0 %v583
  %v1302 = vpop.f32.mrf.mxu0
  %v1303 = vadd.f32 %v1233, %v1302
  %v1304 = vpop.f32.mrf.mxu0
  %1305 = vdwg.mxu0
  %v1306 = vld [vmem:[%s31] sm:$0xff]
  %v1307 = vld [vmem:[%s31 + $0x8] sm:$0xff]
  %v1308 = vld [vmem:[%s31 + $0x10] sm:$0xff]
  %v1309 = vld [vmem:[%s31 + $0x18] sm:$0xff]
  %v1310 = vld [vmem:[%s33] sm:$0x1]
  %v1312 = vlaneseq
  %v1313 = vshrl.u32 %v1312, 7
  %v1314 = vsub.s32 0, %v1313
  %v1315 = vrot.slane %v1310, %v1314
  %vm1317 = vcmask 261120
  %v1319 = vsel %vm1317, %v1303, 0
  %1321 = vmatprep.subr.mxu0 0.0
  %1322 = vmatpush1.msra.mxu0 0.0
  %1323 = vmatprep.subr.mxu0 0.0
  %1324 = vmatpush1.msra.mxu0 0.0
  %1325 = vmatprep.subr.mxu0 0.0
  %1326 = vmatpush1.msra.mxu0 0.0
  %1327 = vmatprep.subr.mxu0 0.0
  %1328 = vmatpush1.msra.mxu0 0.0
  %1329 = vmatprep.subr.mxu0 0.0
  %1330 = vmatpush1.msra.mxu0 0.0
  %1331 = vmatprep.subr.mxu0 0.0
  %1332 = vmatpush1.msra.mxu0 0.0
  %1333 = vmatprep.subr.mxu0 0.0
  %1334 = vmatpush1.msra.mxu0 0.0
  %1335 = vmatprep.subr.mxu0 0.0
  %1336 = vmatpush1.msra.mxu0 0.0
  %1337 = vmatprep.subr.mxu0 0.0
  %1338 = vmatpush1.msra.mxu0 0.0
  %1339 = vmatprep.subr.mxu0 0.0
  %1340 = vmatpush1.msra.mxu0 0.0
  %1341 = vmatprep.subr.mxu0 0.0
  %1342 = vmatpush1.msra.mxu0 0.0
  %1343 = vmatprep.subr.mxu0 0.0
  %1344 = vmatpush1.msra.mxu0 0.0
  %1345 = vmatprep.subr.mxu0 0.0
  %1346 = vmatpush1.msra.mxu0 %v1309
  %1347 = vmatprep.subr.mxu0 0.0
  %1348 = vmatpush1.msra.mxu0 %v1308
  %1349 = vmatprep.subr.mxu0 0.0
  %1350 = vmatpush1.msra.mxu0 %v1307
  %1351 = vmatprep.subr.mxu0 0.0
  %1352 = vmatpush1.msra.mxu0 %v1306
  %1353 = vmatprep.subr.mxu0 0.0
  %1354 = vmatpush2.msra.mxu0 0.0
  %1355 = vmatprep.subr.mxu0 0.0
  %1356 = vmatpush2.msra.mxu0 0.0
  %1357 = vmatprep.subr.mxu0 0.0
  %1358 = vmatpush2.msra.mxu0 0.0
  %1359 = vmatprep.subr.mxu0 0.0
  %1360 = vmatpush2.msra.mxu0 0.0
  %1361 = vmatprep.subr.mxu0 0.0
  %1362 = vmatpush2.msra.mxu0 0.0
  %1363 = vmatprep.subr.mxu0 0.0
  %1364 = vmatpush2.msra.mxu0 0.0
  %1365 = vmatprep.subr.mxu0 0.0
  %1366 = vmatpush2.msra.mxu0 0.0
  %1367 = vmatprep.subr.mxu0 0.0
  %1368 = vmatpush2.msra.mxu0 0.0
  %1369 = vmatprep.subr.mxu0 0.0
  %1370 = vmatpush2.msra.mxu0 0.0
  %1371 = vmatprep.subr.mxu0 0.0
  %1372 = vmatpush2.msra.mxu0 0.0
  %1373 = vmatprep.subr.mxu0 0.0
  %1374 = vmatpush2.msra.mxu0 0.0
  %1375 = vmatprep.subr.mxu0 0.0
  %1376 = vmatpush2.msra.mxu0 0.0
  %1377 = vmatprep.subr.mxu0 0.0
  %1378 = vmatpush2.msra.mxu0 0.0
  %1379 = vmatprep.subr.mxu0 0.0
  %1380 = vmatpush2.msra.mxu0 0.0
  %1381 = vmatprep.subr.mxu0 0.0
  %1382 = vmatpush2.msra.mxu0 0.0
  %1383 = vmatprep.subr.mxu0 0.0
  %1384 = vmatpush2.msra.mxu0 0.0
  %1385 = vmatprep.mubr.f32.mxu0 0.0
  %1386 = vmatmul.mubr.f32.gmra.mxu0 %v1319
  %v1387 = vpop.f32.mrf.mxu0
  %v1388 = vadd.f32 %v1315, %v1387
  %v1389 = vpop.f32.mrf.mxu0
  %1390 = vdwg.mxu0
  %v1391 = vld [vmem:[%s1] sm:$0xff]
  %v1392 = vld [vmem:[%s1 + $0x8] sm:$0xff]
  %v1393 = vld [vmem:[%s1 + $0x10] sm:$0xff]
  %v1394 = vld [vmem:[%s1 + $0x18] sm:$0xff]
  %v1395 = vld [vmem:[%s1 + $0x20] sm:$0xff]
  %v1396 = vld [vmem:[%s1 + $0x28] sm:$0xff]
  %v1397 = vld [vmem:[%s1 + $0x30] sm:$0xff]
  %v1398 = vld [vmem:[%s1 + $0x38] sm:$0xff]
  %v1399 = vld [vmem:[%s1 + $0x40] sm:$0xff]
  %v1400 = vld [vmem:[%s43] sm:$0xff]
  %v1401 = vld [vmem:[%s43 + $0x8] sm:$0xff]
  %v1402 = vld [vmem:[%s43 + $0x10] sm:$0xff]
  %v1403 = vld [vmem:[%s43 + $0x18] sm:$0xff]
  %v1404 = vld [vmem:[%s43 + $0x20] sm:$0xff]
  %v1405 = vld [vmem:[%s43 + $0x28] sm:$0xff]
  %v1406 = vld [vmem:[%s43 + $0x30] sm:$0xff]
  %v1407 = vld [vmem:[%s43 + $0x38] sm:$0xff]
  %v1408 = vld [vmem:[%s43 + $0x40] sm:$0xff]
  %v1409 = vld [vmem:[%s43 + $0x48] sm:$0xff]
  %v1410 = vld [vmem:[%s43 + $0x50] sm:$0xff]
  %v1411 = vld [vmem:[%s43 + $0x58] sm:$0xff]
  %v1412 = vld [vmem:[%s43 + $0x60] sm:$0xff]
  %v1413 = vld [vmem:[%s43 + $0x68] sm:$0xff]
  %v1414 = vld [vmem:[%s43 + $0x70] sm:$0xff]
  %v1415 = vld [vmem:[%s43 + $0x78] sm:$0xff]
  %v1416 = vld [vmem:[%s43 + $0x80] sm:$0xff]
  %v1417 = vld [vmem:[%s43 + $0x88] sm:$0xff]
  %v1418 = vld [vmem:[%s43 + $0x90] sm:$0xff]
  %v1419 = vld [vmem:[%s43 + $0x98] sm:$0xff]
  %v1420 = vld [vmem:[%s43 + $0xa0] sm:$0xff]
  %v1421 = vld [vmem:[%s43 + $0xa8] sm:$0xff]
  %v1422 = vld [vmem:[%s43 + $0xb0] sm:$0xff]
  %v1423 = vld [vmem:[%s43 + $0xb8] sm:$0xff]
  %v1424 = vld [vmem:[%s43 + $0xc0] sm:$0xff]
  %v1425 = vld [vmem:[%s43 + $0xc8] sm:$0xff]
  %v1426 = vld [vmem:[%s43 + $0xd0] sm:$0xff]
  %v1427 = vld [vmem:[%s43 + $0xd8] sm:$0xff]
  %v1428 = vld [vmem:[%s43 + $0xe0] sm:$0xff]
  %v1429 = vld [vmem:[%s43 + $0xe8] sm:$0xff]
  %v1430 = vld [vmem:[%s43 + $0xf0] sm:$0xff]
  %v1431 = vld [vmem:[%s43 + $0xf8] sm:$0xff]
  %v1432 = vld [vmem:[%s43 + $0x100] sm:$0xff]
  %v1433 = vld [vmem:[%s43 + $0x108] sm:$0xff]
  %v1434 = vld [vmem:[%s43 + $0x110] sm:$0xff]
  %v1435 = vld [vmem:[%s43 + $0x118] sm:$0xff]
  %v1436 = vld [vmem:[%s43 + $0x120] sm:$0xff]
  %v1437 = vld [vmem:[%s43 + $0x128] sm:$0xff]
  %v1438 = vld [vmem:[%s43 + $0x130] sm:$0xff]
  %v1439 = vld [vmem:[%s43 + $0x138] sm:$0xff]
  %v1440 = vld [vmem:[%s43 + $0x140] sm:$0xff]
  %v1441 = vld [vmem:[%s43 + $0x148] sm:$0xff]
  %v1442 = vld [vmem:[%s43 + $0x150] sm:$0xff]
  %v1443 = vld [vmem:[%s43 + $0x158] sm:$0xff]
  %v1444 = vld [vmem:[%s43 + $0x160] sm:$0xff]
  %v1445 = vld [vmem:[%s43 + $0x168] sm:$0xff]
  %v1446 = vld [vmem:[%s43 + $0x170] sm:$0xff]
  %v1447 = vld [vmem:[%s43 + $0x178] sm:$0xff]
  %v1448 = vld [vmem:[%s43 + $0x180] sm:$0xff]
  %v1449 = vld [vmem:[%s43 + $0x188] sm:$0xff]
  %v1450 = vld [vmem:[%s43 + $0x190] sm:$0xff]
  %v1451 = vld [vmem:[%s43 + $0x198] sm:$0xff]
  %v1452 = vld [vmem:[%s43 + $0x1a0] sm:$0xff]
  %v1453 = vld [vmem:[%s43 + $0x1a8] sm:$0xff]
  %v1454 = vld [vmem:[%s43 + $0x1b0] sm:$0xff]
  %v1455 = vld [vmem:[%s43 + $0x1b8] sm:$0xff]
  %v1456 = vld [vmem:[%s43 + $0x1c0] sm:$0xff]
  %v1457 = vld [vmem:[%s43 + $0x1c8] sm:$0xff]
  %v1458 = vld [vmem:[%s43 + $0x1d0] sm:$0xff]
  %v1459 = vld [vmem:[%s43 + $0x1d8] sm:$0xff]
  %v1460 = vld [vmem:[%s43 + $0x1e0] sm:$0xff]
  %v1461 = vld [vmem:[%s43 + $0x1e8] sm:$0xff]
  %v1462 = vld [vmem:[%s43 + $0x1f0] sm:$0xff]
  %v1463 = vld [vmem:[%s43 + $0x1f8] sm:$0xff]
  %v1464 = vld [vmem:[%s43 + $0x200] sm:$0xff]
  %v1465 = vld [vmem:[%s43 + $0x208] sm:$0xff]
  %v1466 = vld [vmem:[%s43 + $0x210] sm:$0xff]
  %v1467 = vld [vmem:[%s43 + $0x218] sm:$0xff]
  %v1468 = vld [vmem:[%s43 + $0x220] sm:$0xff]
  %v1469 = vld [vmem:[%s43 + $0x228] sm:$0xff]
  %v1470 = vld [vmem:[%s43 + $0x230] sm:$0xff]
  %v1471 = vld [vmem:[%s43 + $0x238] sm:$0xff]
  %v1472 = vld [vmem:[%s43 + $0x240] sm:$0xff]
  %v1473 = vld [vmem:[%s43 + $0x248] sm:$0xff]
  %v1474 = vld [vmem:[%s43 + $0x250] sm:$0xff]
  %v1475 = vld [vmem:[%s43 + $0x258] sm:$0xff]
  %v1476 = vld [vmem:[%s43 + $0x260] sm:$0xff]
  %v1477 = vld [vmem:[%s43 + $0x268] sm:$0xff]
  %v1478 = vld [vmem:[%s43 + $0x270] sm:$0xff]
  %v1479 = vld [vmem:[%s43 + $0x278] sm:$0xff]
  %v1480 = vld [vmem:[%s43 + $0x280] sm:$0xff]
  %v1481 = vld [vmem:[%s43 + $0x288] sm:$0xff]
  %v1482 = vld [vmem:[%s43 + $0x290] sm:$0xff]
  %v1483 = vld [vmem:[%s43 + $0x298] sm:$0xff]
  %v1484 = vld [vmem:[%s43 + $0x2a0] sm:$0xff]
  %v1485 = vld [vmem:[%s43 + $0x2a8] sm:$0xff]
  %v1486 = vld [vmem:[%s43 + $0x2b0] sm:$0xff]
  %v1487 = vld [vmem:[%s43 + $0x2b8] sm:$0xff]
  %v1488 = vld [vmem:[%s43 + $0x2c0] sm:$0xff]
  %v1489 = vld [vmem:[%s43 + $0x2c8] sm:$0xff]
  %v1490 = vld [vmem:[%s43 + $0x2d0] sm:$0xff]
  %v1491 = vld [vmem:[%s43 + $0x2d8] sm:$0xff]
  %v1492 = vld [vmem:[%s43 + $0x2e0] sm:$0xff]
  %v1493 = vld [vmem:[%s43 + $0x2e8] sm:$0xff]
  %v1494 = vld [vmem:[%s43 + $0x2f0] sm:$0xff]
  %v1495 = vld [vmem:[%s43 + $0x2f8] sm:$0xff]
  %v1496 = vld [vmem:[%s43 + $0x300] sm:$0xff]
  %v1497 = vld [vmem:[%s43 + $0x308] sm:$0xff]
  %v1498 = vld [vmem:[%s43 + $0x310] sm:$0xff]
  %v1499 = vld [vmem:[%s43 + $0x318] sm:$0xff]
  %v1500 = vld [vmem:[%s43 + $0x320] sm:$0xff]
  %v1501 = vld [vmem:[%s43 + $0x328] sm:$0xff]
  %v1502 = vld [vmem:[%s43 + $0x330] sm:$0xff]
  %v1503 = vld [vmem:[%s43 + $0x338] sm:$0xff]
  %v1504 = vld [vmem:[%s43 + $0x340] sm:$0xff]
  %v1505 = vld [vmem:[%s43 + $0x348] sm:$0xff]
  %v1506 = vld [vmem:[%s43 + $0x350] sm:$0xff]
  %v1507 = vld [vmem:[%s43 + $0x358] sm:$0xff]
  %v1508 = vld [vmem:[%s43 + $0x360] sm:$0xff]
  %v1509 = vld [vmem:[%s43 + $0x368] sm:$0xff]
  %v1510 = vld [vmem:[%s43 + $0x370] sm:$0xff]
  %v1511 = vld [vmem:[%s43 + $0x378] sm:$0xff]
  %v1512 = vld [vmem:[%s43 + $0x380] sm:$0xff]
  %v1513 = vld [vmem:[%s43 + $0x388] sm:$0xff]
  %v1514 = vld [vmem:[%s43 + $0x390] sm:$0xff]
  %v1515 = vld [vmem:[%s43 + $0x398] sm:$0xff]
  %v1516 = vld [vmem:[%s43 + $0x3a0] sm:$0xff]
  %v1517 = vld [vmem:[%s43 + $0x3a8] sm:$0xff]
  %v1518 = vld [vmem:[%s43 + $0x3b0] sm:$0xff]
  %v1519 = vld [vmem:[%s43 + $0x3b8] sm:$0xff]
  %v1520 = vld [vmem:[%s43 + $0x3c0] sm:$0xff]
  %v1521 = vld [vmem:[%s43 + $0x3c8] sm:$0xff]
  %v1522 = vld [vmem:[%s43 + $0x3d0] sm:$0xff]
  %v1523 = vld [vmem:[%s43 + $0x3d8] sm:$0xff]
  %v1524 = vld [vmem:[%s43 + $0x3e0] sm:$0xff]
  %v1525 = vld [vmem:[%s43 + $0x3e8] sm:$0xff]
  %v1526 = vld [vmem:[%s43 + $0x3f0] sm:$0xff]
  %v1527 = vld [vmem:[%s43 + $0x3f8] sm:$0xff]
  %v1528 = vld [vmem:[%s43 + $0x400] sm:$0xff]
  %v1529 = vld [vmem:[%s43 + $0x408] sm:$0xf]
  %v1530 = vld [vmem:[%s45] sm:$0x1]
  %v1532 = vlaneseq
  %v1533 = vshrl.u32 %v1532, 7
  %v1534 = vsub.s32 0, %v1533
  %v1535 = vrot.slane %v1530, %v1534
  %vm1537 = vcmask 97280
  %v1539 = vsel %vm1537, %v1399, 0
  %vm1541 = vcmask 1043456
  %v1543 = vsel %vm1541, %v1529, 0
  %1545 = vmatprep.subr.mxu0 0.0
  %1546 = vmatpush1.msra.mxu0 %v1415
  %1547 = vmatprep.subr.mxu0 0.0
  %1548 = vmatpush1.msra.mxu0 %v1414
  %1549 = vmatprep.subr.mxu0 0.0
  %1550 = vmatpush1.msra.mxu0 %v1413
  %1551 = vmatprep.subr.mxu0 0.0
  %1552 = vmatpush1.msra.mxu0 %v1412
  %1553 = vmatprep.subr.mxu0 0.0
  %1554 = vmatpush1.msra.mxu0 %v1411
  %1555 = vmatprep.subr.mxu0 0.0
  %1556 = vmatpush1.msra.mxu0 %v1410
  %1557 = vmatprep.subr.mxu0 0.0
  %1558 = vmatpush1.msra.mxu0 %v1409
  %1559 = vmatprep.subr.mxu0 0.0
  %1560 = vmatpush1.msra.mxu0 %v1408
  %1561 = vmatprep.subr.mxu0 0.0
  %1562 = vmatpush1.msra.mxu0 %v1407
  %1563 = vmatprep.subr.mxu0 0.0
  %1564 = vmatpush1.msra.mxu0 %v1406
  %1565 = vmatprep.subr.mxu0 0.0
  %1566 = vmatpush1.msra.mxu0 %v1405
  %1567 = vmatprep.subr.mxu0 0.0
  %1568 = vmatpush1.msra.mxu0 %v1404
  %1569 = vmatprep.subr.mxu0 0.0
  %1570 = vmatpush1.msra.mxu0 %v1403
  %1571 = vmatprep.subr.mxu0 0.0
  %1572 = vmatpush1.msra.mxu0 %v1402
  %1573 = vmatprep.subr.mxu0 0.0
  %1574 = vmatpush1.msra.mxu0 %v1401
  %1575 = vmatprep.subr.mxu0 0.0
  %1576 = vmatpush1.msra.mxu0 %v1400
  %1577 = vmatprep.subr.mxu0 0.0
  %1578 = vmatpush2.msra.mxu0 %v1431
  %1579 = vmatprep.subr.mxu0 0.0
  %1580 = vmatpush2.msra.mxu0 %v1430
  %1581 = vmatprep.subr.mxu0 0.0
  %1582 = vmatpush2.msra.mxu0 %v1429
  %1583 = vmatprep.subr.mxu0 0.0
  %1584 = vmatpush2.msra.mxu0 %v1428
  %1585 = vmatprep.subr.mxu0 0.0
  %1586 = vmatpush2.msra.mxu0 %v1427
  %1587 = vmatprep.subr.mxu0 0.0
  %1588 = vmatpush2.msra.mxu0 %v1426
  %1589 = vmatprep.subr.mxu0 0.0
  %1590 = vmatpush2.msra.mxu0 %v1425
  %1591 = vmatprep.subr.mxu0 0.0
  %1592 = vmatpush2.msra.mxu0 %v1424
  %1593 = vmatprep.subr.mxu0 0.0
  %1594 = vmatpush2.msra.mxu0 %v1423
  %1595 = vmatprep.subr.mxu0 0.0
  %1596 = vmatpush2.msra.mxu0 %v1422
  %1597 = vmatprep.subr.mxu0 0.0
  %1598 = vmatpush2.msra.mxu0 %v1421
  %1599 = vmatprep.subr.mxu0 0.0
  %1600 = vmatpush2.msra.mxu0 %v1420
  %1601 = vmatprep.subr.mxu0 0.0
  %1602 = vmatpush2.msra.mxu0 %v1419
  %1603 = vmatprep.subr.mxu0 0.0
  %1604 = vmatpush2.msra.mxu0 %v1418
  %1605 = vmatprep.subr.mxu0 0.0
  %1606 = vmatpush2.msra.mxu0 %v1417
  %1607 = vmatprep.subr.mxu0 0.0
  %1608 = vmatpush2.msra.mxu0 %v1416
  %1609 = vmatprep.mubr.f32.mxu0 %v1392
  %1610 = vmatmul.mubr.f32.gmra.mxu0 %v1391
  %v1611 = vpop.f32.mrf.mxu0
  %v1612 = vadd.f32 %v1535, %v1611
  %v1613 = vpop.f32.mrf.mxu0
  %1614 = vdwg.mxu0
  %1615 = vmatprep.subr.mxu0 0.0
  %1616 = vmatpush1.msra.mxu0 %v1447
  %1617 = vmatprep.subr.mxu0 0.0
  %1618 = vmatpush1.msra.mxu0 %v1446
  %1619 = vmatprep.subr.mxu0 0.0
  %1620 = vmatpush1.msra.mxu0 %v1445
  %1621 = vmatprep.subr.mxu0 0.0
  %1622 = vmatpush1.msra.mxu0 %v1444
  %1623 = vmatprep.subr.mxu0 0.0
  %1624 = vmatpush1.msra.mxu0 %v1443
  %1625 = vmatprep.subr.mxu0 0.0
  %1626 = vmatpush1.msra.mxu0 %v1442
  %1627 = vmatprep.subr.mxu0 0.0
  %1628 = vmatpush1.msra.mxu0 %v1441
  %1629 = vmatprep.subr.mxu0 0.0
  %1630 = vmatpush1.msra.mxu0 %v1440
  %1631 = vmatprep.subr.mxu0 0.0
  %1632 = vmatpush1.msra.mxu0 %v1439
  %1633 = vmatprep.subr.mxu0 0.0
  %1634 = vmatpush1.msra.mxu0 %v1438
  %1635 = vmatprep.subr.mxu0 0.0
  %1636 = vmatpush1.msra.mxu0 %v1437
  %1637 = vmatprep.subr.mxu0 0.0
  %1638 = vmatpush1.msra.mxu0 %v1436
  %1639 = vmatprep.subr.mxu0 0.0
  %1640 = vmatpush1.msra.mxu0 %v1435
  %1641 = vmatprep.subr.mxu0 0.0
  %1642 = vmatpush1.msra.mxu0 %v1434
  %1643 = vmatprep.subr.mxu0 0.0
  %1644 = vmatpush1.msra.mxu0 %v1433
  %1645 = vmatprep.subr.mxu0 0.0
  %1646 = vmatpush1.msra.mxu0 %v1432
  %1647 = vmatprep.subr.mxu0 0.0
  %1648 = vmatpush2.msra.mxu0 %v1463
  %1649 = vmatprep.subr.mxu0 0.0
  %1650 = vmatpush2.msra.mxu0 %v1462
  %1651 = vmatprep.subr.mxu0 0.0
  %1652 = vmatpush2.msra.mxu0 %v1461
  %1653 = vmatprep.subr.mxu0 0.0
  %1654 = vmatpush2.msra.mxu0 %v1460
  %1655 = vmatprep.subr.mxu0 0.0
  %1656 = vmatpush2.msra.mxu0 %v1459
  %1657 = vmatprep.subr.mxu0 0.0
  %1658 = vmatpush2.msra.mxu0 %v1458
  %1659 = vmatprep.subr.mxu0 0.0
  %1660 = vmatpush2.msra.mxu0 %v1457
  %1661 = vmatprep.subr.mxu0 0.0
  %1662 = vmatpush2.msra.mxu0 %v1456
  %1663 = vmatprep.subr.mxu0 0.0
  %1664 = vmatpush2.msra.mxu0 %v1455
  %1665 = vmatprep.subr.mxu0 0.0
  %1666 = vmatpush2.msra.mxu0 %v1454
  %1667 = vmatprep.subr.mxu0 0.0
  %1668 = vmatpush2.msra.mxu0 %v1453
  %1669 = vmatprep.subr.mxu0 0.0
  %1670 = vmatpush2.msra.mxu0 %v1452
  %1671 = vmatprep.subr.mxu0 0.0
  %1672 = vmatpush2.msra.mxu0 %v1451
  %1673 = vmatprep.subr.mxu0 0.0
  %1674 = vmatpush2.msra.mxu0 %v1450
  %1675 = vmatprep.subr.mxu0 0.0
  %1676 = vmatpush2.msra.mxu0 %v1449
  %1677 = vmatprep.subr.mxu0 0.0
  %1678 = vmatpush2.msra.mxu0 %v1448
  %1679 = vmatprep.mubr.f32.mxu0 %v1394
  %1680 = vmatmul.mubr.f32.gmra.mxu0 %v1393
  %v1681 = vpop.f32.mrf.mxu0
  %v1682 = vadd.f32 %v1612, %v1681
  %v1683 = vpop.f32.mrf.mxu0
  %1684 = vdwg.mxu0
  %1685 = vmatprep.subr.mxu0 0.0
  %1686 = vmatpush1.msra.mxu0 %v1479
  %1687 = vmatprep.subr.mxu0 0.0
  %1688 = vmatpush1.msra.mxu0 %v1478
  %1689 = vmatprep.subr.mxu0 0.0
  %1690 = vmatpush1.msra.mxu0 %v1477
  %1691 = vmatprep.subr.mxu0 0.0
  %1692 = vmatpush1.msra.mxu0 %v1476
  %1693 = vmatprep.subr.mxu0 0.0
  %1694 = vmatpush1.msra.mxu0 %v1475
  %1695 = vmatprep.subr.mxu0 0.0
  %1696 = vmatpush1.msra.mxu0 %v1474
  %1697 = vmatprep.subr.mxu0 0.0
  %1698 = vmatpush1.msra.mxu0 %v1473
  %1699 = vmatprep.subr.mxu0 0.0
  %1700 = vmatpush1.msra.mxu0 %v1472
  %1701 = vmatprep.subr.mxu0 0.0
  %1702 = vmatpush1.msra.mxu0 %v1471
  %1703 = vmatprep.subr.mxu0 0.0
  %1704 = vmatpush1.msra.mxu0 %v1470
  %1705 = vmatprep.subr.mxu0 0.0
  %1706 = vmatpush1.msra.mxu0 %v1469
  %1707 = vmatprep.subr.mxu0 0.0
  %1708 = vmatpush1.msra.mxu0 %v1468
  %1709 = vmatprep.subr.mxu0 0.0
  %1710 = vmatpush1.msra.mxu0 %v1467
  %1711 = vmatprep.subr.mxu0 0.0
  %1712 = vmatpush1.msra.mxu0 %v1466
  %1713 = vmatprep.subr.mxu0 0.0
  %1714 = vmatpush1.msra.mxu0 %v1465
  %1715 = vmatprep.subr.mxu0 0.0
  %1716 = vmatpush1.msra.mxu0 %v1464
  %1717 = vmatprep.subr.mxu0 0.0
  %1718 = vmatpush2.msra.mxu0 %v1495
  %1719 = vmatprep.subr.mxu0 0.0
  %1720 = vmatpush2.msra.mxu0 %v1494
  %1721 = vmatprep.subr.mxu0 0.0
  %1722 = vmatpush2.msra.mxu0 %v1493
  %1723 = vmatprep.subr.mxu0 0.0
  %1724 = vmatpush2.msra.mxu0 %v1492
  %1725 = vmatprep.subr.mxu0 0.0
  %1726 = vmatpush2.msra.mxu0 %v1491
  %1727 = vmatprep.subr.mxu0 0.0
  %1728 = vmatpush2.msra.mxu0 %v1490
  %1729 = vmatprep.subr.mxu0 0.0
  %1730 = vmatpush2.msra.mxu0 %v1489
  %1731 = vmatprep.subr.mxu0 0.0
  %1732 = vmatpush2.msra.mxu0 %v1488
  %1733 = vmatprep.subr.mxu0 0.0
  %1734 = vmatpush2.msra.mxu0 %v1487
  %1735 = vmatprep.subr.mxu0 0.0
  %1736 = vmatpush2.msra.mxu0 %v1486
  %1737 = vmatprep.subr.mxu0 0.0
  %1738 = vmatpush2.msra.mxu0 %v1485
  %1739 = vmatprep.subr.mxu0 0.0
  %1740 = vmatpush2.msra.mxu0 %v1484
  %1741 = vmatprep.subr.mxu0 0.0
  %1742 = vmatpush2.msra.mxu0 %v1483
  %1743 = vmatprep.subr.mxu0 0.0
  %1744 = vmatpush2.msra.mxu0 %v1482
  %1745 = vmatprep.subr.mxu0 0.0
  %1746 = vmatpush2.msra.mxu0 %v1481
  %1747 = vmatprep.subr.mxu0 0.0
  %1748 = vmatpush2.msra.mxu0 %v1480
  %1749 = vmatprep.mubr.f32.mxu0 %v1396
  %1750 = vmatmul.mubr.f32.gmra.mxu0 %v1395
  %v1751 = vpop.f32.mrf.mxu0
  %v1752 = vadd.f32 %v1682, %v1751
  %v1753 = vpop.f32.mrf.mxu0
  %1754 = vdwg.mxu0
  %1755 = vmatprep.subr.mxu0 0.0
  %1756 = vmatpush1.msra.mxu0 %v1511
  %1757 = vmatprep.subr.mxu0 0.0
  %1758 = vmatpush1.msra.mxu0 %v1510
  %1759 = vmatprep.subr.mxu0 0.0
  %1760 = vmatpush1.msra.mxu0 %v1509
  %1761 = vmatprep.subr.mxu0 0.0
  %1762 = vmatpush1.msra.mxu0 %v1508
  %1763 = vmatprep.subr.mxu0 0.0
  %1764 = vmatpush1.msra.mxu0 %v1507
  %1765 = vmatprep.subr.mxu0 0.0
  %1766 = vmatpush1.msra.mxu0 %v1506
  %1767 = vmatprep.subr.mxu0 0.0
  %1768 = vmatpush1.msra.mxu0 %v1505
  %1769 = vmatprep.subr.mxu0 0.0
  %1770 = vmatpush1.msra.mxu0 %v1504
  %1771 = vmatprep.subr.mxu0 0.0
  %1772 = vmatpush1.msra.mxu0 %v1503
  %1773 = vmatprep.subr.mxu0 0.0
  %1774 = vmatpush1.msra.mxu0 %v1502
  %1775 = vmatprep.subr.mxu0 0.0
  %1776 = vmatpush1.msra.mxu0 %v1501
  %1777 = vmatprep.subr.mxu0 0.0
  %1778 = vmatpush1.msra.mxu0 %v1500
  %1779 = vmatprep.subr.mxu0 0.0
  %1780 = vmatpush1.msra.mxu0 %v1499
  %1781 = vmatprep.subr.mxu0 0.0
  %1782 = vmatpush1.msra.mxu0 %v1498
  %1783 = vmatprep.subr.mxu0 0.0
  %1784 = vmatpush1.msra.mxu0 %v1497
  %1785 = vmatprep.subr.mxu0 0.0
  %1786 = vmatpush1.msra.mxu0 %v1496
  %1787 = vmatprep.subr.mxu0 0.0
  %1788 = vmatpush2.msra.mxu0 %v1527
  %1789 = vmatprep.subr.mxu0 0.0
  %1790 = vmatpush2.msra.mxu0 %v1526
  %1791 = vmatprep.subr.mxu0 0.0
  %1792 = vmatpush2.msra.mxu0 %v1525
  %1793 = vmatprep.subr.mxu0 0.0
  %1794 = vmatpush2.msra.mxu0 %v1524
  %1795 = vmatprep.subr.mxu0 0.0
  %1796 = vmatpush2.msra.mxu0 %v1523
  %1797 = vmatprep.subr.mxu0 0.0
  %1798 = vmatpush2.msra.mxu0 %v1522
  %1799 = vmatprep.subr.mxu0 0.0
  %1800 = vmatpush2.msra.mxu0 %v1521
  %1801 = vmatprep.subr.mxu0 0.0
  %1802 = vmatpush2.msra.mxu0 %v1520
  %1803 = vmatprep.subr.mxu0 0.0
  %1804 = vmatpush2.msra.mxu0 %v1519
  %1805 = vmatprep.subr.mxu0 0.0
  %1806 = vmatpush2.msra.mxu0 %v1518
  %1807 = vmatprep.subr.mxu0 0.0
  %1808 = vmatpush2.msra.mxu0 %v1517
  %1809 = vmatprep.subr.mxu0 0.0
  %1810 = vmatpush2.msra.mxu0 %v1516
  %1811 = vmatprep.subr.mxu0 0.0
  %1812 = vmatpush2.msra.mxu0 %v1515
  %1813 = vmatprep.subr.mxu0 0.0
  %1814 = vmatpush2.msra.mxu0 %v1514
  %1815 = vmatprep.subr.mxu0 0.0
  %1816 = vmatpush2.msra.mxu0 %v1513
  %1817 = vmatprep.subr.mxu0 0.0
  %1818 = vmatpush2.msra.mxu0 %v1512
  %1819 = vmatprep.mubr.f32.mxu0 %v1398
  %1820 = vmatmul.mubr.f32.gmra.mxu0 %v1397
  %v1821 = vpop.f32.mrf.mxu0
  %v1822 = vadd.f32 %v1752, %v1821
  %v1823 = vpop.f32.mrf.mxu0
  %1824 = vdwg.mxu0
  %1825 = vmatprep.subr.mxu0 0.0
  %1826 = vmatpush1.msra.mxu0 0.0
  %1827 = vmatprep.subr.mxu0 0.0
  %1828 = vmatpush1.msra.mxu0 0.0
  %1829 = vmatprep.subr.mxu0 0.0
  %1830 = vmatpush1.msra.mxu0 0.0
  %1831 = vmatprep.subr.mxu0 0.0
  %1832 = vmatpush1.msra.mxu0 0.0
  %1833 = vmatprep.subr.mxu0 0.0
  %1834 = vmatpush1.msra.mxu0 0.0
  %1835 = vmatprep.subr.mxu0 0.0
  %1836 = vmatpush1.msra.mxu0 0.0
  %1837 = vmatprep.subr.mxu0 0.0
  %1838 = vmatpush1.msra.mxu0 0.0
  %1839 = vmatprep.subr.mxu0 0.0
  %1840 = vmatpush1.msra.mxu0 0.0
  %1841 = vmatprep.subr.mxu0 0.0
  %1842 = vmatpush1.msra.mxu0 0.0
  %1843 = vmatprep.subr.mxu0 0.0
  %1844 = vmatpush1.msra.mxu0 0.0
  %1845 = vmatprep.subr.mxu0 0.0
  %1846 = vmatpush1.msra.mxu0 0.0
  %1847 = vmatprep.subr.mxu0 0.0
  %1848 = vmatpush1.msra.mxu0 0.0
  %1849 = vmatprep.subr.mxu0 0.0
  %1850 = vmatpush1.msra.mxu0 0.0
  %1851 = vmatprep.subr.mxu0 0.0
  %1852 = vmatpush1.msra.mxu0 0.0
  %1853 = vmatprep.subr.mxu0 0.0
  %1854 = vmatpush1.msra.mxu0 %v1543
  %1855 = vmatprep.subr.mxu0 0.0
  %1856 = vmatpush1.msra.mxu0 %v1528
  %1857 = vmatprep.subr.mxu0 0.0
  %1858 = vmatpush2.msra.mxu0 0.0
  %1859 = vmatprep.subr.mxu0 0.0
  %1860 = vmatpush2.msra.mxu0 0.0
  %1861 = vmatprep.subr.mxu0 0.0
  %1862 = vmatpush2.msra.mxu0 0.0
  %1863 = vmatprep.subr.mxu0 0.0
  %1864 = vmatpush2.msra.mxu0 0.0
  %1865 = vmatprep.subr.mxu0 0.0
  %1866 = vmatpush2.msra.mxu0 0.0
  %1867 = vmatprep.subr.mxu0 0.0
  %1868 = vmatpush2.msra.mxu0 0.0
  %1869 = vmatprep.subr.mxu0 0.0
  %1870 = vmatpush2.msra.mxu0 0.0
  %1871 = vmatprep.subr.mxu0 0.0
  %1872 = vmatpush2.msra.mxu0 0.0
  %1873 = vmatprep.subr.mxu0 0.0
  %1874 = vmatpush2.msra.mxu0 0.0
  %1875 = vmatprep.subr.mxu0 0.0
  %1876 = vmatpush2.msra.mxu0 0.0
  %1877 = vmatprep.subr.mxu0 0.0
  %1878 = vmatpush2.msra.mxu0 0.0
  %1879 = vmatprep.subr.mxu0 0.0
  %1880 = vmatpush2.msra.mxu0 0.0
  %1881 = vmatprep.subr.mxu0 0.0
  %1882 = vmatpush2.msra.mxu0 0.0
  %1883 = vmatprep.subr.mxu0 0.0
  %1884 = vmatpush2.msra.mxu0 0.0
  %1885 = vmatprep.subr.mxu0 0.0
  %1886 = vmatpush2.msra.mxu0 0.0
  %1887 = vmatprep.subr.mxu0 0.0
  %1888 = vmatpush2.msra.mxu0 0.0
  %1889 = vmatprep.mubr.f32.mxu0 0.0
  %1890 = vmatmul.mubr.f32.gmra.mxu0 %v1539
  %v1891 = vpop.f32.mrf.mxu0
  %v1892 = vadd.f32 %v1822, %v1891
  %v1893 = vpop.f32.mrf.mxu0
  %1894 = vdwg.mxu0
  %v1895 = vld [vmem:[%s35] sm:$0xff]
  %v1896 = vld [vmem:[%s35 + $0x8] sm:$0xff]
  %v1897 = vld [vmem:[%s35 + $0x10] sm:$0xff]
  %v1898 = vld [vmem:[%s35 + $0x18] sm:$0xff]
  %v1899 = vld [vmem:[%s35 + $0x20] sm:$0xff]
  %v1900 = vld [vmem:[%s35 + $0x28] sm:$0xff]
  %v1901 = vld [vmem:[%s35 + $0x30] sm:$0xff]
  %v1902 = vld [vmem:[%s35 + $0x38] sm:$0xff]
  %v1903 = vld [vmem:[%s35 + $0x40] sm:$0xff]
  %v1904 = vld [vmem:[%s35 + $0x48] sm:$0xff]
  %v1905 = vld [vmem:[%s35 + $0x50] sm:$0xff]
  %v1906 = vld [vmem:[%s35 + $0x58] sm:$0xff]
  %v1907 = vld [vmem:[%s37] sm:$0x1]
  %v1909 = vlaneseq
  %v1910 = vshrl.u32 %v1909, 7
  %v1911 = vsub.s32 0, %v1910
  %v1912 = vrot.slane %v1907, %v1911
  %vm1914 = vcmask 785408
  %v1916 = vsel %vm1914, %v1892, 0
  %1918 = vmatprep.subr.mxu0 0.0
  %1919 = vmatpush1.msra.mxu0 0.0
  %1920 = vmatprep.subr.mxu0 0.0
  %1921 = vmatpush1.msra.mxu0 0.0
  %1922 = vmatprep.subr.mxu0 0.0
  %1923 = vmatpush1.msra.mxu0 0.0
  %1924 = vmatprep.subr.mxu0 0.0
  %1925 = vmatpush1.msra.mxu0 0.0
  %1926 = vmatprep.subr.mxu0 0.0
  %1927 = vmatpush1.msra.mxu0 %v1906
  %1928 = vmatprep.subr.mxu0 0.0
  %1929 = vmatpush1.msra.mxu0 %v1905
  %1930 = vmatprep.subr.mxu0 0.0
  %1931 = vmatpush1.msra.mxu0 %v1904
  %1932 = vmatprep.subr.mxu0 0.0
  %1933 = vmatpush1.msra.mxu0 %v1903
  %1934 = vmatprep.subr.mxu0 0.0
  %1935 = vmatpush1.msra.mxu0 %v1902
  %1936 = vmatprep.subr.mxu0 0.0
  %1937 = vmatpush1.msra.mxu0 %v1901
  %1938 = vmatprep.subr.mxu0 0.0
  %1939 = vmatpush1.msra.mxu0 %v1900
  %1940 = vmatprep.subr.mxu0 0.0
  %1941 = vmatpush1.msra.mxu0 %v1899
  %1942 = vmatprep.subr.mxu0 0.0
  %1943 = vmatpush1.msra.mxu0 %v1898
  %1944 = vmatprep.subr.mxu0 0.0
  %1945 = vmatpush1.msra.mxu0 %v1897
  %1946 = vmatprep.subr.mxu0 0.0
  %1947 = vmatpush1.msra.mxu0 %v1896
  %1948 = vmatprep.subr.mxu0 0.0
  %1949 = vmatpush1.msra.mxu0 %v1895
  %1950 = vmatprep.subr.mxu0 0.0
  %1951 = vmatpush2.msra.mxu0 0.0
  %1952 = vmatprep.subr.mxu0 0.0
  %1953 = vmatpush2.msra.mxu0 0.0
  %1954 = vmatprep.subr.mxu0 0.0
  %1955 = vmatpush2.msra.mxu0 0.0
  %1956 = vmatprep.subr.mxu0 0.0
  %1957 = vmatpush2.msra.mxu0 0.0
  %1958 = vmatprep.subr.mxu0 0.0
  %1959 = vmatpush2.msra.mxu0 0.0
  %1960 = vmatprep.subr.mxu0 0.0
  %1961 = vmatpush2.msra.mxu0 0.0
  %1962 = vmatprep.subr.mxu0 0.0
  %1963 = vmatpush2.msra.mxu0 0.0
  %1964 = vmatprep.subr.mxu0 0.0
  %1965 = vmatpush2.msra.mxu0 0.0
  %1966 = vmatprep.subr.mxu0 0.0
  %1967 = vmatpush2.msra.mxu0 0.0
  %1968 = vmatprep.subr.mxu0 0.0
  %1969 = vmatpush2.msra.mxu0 0.0
  %1970 = vmatprep.subr.mxu0 0.0
  %1971 = vmatpush2.msra.mxu0 0.0
  %1972 = vmatprep.subr.mxu0 0.0
  %1973 = vmatpush2.msra.mxu0 0.0
  %1974 = vmatprep.subr.mxu0 0.0
  %1975 = vmatpush2.msra.mxu0 0.0
  %1976 = vmatprep.subr.mxu0 0.0
  %1977 = vmatpush2.msra.mxu0 0.0
  %1978 = vmatprep.subr.mxu0 0.0
  %1979 = vmatpush2.msra.mxu0 0.0
  %1980 = vmatprep.subr.mxu0 0.0
  %1981 = vmatpush2.msra.mxu0 0.0
  %1982 = vmatprep.mubr.f32.mxu0 0.0
  %1983 = vmatmul.mubr.f32.gmra.mxu0 %v1916
  %v1984 = vpop.f32.mrf.mxu0
  %v1985 = vadd.f32 %v1912, %v1984
  %v1986 = vpop.f32.mrf.mxu0
  %1987 = vdwg.mxu0
  %v1988 = vmax.f32 %v1985, 0.0
  %v1989 = vadd.f32 %v1988, %v1892
  %v1990 = vld [vmem:[%s39] sm:$0xff]
  %v1991 = vld [vmem:[%s39 + $0x8] sm:$0xff]
  %v1992 = vld [vmem:[%s39 + $0x10] sm:$0xff]
  %v1993 = vld [vmem:[%s39 + $0x18] sm:$0xff]
  %v1994 = vld [vmem:[%s39 + $0x20] sm:$0xff]
  %v1995 = vld [vmem:[%s39 + $0x28] sm:$0xff]
  %v1996 = vld [vmem:[%s39 + $0x30] sm:$0xff]
  %v1997 = vld [vmem:[%s39 + $0x38] sm:$0xff]
  %v1998 = vld [vmem:[%s39 + $0x40] sm:$0xff]
  %v1999 = vld [vmem:[%s39 + $0x48] sm:$0xff]
  %v2000 = vld [vmem:[%s39 + $0x50] sm:$0xff]
  %v2001 = vld [vmem:[%s39 + $0x58] sm:$0xff]
  %v2002 = vld [vmem:[%s41] sm:$0x1]
  %v2004 = vlaneseq
  %v2005 = vshrl.u32 %v2004, 7
  %v2006 = vsub.s32 0, %v2005
  %v2007 = vrot.slane %v2002, %v2006
  %v2010 = vsel %vm1914, %v1989, 0
  %2012 = vmatprep.subr.mxu0 0.0
  %2013 = vmatpush1.msra.mxu0 0.0
  %2014 = vmatprep.subr.mxu0 0.0
  %2015 = vmatpush1.msra.mxu0 0.0
  %2016 = vmatprep.subr.mxu0 0.0
  %2017 = vmatpush1.msra.mxu0 0.0
  %2018 = vmatprep.subr.mxu0 0.0
  %2019 = vmatpush1.msra.mxu0 0.0
  %2020 = vmatprep.subr.mxu0 0.0
  %2021 = vmatpush1.msra.mxu0 %v2001
  %2022 = vmatprep.subr.mxu0 0.0
  %2023 = vmatpush1.msra.mxu0 %v2000
  %2024 = vmatprep.subr.mxu0 0.0
  %2025 = vmatpush1.msra.mxu0 %v1999
  %2026 = vmatprep.subr.mxu0 0.0
  %2027 = vmatpush1.msra.mxu0 %v1998
  %2028 = vmatprep.subr.mxu0 0.0
  %2029 = vmatpush1.msra.mxu0 %v1997
  %2030 = vmatprep.subr.mxu0 0.0
  %2031 = vmatpush1.msra.mxu0 %v1996
  %2032 = vmatprep.subr.mxu0 0.0
  %2033 = vmatpush1.msra.mxu0 %v1995
  %2034 = vmatprep.subr.mxu0 0.0
  %2035 = vmatpush1.msra.mxu0 %v1994
  %2036 = vmatprep.subr.mxu0 0.0
  %2037 = vmatpush1.msra.mxu0 %v1993
  %2038 = vmatprep.subr.mxu0 0.0
  %2039 = vmatpush1.msra.mxu0 %v1992
  %2040 = vmatprep.subr.mxu0 0.0
  %2041 = vmatpush1.msra.mxu0 %v1991
  %2042 = vmatprep.subr.mxu0 0.0
  %2043 = vmatpush1.msra.mxu0 %v1990
  %2044 = vmatprep.subr.mxu0 0.0
  %2045 = vmatpush2.msra.mxu0 0.0
  %2046 = vmatprep.subr.mxu0 0.0
  %2047 = vmatpush2.msra.mxu0 0.0
  %2048 = vmatprep.subr.mxu0 0.0
  %2049 = vmatpush2.msra.mxu0 0.0
  %2050 = vmatprep.subr.mxu0 0.0
  %2051 = vmatpush2.msra.mxu0 0.0
  %2052 = vmatprep.subr.mxu0 0.0
  %2053 = vmatpush2.msra.mxu0 0.0
  %2054 = vmatprep.subr.mxu0 0.0
  %2055 = vmatpush2.msra.mxu0 0.0
  %2056 = vmatprep.subr.mxu0 0.0
  %2057 = vmatpush2.msra.mxu0 0.0
  %2058 = vmatprep.subr.mxu0 0.0
  %2059 = vmatpush2.msra.mxu0 0.0
  %2060 = vmatprep.subr.mxu0 0.0
  %2061 = vmatpush2.msra.mxu0 0.0
  %2062 = vmatprep.subr.mxu0 0.0
  %2063 = vmatpush2.msra.mxu0 0.0
  %2064 = vmatprep.subr.mxu0 0.0
  %2065 = vmatpush2.msra.mxu0 0.0
  %2066 = vmatprep.subr.mxu0 0.0
  %2067 = vmatpush2.msra.mxu0 0.0
  %2068 = vmatprep.subr.mxu0 0.0
  %2069 = vmatpush2.msra.mxu0 0.0
  %2070 = vmatprep.subr.mxu0 0.0
  %2071 = vmatpush2.msra.mxu0 0.0
  %2072 = vmatprep.subr.mxu0 0.0
  %2073 = vmatpush2.msra.mxu0 0.0
  %2074 = vmatprep.subr.mxu0 0.0
  %2075 = vmatpush2.msra.mxu0 0.0
  %2076 = vmatprep.mubr.f32.mxu0 0.0
  %2077 = vmatmul.mubr.f32.gmra.mxu0 %v2010
  %v2078 = vpop.f32.mrf.mxu0
  %v2079 = vadd.f32 %v2007, %v2078
  %v2080 = vpop.f32.mrf.mxu0
  %2081 = vdwg.mxu0
  %v2082 = vmax.f32 %v2079, 0.0
  %v2083 = vadd.f32 %v2082, %v1989
  %v2084 = vld [vmem:[%s55] sm:$0xff]
  %v2085 = vld [vmem:[%s55 + $0x8] sm:$0xff]
  %v2086 = vld [vmem:[%s55 + $0x10] sm:$0xff]
  %v2087 = vld [vmem:[%s55 + $0x18] sm:$0xff]
  %v2088 = vld [vmem:[%s55 + $0x20] sm:$0xff]
  %v2089 = vld [vmem:[%s55 + $0x28] sm:$0xff]
  %v2090 = vld [vmem:[%s55 + $0x30] sm:$0xff]
  %v2091 = vld [vmem:[%s55 + $0x38] sm:$0xff]
  %v2092 = vld [vmem:[%s55 + $0x40] sm:$0xff]
  %v2093 = vld [vmem:[%s55 + $0x48] sm:$0xff]
  %v2094 = vld [vmem:[%s55 + $0x50] sm:$0xff]
  %v2095 = vld [vmem:[%s55 + $0x58] sm:$0xff]
  %v2096 = vld [vmem:[%s57] sm:$0x1]
  %v2098 = vlaneseq
  %v2099 = vshrl.u32 %v2098, 7
  %v2100 = vsub.s32 0, %v2099
  %v2101 = vrot.slane %v2096, %v2100
  %v2104 = vsel %vm1914, %v2083, 0
  %2106 = vmatprep.subr.mxu0 0.0
  %2107 = vmatpush1.msra.mxu0 0.0
  %2108 = vmatprep.subr.mxu0 0.0
  %2109 = vmatpush1.msra.mxu0 0.0
  %2110 = vmatprep.subr.mxu0 0.0
  %2111 = vmatpush1.msra.mxu0 0.0
  %2112 = vmatprep.subr.mxu0 0.0
  %2113 = vmatpush1.msra.mxu0 0.0
  %2114 = vmatprep.subr.mxu0 0.0
  %2115 = vmatpush1.msra.mxu0 %v2095
  %2116 = vmatprep.subr.mxu0 0.0
  %2117 = vmatpush1.msra.mxu0 %v2094
  %2118 = vmatprep.subr.mxu0 0.0
  %2119 = vmatpush1.msra.mxu0 %v2093
  %2120 = vmatprep.subr.mxu0 0.0
  %2121 = vmatpush1.msra.mxu0 %v2092
  %2122 = vmatprep.subr.mxu0 0.0
  %2123 = vmatpush1.msra.mxu0 %v2091
  %2124 = vmatprep.subr.mxu0 0.0
  %2125 = vmatpush1.msra.mxu0 %v2090
  %2126 = vmatprep.subr.mxu0 0.0
  %2127 = vmatpush1.msra.mxu0 %v2089
  %2128 = vmatprep.subr.mxu0 0.0
  %2129 = vmatpush1.msra.mxu0 %v2088
  %2130 = vmatprep.subr.mxu0 0.0
  %2131 = vmatpush1.msra.mxu0 %v2087
  %2132 = vmatprep.subr.mxu0 0.0
  %2133 = vmatpush1.msra.mxu0 %v2086
  %2134 = vmatprep.subr.mxu0 0.0
  %2135 = vmatpush1.msra.mxu0 %v2085
  %2136 = vmatprep.subr.mxu0 0.0
  %2137 = vmatpush1.msra.mxu0 %v2084
  %2138 = vmatprep.subr.mxu0 0.0
  %2139 = vmatpush2.msra.mxu0 0.0
  %2140 = vmatprep.subr.mxu0 0.0
  %2141 = vmatpush2.msra.mxu0 0.0
  %2142 = vmatprep.subr.mxu0 0.0
  %2143 = vmatpush2.msra.mxu0 0.0
  %2144 = vmatprep.subr.mxu0 0.0
  %2145 = vmatpush2.msra.mxu0 0.0
  %2146 = vmatprep.subr.mxu0 0.0
  %2147 = vmatpush2.msra.mxu0 0.0
  %2148 = vmatprep.subr.mxu0 0.0
  %2149 = vmatpush2.msra.mxu0 0.0
  %2150 = vmatprep.subr.mxu0 0.0
  %2151 = vmatpush2.msra.mxu0 0.0
  %2152 = vmatprep.subr.mxu0 0.0
  %2153 = vmatpush2.msra.mxu0 0.0
  %2154 = vmatprep.subr.mxu0 0.0
  %2155 = vmatpush2.msra.mxu0 0.0
  %2156 = vmatprep.subr.mxu0 0.0
  %2157 = vmatpush2.msra.mxu0 0.0
  %2158 = vmatprep.subr.mxu0 0.0
  %2159 = vmatpush2.msra.mxu0 0.0
  %2160 = vmatprep.subr.mxu0 0.0
  %2161 = vmatpush2.msra.mxu0 0.0
  %2162 = vmatprep.subr.mxu0 0.0
  %2163 = vmatpush2.msra.mxu0 0.0
  %2164 = vmatprep.subr.mxu0 0.0
  %2165 = vmatpush2.msra.mxu0 0.0
  %2166 = vmatprep.subr.mxu0 0.0
  %2167 = vmatpush2.msra.mxu0 0.0
  %2168 = vmatprep.subr.mxu0 0.0
  %2169 = vmatpush2.msra.mxu0 0.0
  %2170 = vmatprep.mubr.f32.mxu0 0.0
  %2171 = vmatmul.mubr.f32.gmra.mxu0 %v2104
  %v2172 = vpop.f32.mrf.mxu0
  %v2173 = vadd.f32 %v2101, %v2172
  %v2174 = vpop.f32.mrf.mxu0
  %2175 = vdwg.mxu0
  %v2176 = vld [vmem:[%s47] sm:$0xff]
  %v2177 = vld [vmem:[%s47 + $0x8] sm:$0xff]
  %v2178 = vld [vmem:[%s47 + $0x10] sm:$0xff]
  %v2179 = vld [vmem:[%s47 + $0x18] sm:$0xff]
  %v2180 = vld [vmem:[%s49] sm:$0x1]
  %v2182 = vlaneseq
  %v2183 = vshrl.u32 %v2182, 7
  %v2184 = vsub.s32 0, %v2183
  %v2185 = vrot.slane %v2180, %v2184
  %v2188 = vsel %vm1317, %v2173, 0
  %2190 = vmatprep.subr.mxu0 0.0
  %2191 = vmatpush1.msra.mxu0 0.0
  %2192 = vmatprep.subr.mxu0 0.0
  %2193 = vmatpush1.msra.mxu0 0.0
  %2194 = vmatprep.subr.mxu0 0.0
  %2195 = vmatpush1.msra.mxu0 0.0
  %2196 = vmatprep.subr.mxu0 0.0
  %2197 = vmatpush1.msra.mxu0 0.0
  %2198 = vmatprep.subr.mxu0 0.0
  %2199 = vmatpush1.msra.mxu0 0.0
  %2200 = vmatprep.subr.mxu0 0.0
  %2201 = vmatpush1.msra.mxu0 0.0
  %2202 = vmatprep.subr.mxu0 0.0
  %2203 = vmatpush1.msra.mxu0 0.0
  %2204 = vmatprep.subr.mxu0 0.0
  %2205 = vmatpush1.msra.mxu0 0.0
  %2206 = vmatprep.subr.mxu0 0.0
  %2207 = vmatpush1.msra.mxu0 0.0
  %2208 = vmatprep.subr.mxu0 0.0
  %2209 = vmatpush1.msra.mxu0 0.0
  %2210 = vmatprep.subr.mxu0 0.0
  %2211 = vmatpush1.msra.mxu0 0.0
  %2212 = vmatprep.subr.mxu0 0.0
  %2213 = vmatpush1.msra.mxu0 0.0
  %2214 = vmatprep.subr.mxu0 0.0
  %2215 = vmatpush1.msra.mxu0 %v2179
  %2216 = vmatprep.subr.mxu0 0.0
  %2217 = vmatpush1.msra.mxu0 %v2178
  %2218 = vmatprep.subr.mxu0 0.0
  %2219 = vmatpush1.msra.mxu0 %v2177
  %2220 = vmatprep.subr.mxu0 0.0
  %2221 = vmatpush1.msra.mxu0 %v2176
  %2222 = vmatprep.subr.mxu0 0.0
  %2223 = vmatpush2.msra.mxu0 0.0
  %2224 = vmatprep.subr.mxu0 0.0
  %2225 = vmatpush2.msra.mxu0 0.0
  %2226 = vmatprep.subr.mxu0 0.0
  %2227 = vmatpush2.msra.mxu0 0.0
  %2228 = vmatprep.subr.mxu0 0.0
  %2229 = vmatpush2.msra.mxu0 0.0
  %2230 = vmatprep.subr.mxu0 0.0
  %2231 = vmatpush2.msra.mxu0 0.0
  %2232 = vmatprep.subr.mxu0 0.0
  %2233 = vmatpush2.msra.mxu0 0.0
  %2234 = vmatprep.subr.mxu0 0.0
  %2235 = vmatpush2.msra.mxu0 0.0
  %2236 = vmatprep.subr.mxu0 0.0
  %2237 = vmatpush2.msra.mxu0 0.0
  %2238 = vmatprep.subr.mxu0 0.0
  %2239 = vmatpush2.msra.mxu0 0.0
  %2240 = vmatprep.subr.mxu0 0.0
  %2241 = vmatpush2.msra.mxu0 0.0
  %2242 = vmatprep.subr.mxu0 0.0
  %2243 = vmatpush2.msra.mxu0 0.0
  %2244 = vmatprep.subr.mxu0 0.0
  %2245 = vmatpush2.msra.mxu0 0.0
  %2246 = vmatprep.subr.mxu0 0.0
  %2247 = vmatpush2.msra.mxu0 0.0
  %2248 = vmatprep.subr.mxu0 0.0
  %2249 = vmatpush2.msra.mxu0 0.0
  %2250 = vmatprep.subr.mxu0 0.0
  %2251 = vmatpush2.msra.mxu0 0.0
  %2252 = vmatprep.subr.mxu0 0.0
  %2253 = vmatpush2.msra.mxu0 0.0
  %2254 = vmatprep.mubr.f32.mxu0 0.0
  %2255 = vmatmul.mubr.f32.gmra.mxu0 %v2188
  %v2256 = vpop.f32.mrf.mxu0
  %v2257 = vadd.f32 %v2185, %v2256
  %v2258 = vpop.f32.mrf.mxu0
  %2259 = vdwg.mxu0
  %v2260 = vmax.f32 %v2257, 0.0
  %v2261 = vadd.f32 %v2260, %v2173
  %v2262 = vld [vmem:[%s51] sm:$0xff]
  %v2263 = vld [vmem:[%s51 + $0x8] sm:$0xff]
  %v2264 = vld [vmem:[%s51 + $0x10] sm:$0xff]
  %v2265 = vld [vmem:[%s51 + $0x18] sm:$0xff]
  %v2266 = vld [vmem:[%s53] sm:$0x1]
  %v2268 = vlaneseq
  %v2269 = vshrl.u32 %v2268, 7
  %v2270 = vsub.s32 0, %v2269
  %v2271 = vrot.slane %v2266, %v2270
  %v2274 = vsel %vm1317, %v2261, 0
  %2276 = vmatprep.subr.mxu0 0.0
  %2277 = vmatpush1.msra.mxu0 0.0
  %2278 = vmatprep.subr.mxu0 0.0
  %2279 = vmatpush1.msra.mxu0 0.0
  %2280 = vmatprep.subr.mxu0 0.0
  %2281 = vmatpush1.msra.mxu0 0.0
  %2282 = vmatprep.subr.mxu0 0.0
  %2283 = vmatpush1.msra.mxu0 0.0
  %2284 = vmatprep.subr.mxu0 0.0
  %2285 = vmatpush1.msra.mxu0 0.0
  %2286 = vmatprep.subr.mxu0 0.0
  %2287 = vmatpush1.msra.mxu0 0.0
  %2288 = vmatprep.subr.mxu0 0.0
  %2289 = vmatpush1.msra.mxu0 0.0
  %2290 = vmatprep.subr.mxu0 0.0
  %2291 = vmatpush1.msra.mxu0 0.0
  %2292 = vmatprep.subr.mxu0 0.0
  %2293 = vmatpush1.msra.mxu0 0.0
  %2294 = vmatprep.subr.mxu0 0.0
  %2295 = vmatpush1.msra.mxu0 0.0
  %2296 = vmatprep.subr.mxu0 0.0
  %2297 = vmatpush1.msra.mxu0 0.0
  %2298 = vmatprep.subr.mxu0 0.0
  %2299 = vmatpush1.msra.mxu0 0.0
  %2300 = vmatprep.subr.mxu0 0.0
  %2301 = vmatpush1.msra.mxu0 %v2265
  %2302 = vmatprep.subr.mxu0 0.0
  %2303 = vmatpush1.msra.mxu0 %v2264
  %2304 = vmatprep.subr.mxu0 0.0
  %2305 = vmatpush1.msra.mxu0 %v2263
  %2306 = vmatprep.subr.mxu0 0.0
  %2307 = vmatpush1.msra.mxu0 %v2262
  %2308 = vmatprep.subr.mxu0 0.0
  %2309 = vmatpush2.msra.mxu0 0.0
  %2310 = vmatprep.subr.mxu0 0.0
  %2311 = vmatpush2.msra.mxu0 0.0
  %2312 = vmatprep.subr.mxu0 0.0
  %2313 = vmatpush2.msra.mxu0 0.0
  %2314 = vmatprep.subr.mxu0 0.0
  %2315 = vmatpush2.msra.mxu0 0.0
  %2316 = vmatprep.subr.mxu0 0.0
  %2317 = vmatpush2.msra.mxu0 0.0
  %2318 = vmatprep.subr.mxu0 0.0
  %2319 = vmatpush2.msra.mxu0 0.0
  %2320 = vmatprep.subr.mxu0 0.0
  %2321 = vmatpush2.msra.mxu0 0.0
  %2322 = vmatprep.subr.mxu0 0.0
  %2323 = vmatpush2.msra.mxu0 0.0
  %2324 = vmatprep.subr.mxu0 0.0
  %2325 = vmatpush2.msra.mxu0 0.0
  %2326 = vmatprep.subr.mxu0 0.0
  %2327 = vmatpush2.msra.mxu0 0.0
  %2328 = vmatprep.subr.mxu0 0.0
  %2329 = vmatpush2.msra.mxu0 0.0
  %2330 = vmatprep.subr.mxu0 0.0
  %2331 = vmatpush2.msra.mxu0 0.0
  %2332 = vmatprep.subr.mxu0 0.0
  %2333 = vmatpush2.msra.mxu0 0.0
  %2334 = vmatprep.subr.mxu0 0.0
  %2335 = vmatpush2.msra.mxu0 0.0
  %2336 = vmatprep.subr.mxu0 0.0
  %2337 = vmatpush2.msra.mxu0 0.0
  %2338 = vmatprep.subr.mxu0 0.0
  %2339 = vmatpush2.msra.mxu0 0.0
  %2340 = vmatprep.mubr.f32.mxu0 0.0
  %2341 = vmatmul.mubr.f32.gmra.mxu0 %v2274
  %v2342 = vpop.f32.mrf.mxu0
  %v2343 = vadd.f32 %v2271, %v2342
  %v2344 = vpop.f32.mrf.mxu0
  %2345 = vdwg.mxu0
  %v2346 = vmax.f32 %v2343, 0.0
  %v2347 = vadd.f32 %v2346, %v2261
  %v2348 = vld [vmem:[%s5] sm:$0xff]
  %vm2349 = vcmask 64512
  %v2351 = vsel %vm2349, %v2348, 0
  %2353 = vmatprep.subr.mxu0 0.0
  %2354 = vmatpush1.msra.mxu0 0.0
  %2355 = vmatprep.subr.mxu0 0.0
  %2356 = vmatpush1.msra.mxu0 0.0
  %2357 = vmatprep.subr.mxu0 0.0
  %2358 = vmatpush1.msra.mxu0 0.0
  %2359 = vmatprep.subr.mxu0 0.0
  %2360 = vmatpush1.msra.mxu0 0.0
  %2361 = vmatprep.subr.mxu0 0.0
  %2362 = vmatpush1.msra.mxu0 0.0
  %2363 = vmatprep.subr.mxu0 0.0
  %2364 = vmatpush1.msra.mxu0 0.0
  %2365 = vmatprep.subr.mxu0 0.0
  %2366 = vmatpush1.msra.mxu0 0.0
  %2367 = vmatprep.subr.mxu0 0.0
  %2368 = vmatpush1.msra.mxu0 0.0
  %2369 = vmatprep.subr.mxu0 0.0
  %2370 = vmatpush1.msra.mxu0 0.0
  %2371 = vmatprep.subr.mxu0 0.0
  %2372 = vmatpush1.msra.mxu0 0.0
  %2373 = vmatprep.subr.mxu0 0.0
  %2374 = vmatpush1.msra.mxu0 0.0
  %2375 = vmatprep.subr.mxu0 0.0
  %2376 = vmatpush1.msra.mxu0 0.0
  %2377 = vmatprep.subr.mxu0 0.0
  %2378 = vmatpush1.msra.mxu0 0.0
  %2379 = vmatprep.subr.mxu0 0.0
  %2380 = vmatpush1.msra.mxu0 0.0
  %2381 = vmatprep.subr.mxu0 0.0
  %2382 = vmatpush1.msra.mxu0 0.0
  %2383 = vmatprep.subr.mxu0 0.0
  %2384 = vmatpush1.msra.mxu0 %v2347
  %2385 = vmatprep.subr.mxu0 0.0
  %2386 = vmatpush2.msra.mxu0 0.0
  %2387 = vmatprep.subr.mxu0 0.0
  %2388 = vmatpush2.msra.mxu0 0.0
  %2389 = vmatprep.subr.mxu0 0.0
  %2390 = vmatpush2.msra.mxu0 0.0
  %2391 = vmatprep.subr.mxu0 0.0
  %2392 = vmatpush2.msra.mxu0 0.0
  %2393 = vmatprep.subr.mxu0 0.0
  %2394 = vmatpush2.msra.mxu0 0.0
  %2395 = vmatprep.subr.mxu0 0.0
  %2396 = vmatpush2.msra.mxu0 0.0
  %2397 = vmatprep.subr.mxu0 0.0
  %2398 = vmatpush2.msra.mxu0 0.0
  %2399 = vmatprep.subr.mxu0 0.0
  %2400 = vmatpush2.msra.mxu0 0.0
  %2401 = vmatprep.subr.mxu0 0.0
  %2402 = vmatpush2.msra.mxu0 0.0
  %2403 = vmatprep.subr.mxu0 0.0
  %2404 = vmatpush2.msra.mxu0 0.0
  %2405 = vmatprep.subr.mxu0 0.0
  %2406 = vmatpush2.msra.mxu0 0.0
  %2407 = vmatprep.subr.mxu0 0.0
  %2408 = vmatpush2.msra.mxu0 0.0
  %2409 = vmatprep.subr.mxu0 0.0
  %2410 = vmatpush2.msra.mxu0 0.0
  %2411 = vmatprep.subr.mxu0 0.0
  %2412 = vmatpush2.msra.mxu0 0.0
  %2413 = vmatprep.subr.mxu0 0.0
  %2414 = vmatpush2.msra.mxu0 0.0
  %2415 = vmatprep.subr.mxu0 0.0
  %2416 = vmatpush2.msra.mxu0 0.0
  %2417 = vmatprep.mubr.f32.mxu0 0.0
  %2418 = vmatmul.mubr.f32.gmra.mxu0 %v2351
  %v2419 = vpop.f32.mrf.mxu0
  %v2420 = vadd.f32 0.0, %v2419
  %v2421 = vpop.f32.mrf.mxu0
  %2422 = vdwg.mxu0
  %v2423 = vld [vmem:[%s63] sm:$0xff]
  %v2424 = vld [vmem:[%s63 + $0x8] sm:$0xff]
  %v2425 = vld [vmem:[%s63 + $0x10] sm:$0xff]
  %v2426 = vld [vmem:[%s63 + $0x18] sm:$0xff]
  %v2427 = vld [vmem:[%s65] sm:$0x1]
  %v2429 = vlaneseq
  %v2430 = vshrl.u32 %v2429, 7
  %v2431 = vsub.s32 0, %v2430
  %v2432 = vrot.slane %v2427, %v2431
  %v2435 = vsel %vm1317, %v2420, 0
  %2437 = vmatprep.subr.mxu0 0.0
  %2438 = vmatpush1.msra.mxu0 0.0
  %2439 = vmatprep.subr.mxu0 0.0
  %2440 = vmatpush1.msra.mxu0 0.0
  %2441 = vmatprep.subr.mxu0 0.0
  %2442 = vmatpush1.msra.mxu0 0.0
  %2443 = vmatprep.subr.mxu0 0.0
  %2444 = vmatpush1.msra.mxu0 0.0
  %2445 = vmatprep.subr.mxu0 0.0
  %2446 = vmatpush1.msra.mxu0 0.0
  %2447 = vmatprep.subr.mxu0 0.0
  %2448 = vmatpush1.msra.mxu0 0.0
  %2449 = vmatprep.subr.mxu0 0.0
  %2450 = vmatpush1.msra.mxu0 0.0
  %2451 = vmatprep.subr.mxu0 0.0
  %2452 = vmatpush1.msra.mxu0 0.0
  %2453 = vmatprep.subr.mxu0 0.0
  %2454 = vmatpush1.msra.mxu0 0.0
  %2455 = vmatprep.subr.mxu0 0.0
  %2456 = vmatpush1.msra.mxu0 0.0
  %2457 = vmatprep.subr.mxu0 0.0
  %2458 = vmatpush1.msra.mxu0 0.0
  %2459 = vmatprep.subr.mxu0 0.0
  %2460 = vmatpush1.msra.mxu0 0.0
  %2461 = vmatprep.subr.mxu0 0.0
  %2462 = vmatpush1.msra.mxu0 %v2426
  %2463 = vmatprep.subr.mxu0 0.0
  %2464 = vmatpush1.msra.mxu0 %v2425
  %2465 = vmatprep.subr.mxu0 0.0
  %2466 = vmatpush1.msra.mxu0 %v2424
  %2467 = vmatprep.subr.mxu0 0.0
  %2468 = vmatpush1.msra.mxu0 %v2423
  %2469 = vmatprep.subr.mxu0 0.0
  %2470 = vmatpush2.msra.mxu0 0.0
  %2471 = vmatprep.subr.mxu0 0.0
  %2472 = vmatpush2.msra.mxu0 0.0
  %2473 = vmatprep.subr.mxu0 0.0
  %2474 = vmatpush2.msra.mxu0 0.0
  %2475 = vmatprep.subr.mxu0 0.0
  %2476 = vmatpush2.msra.mxu0 0.0
  %2477 = vmatprep.subr.mxu0 0.0
  %2478 = vmatpush2.msra.mxu0 0.0
  %2479 = vmatprep.subr.mxu0 0.0
  %2480 = vmatpush2.msra.mxu0 0.0
  %2481 = vmatprep.subr.mxu0 0.0
  %2482 = vmatpush2.msra.mxu0 0.0
  %2483 = vmatprep.subr.mxu0 0.0
  %2484 = vmatpush2.msra.mxu0 0.0
  %2485 = vmatprep.subr.mxu0 0.0
  %2486 = vmatpush2.msra.mxu0 0.0
  %2487 = vmatprep.subr.mxu0 0.0
  %2488 = vmatpush2.msra.mxu0 0.0
  %2489 = vmatprep.subr.mxu0 0.0
  %2490 = vmatpush2.msra.mxu0 0.0
  %2491 = vmatprep.subr.mxu0 0.0
  %2492 = vmatpush2.msra.mxu0 0.0
  %2493 = vmatprep.subr.mxu0 0.0
  %2494 = vmatpush2.msra.mxu0 0.0
  %2495 = vmatprep.subr.mxu0 0.0
  %2496 = vmatpush2.msra.mxu0 0.0
  %2497 = vmatprep.subr.mxu0 0.0
  %2498 = vmatpush2.msra.mxu0 0.0
  %2499 = vmatprep.subr.mxu0 0.0
  %2500 = vmatpush2.msra.mxu0 0.0
  %2501 = vmatprep.mubr.f32.mxu0 0.0
  %2502 = vmatmul.mubr.f32.gmra.mxu0 %v2435
  %v2503 = vpop.f32.mrf.mxu0
  %v2504 = vadd.f32 %v2432, %v2503
  %v2505 = vpop.f32.mrf.mxu0
  %2506 = vdwg.mxu0
  %v2507 = vmax.f32 %v2504, 0.0
  %v2508 = vld [vmem:[%s67] sm:$0xff]
  %v2509 = vld [vmem:[%s67 + $0x8] sm:$0xff]
  %v2510 = vld [vmem:[%s67 + $0x10] sm:$0xff]
  %v2511 = vld [vmem:[%s67 + $0x18] sm:$0xff]
  %v2512 = vld [vmem:[%s69] sm:$0x1]
  %v2514 = vlaneseq
  %v2515 = vshrl.u32 %v2514, 7
  %v2516 = vsub.s32 0, %v2515
  %v2517 = vrot.slane %v2512, %v2516
  %v2520 = vsel %vm1317, %v2507, 0
  %2522 = vmatprep.subr.mxu0 0.0
  %2523 = vmatpush1.msra.mxu0 0.0
  %2524 = vmatprep.subr.mxu0 0.0
  %2525 = vmatpush1.msra.mxu0 0.0
  %2526 = vmatprep.subr.mxu0 0.0
  %2527 = vmatpush1.msra.mxu0 0.0
  %2528 = vmatprep.subr.mxu0 0.0
  %2529 = vmatpush1.msra.mxu0 0.0
  %2530 = vmatprep.subr.mxu0 0.0
  %2531 = vmatpush1.msra.mxu0 0.0
  %2532 = vmatprep.subr.mxu0 0.0
  %2533 = vmatpush1.msra.mxu0 0.0
  %2534 = vmatprep.subr.mxu0 0.0
  %2535 = vmatpush1.msra.mxu0 0.0
  %2536 = vmatprep.subr.mxu0 0.0
  %2537 = vmatpush1.msra.mxu0 0.0
  %2538 = vmatprep.subr.mxu0 0.0
  %2539 = vmatpush1.msra.mxu0 0.0
  %2540 = vmatprep.subr.mxu0 0.0
  %2541 = vmatpush1.msra.mxu0 0.0
  %2542 = vmatprep.subr.mxu0 0.0
  %2543 = vmatpush1.msra.mxu0 0.0
  %2544 = vmatprep.subr.mxu0 0.0
  %2545 = vmatpush1.msra.mxu0 0.0
  %2546 = vmatprep.subr.mxu0 0.0
  %2547 = vmatpush1.msra.mxu0 %v2511
  %2548 = vmatprep.subr.mxu0 0.0
  %2549 = vmatpush1.msra.mxu0 %v2510
  %2550 = vmatprep.subr.mxu0 0.0
  %2551 = vmatpush1.msra.mxu0 %v2509
  %2552 = vmatprep.subr.mxu0 0.0
  %2553 = vmatpush1.msra.mxu0 %v2508
  %2554 = vmatprep.subr.mxu0 0.0
  %2555 = vmatpush2.msra.mxu0 0.0
  %2556 = vmatprep.subr.mxu0 0.0
  %2557 = vmatpush2.msra.mxu0 0.0
  %2558 = vmatprep.subr.mxu0 0.0
  %2559 = vmatpush2.msra.mxu0 0.0
  %2560 = vmatprep.subr.mxu0 0.0
  %2561 = vmatpush2.msra.mxu0 0.0
  %2562 = vmatprep.subr.mxu0 0.0
  %2563 = vmatpush2.msra.mxu0 0.0
  %2564 = vmatprep.subr.mxu0 0.0
  %2565 = vmatpush2.msra.mxu0 0.0
  %2566 = vmatprep.subr.mxu0 0.0
  %2567 = vmatpush2.msra.mxu0 0.0
  %2568 = vmatprep.subr.mxu0 0.0
  %2569 = vmatpush2.msra.mxu0 0.0
  %2570 = vmatprep.subr.mxu0 0.0
  %2571 = vmatpush2.msra.mxu0 0.0
  %2572 = vmatprep.subr.mxu0 0.0
  %2573 = vmatpush2.msra.mxu0 0.0
  %2574 = vmatprep.subr.mxu0 0.0
  %2575 = vmatpush2.msra.mxu0 0.0
  %2576 = vmatprep.subr.mxu0 0.0
  %2577 = vmatpush2.msra.mxu0 0.0
  %2578 = vmatprep.subr.mxu0 0.0
  %2579 = vmatpush2.msra.mxu0 0.0
  %2580 = vmatprep.subr.mxu0 0.0
  %2581 = vmatpush2.msra.mxu0 0.0
  %2582 = vmatprep.subr.mxu0 0.0
  %2583 = vmatpush2.msra.mxu0 0.0
  %2584 = vmatprep.subr.mxu0 0.0
  %2585 = vmatpush2.msra.mxu0 0.0
  %2586 = vmatprep.mubr.f32.mxu0 0.0
  %2587 = vmatmul.mubr.f32.gmra.mxu0 %v2520
  %v2588 = vpop.f32.mrf.mxu0
  %v2589 = vadd.f32 %v2517, %v2588
  %v2590 = vpop.f32.mrf.mxu0
  %2591 = vdwg.mxu0
  %v2592 = vadd.f32 %v2589, %v2347
  %2593 = vmatprep.subr.mxu0 0.0
  %2594 = vmatpush1.msra.mxu0 0.0
  %2595 = vmatprep.subr.mxu0 0.0
  %2596 = vmatpush1.msra.mxu0 0.0
  %2597 = vmatprep.subr.mxu0 0.0
  %2598 = vmatpush1.msra.mxu0 0.0
  %2599 = vmatprep.subr.mxu0 0.0
  %2600 = vmatpush1.msra.mxu0 0.0
  %2601 = vmatprep.subr.mxu0 0.0
  %2602 = vmatpush1.msra.mxu0 0.0
  %2603 = vmatprep.subr.mxu0 0.0
  %2604 = vmatpush1.msra.mxu0 0.0
  %2605 = vmatprep.subr.mxu0 0.0
  %2606 = vmatpush1.msra.mxu0 0.0
  %2607 = vmatprep.subr.mxu0 0.0
  %2608 = vmatpush1.msra.mxu0 0.0
  %2609 = vmatprep.subr.mxu0 0.0
  %2610 = vmatpush1.msra.mxu0 0.0
  %2611 = vmatprep.subr.mxu0 0.0
  %2612 = vmatpush1.msra.mxu0 0.0
  %2613 = vmatprep.subr.mxu0 0.0
  %2614 = vmatpush1.msra.mxu0 0.0
  %2615 = vmatprep.subr.mxu0 0.0
  %2616 = vmatpush1.msra.mxu0 0.0
  %2617 = vmatprep.subr.mxu0 0.0
  %2618 = vmatpush1.msra.mxu0 0.0
  %2619 = vmatprep.subr.mxu0 0.0
  %2620 = vmatpush1.msra.mxu0 0.0
  %2621 = vmatprep.subr.mxu0 0.0
  %2622 = vmatpush1.msra.mxu0 0.0
  %2623 = vmatprep.subr.mxu0 0.0
  %2624 = vmatpush1.msra.mxu0 %v2592
  %2625 = vmatprep.subr.mxu0 0.0
  %2626 = vmatpush2.msra.mxu0 0.0
  %2627 = vmatprep.subr.mxu0 0.0
  %2628 = vmatpush2.msra.mxu0 0.0
  %2629 = vmatprep.subr.mxu0 0.0
  %2630 = vmatpush2.msra.mxu0 0.0
  %2631 = vmatprep.subr.mxu0 0.0
  %2632 = vmatpush2.msra.mxu0 0.0
  %2633 = vmatprep.subr.mxu0 0.0
  %2634 = vmatpush2.msra.mxu0 0.0
  %2635 = vmatprep.subr.mxu0 0.0
  %2636 = vmatpush2.msra.mxu0 0.0
  %2637 = vmatprep.subr.mxu0 0.0
  %2638 = vmatpush2.msra.mxu0 0.0
  %2639 = vmatprep.subr.mxu0 0.0
  %2640 = vmatpush2.msra.mxu0 0.0
  %2641 = vmatprep.subr.mxu0 0.0
  %2642 = vmatpush2.msra.mxu0 0.0
  %2643 = vmatprep.subr.mxu0 0.0
  %2644 = vmatpush2.msra.mxu0 0.0
  %2645 = vmatprep.subr.mxu0 0.0
  %2646 = vmatpush2.msra.mxu0 0.0
  %2647 = vmatprep.subr.mxu0 0.0
  %2648 = vmatpush2.msra.mxu0 0.0
  %2649 = vmatprep.subr.mxu0 0.0
  %2650 = vmatpush2.msra.mxu0 0.0
  %2651 = vmatprep.subr.mxu0 0.0
  %2652 = vmatpush2.msra.mxu0 0.0
  %2653 = vmatprep.subr.mxu0 0.0
  %2654 = vmatpush2.msra.mxu0 0.0
  %2655 = vmatprep.subr.mxu0 0.0
  %2656 = vmatpush2.msra.mxu0 0.0
  %2657 = vmatprep.mubr.f32.mxu0 0.0
  %2658 = vmatmul.mubr.f32.gmra.mxu0 %v2351
  %v2659 = vpop.f32.mrf.mxu0
  %v2660 = vadd.f32 0.0, %v2659
  %v2661 = vpop.f32.mrf.mxu0
  %2662 = vdwg.mxu0
  %v2663 = vld [vmem:[%s71] sm:$0xff]
  %v2664 = vld [vmem:[%s71 + $0x8] sm:$0xff]
  %v2665 = vld [vmem:[%s71 + $0x10] sm:$0xff]
  %v2666 = vld [vmem:[%s71 + $0x18] sm:$0xff]
  %v2667 = vld [vmem:[%s73] sm:$0x1]
  %v2669 = vlaneseq
  %v2670 = vshrl.u32 %v2669, 7
  %v2671 = vsub.s32 0, %v2670
  %v2672 = vrot.slane %v2667, %v2671
  %v2675 = vsel %vm1317, %v2660, 0
  %2677 = vmatprep.subr.mxu0 0.0
  %2678 = vmatpush1.msra.mxu0 0.0
  %2679 = vmatprep.subr.mxu0 0.0
  %2680 = vmatpush1.msra.mxu0 0.0
  %2681 = vmatprep.subr.mxu0 0.0
  %2682 = vmatpush1.msra.mxu0 0.0
  %2683 = vmatprep.subr.mxu0 0.0
  %2684 = vmatpush1.msra.mxu0 0.0
  %2685 = vmatprep.subr.mxu0 0.0
  %2686 = vmatpush1.msra.mxu0 0.0
  %2687 = vmatprep.subr.mxu0 0.0
  %2688 = vmatpush1.msra.mxu0 0.0
  %2689 = vmatprep.subr.mxu0 0.0
  %2690 = vmatpush1.msra.mxu0 0.0
  %2691 = vmatprep.subr.mxu0 0.0
  %2692 = vmatpush1.msra.mxu0 0.0
  %2693 = vmatprep.subr.mxu0 0.0
  %2694 = vmatpush1.msra.mxu0 0.0
  %2695 = vmatprep.subr.mxu0 0.0
  %2696 = vmatpush1.msra.mxu0 0.0
  %2697 = vmatprep.subr.mxu0 0.0
  %2698 = vmatpush1.msra.mxu0 0.0
  %2699 = vmatprep.subr.mxu0 0.0
  %2700 = vmatpush1.msra.mxu0 0.0
  %2701 = vmatprep.subr.mxu0 0.0
  %2702 = vmatpush1.msra.mxu0 %v2666
  %2703 = vmatprep.subr.mxu0 0.0
  %2704 = vmatpush1.msra.mxu0 %v2665
  %2705 = vmatprep.subr.mxu0 0.0
  %2706 = vmatpush1.msra.mxu0 %v2664
  %2707 = vmatprep.subr.mxu0 0.0
  %2708 = vmatpush1.msra.mxu0 %v2663
  %2709 = vmatprep.subr.mxu0 0.0
  %2710 = vmatpush2.msra.mxu0 0.0
  %2711 = vmatprep.subr.mxu0 0.0
  %2712 = vmatpush2.msra.mxu0 0.0
  %2713 = vmatprep.subr.mxu0 0.0
  %2714 = vmatpush2.msra.mxu0 0.0
  %2715 = vmatprep.subr.mxu0 0.0
  %2716 = vmatpush2.msra.mxu0 0.0
  %2717 = vmatprep.subr.mxu0 0.0
  %2718 = vmatpush2.msra.mxu0 0.0
  %2719 = vmatprep.subr.mxu0 0.0
  %2720 = vmatpush2.msra.mxu0 0.0
  %2721 = vmatprep.subr.mxu0 0.0
  %2722 = vmatpush2.msra.mxu0 0.0
  %2723 = vmatprep.subr.mxu0 0.0
  %2724 = vmatpush2.msra.mxu0 0.0
  %2725 = vmatprep.subr.mxu0 0.0
  %2726 = vmatpush2.msra.mxu0 0.0
  %2727 = vmatprep.subr.mxu0 0.0
  %2728 = vmatpush2.msra.mxu0 0.0
  %2729 = vmatprep.subr.mxu0 0.0
  %2730 = vmatpush2.msra.mxu0 0.0
  %2731 = vmatprep.subr.mxu0 0.0
  %2732 = vmatpush2.msra.mxu0 0.0
  %2733 = vmatprep.subr.mxu0 0.0
  %2734 = vmatpush2.msra.mxu0 0.0
  %2735 = vmatprep.subr.mxu0 0.0
  %2736 = vmatpush2.msra.mxu0 0.0
  %2737 = vmatprep.subr.mxu0 0.0
  %2738 = vmatpush2.msra.mxu0 0.0
  %2739 = vmatprep.subr.mxu0 0.0
  %2740 = vmatpush2.msra.mxu0 0.0
  %2741 = vmatprep.mubr.f32.mxu0 0.0
  %2742 = vmatmul.mubr.f32.gmra.mxu0 %v2675
  %v2743 = vpop.f32.mrf.mxu0
  %v2744 = vadd.f32 %v2672, %v2743
  %v2745 = vpop.f32.mrf.mxu0
  %2746 = vdwg.mxu0
  %v2747 = vmax.f32 %v2744, 0.0
  %v2748 = vld [vmem:[%s75] sm:$0xff]
  %v2749 = vld [vmem:[%s75 + $0x8] sm:$0xff]
  %v2750 = vld [vmem:[%s75 + $0x10] sm:$0xff]
  %v2751 = vld [vmem:[%s75 + $0x18] sm:$0xff]
  %v2752 = vld [vmem:[%s77] sm:$0x1]
  %v2754 = vlaneseq
  %v2755 = vshrl.u32 %v2754, 7
  %v2756 = vsub.s32 0, %v2755
  %v2757 = vrot.slane %v2752, %v2756
  %v2760 = vsel %vm1317, %v2747, 0
  %2762 = vmatprep.subr.mxu0 0.0
  %2763 = vmatpush1.msra.mxu0 0.0
  %2764 = vmatprep.subr.mxu0 0.0
  %2765 = vmatpush1.msra.mxu0 0.0
  %2766 = vmatprep.subr.mxu0 0.0
  %2767 = vmatpush1.msra.mxu0 0.0
  %2768 = vmatprep.subr.mxu0 0.0
  %2769 = vmatpush1.msra.mxu0 0.0
  %2770 = vmatprep.subr.mxu0 0.0
  %2771 = vmatpush1.msra.mxu0 0.0
  %2772 = vmatprep.subr.mxu0 0.0
  %2773 = vmatpush1.msra.mxu0 0.0
  %2774 = vmatprep.subr.mxu0 0.0
  %2775 = vmatpush1.msra.mxu0 0.0
  %2776 = vmatprep.subr.mxu0 0.0
  %2777 = vmatpush1.msra.mxu0 0.0
  %2778 = vmatprep.subr.mxu0 0.0
  %2779 = vmatpush1.msra.mxu0 0.0
  %2780 = vmatprep.subr.mxu0 0.0
  %2781 = vmatpush1.msra.mxu0 0.0
  %2782 = vmatprep.subr.mxu0 0.0
  %2783 = vmatpush1.msra.mxu0 0.0
  %2784 = vmatprep.subr.mxu0 0.0
  %2785 = vmatpush1.msra.mxu0 0.0
  %2786 = vmatprep.subr.mxu0 0.0
  %2787 = vmatpush1.msra.mxu0 %v2751
  %2788 = vmatprep.subr.mxu0 0.0
  %2789 = vmatpush1.msra.mxu0 %v2750
  %2790 = vmatprep.subr.mxu0 0.0
  %2791 = vmatpush1.msra.mxu0 %v2749
  %2792 = vmatprep.subr.mxu0 0.0
  %2793 = vmatpush1.msra.mxu0 %v2748
  %2794 = vmatprep.subr.mxu0 0.0
  %2795 = vmatpush2.msra.mxu0 0.0
  %2796 = vmatprep.subr.mxu0 0.0
  %2797 = vmatpush2.msra.mxu0 0.0
  %2798 = vmatprep.subr.mxu0 0.0
  %2799 = vmatpush2.msra.mxu0 0.0
  %2800 = vmatprep.subr.mxu0 0.0
  %2801 = vmatpush2.msra.mxu0 0.0
  %2802 = vmatprep.subr.mxu0 0.0
  %2803 = vmatpush2.msra.mxu0 0.0
  %2804 = vmatprep.subr.mxu0 0.0
  %2805 = vmatpush2.msra.mxu0 0.0
  %2806 = vmatprep.subr.mxu0 0.0
  %2807 = vmatpush2.msra.mxu0 0.0
  %2808 = vmatprep.subr.mxu0 0.0
  %2809 = vmatpush2.msra.mxu0 0.0
  %2810 = vmatprep.subr.mxu0 0.0
  %2811 = vmatpush2.msra.mxu0 0.0
  %2812 = vmatprep.subr.mxu0 0.0
  %2813 = vmatpush2.msra.mxu0 0.0
  %2814 = vmatprep.subr.mxu0 0.0
  %2815 = vmatpush2.msra.mxu0 0.0
  %2816 = vmatprep.subr.mxu0 0.0
  %2817 = vmatpush2.msra.mxu0 0.0
  %2818 = vmatprep.subr.mxu0 0.0
  %2819 = vmatpush2.msra.mxu0 0.0
  %2820 = vmatprep.subr.mxu0 0.0
  %2821 = vmatpush2.msra.mxu0 0.0
  %2822 = vmatprep.subr.mxu0 0.0
  %2823 = vmatpush2.msra.mxu0 0.0
  %2824 = vmatprep.subr.mxu0 0.0
  %2825 = vmatpush2.msra.mxu0 0.0
  %2826 = vmatprep.mubr.f32.mxu0 0.0
  %2827 = vmatmul.mubr.f32.gmra.mxu0 %v2760
  %v2828 = vpop.f32.mrf.mxu0
  %v2829 = vadd.f32 %v2757, %v2828
  %v2830 = vpop.f32.mrf.mxu0
  %2831 = vdwg.mxu0
  %v2832 = vadd.f32 %v2829, %v2592
  %v2833 = vld [vmem:[%s7] sm:$0x3]
  %v2835 = vsel %vm2349, %v2833, 0
  %2837 = vmatprep.subr.mxu0 0.0
  %2838 = vmatpush1.msra.mxu0 0.0
  %2839 = vmatprep.subr.mxu0 0.0
  %2840 = vmatpush1.msra.mxu0 0.0
  %2841 = vmatprep.subr.mxu0 0.0
  %2842 = vmatpush1.msra.mxu0 0.0
  %2843 = vmatprep.subr.mxu0 0.0
  %2844 = vmatpush1.msra.mxu0 0.0
  %2845 = vmatprep.subr.mxu0 0.0
  %2846 = vmatpush1.msra.mxu0 0.0
  %2847 = vmatprep.subr.mxu0 0.0
  %2848 = vmatpush1.msra.mxu0 0.0
  %2849 = vmatprep.subr.mxu0 0.0
  %2850 = vmatpush1.msra.mxu0 0.0
  %2851 = vmatprep.subr.mxu0 0.0
  %2852 = vmatpush1.msra.mxu0 0.0
  %2853 = vmatprep.subr.mxu0 0.0
  %2854 = vmatpush1.msra.mxu0 0.0
  %2855 = vmatprep.subr.mxu0 0.0
  %2856 = vmatpush1.msra.mxu0 0.0
  %2857 = vmatprep.subr.mxu0 0.0
  %2858 = vmatpush1.msra.mxu0 0.0
  %2859 = vmatprep.subr.mxu0 0.0
  %2860 = vmatpush1.msra.mxu0 0.0
  %2861 = vmatprep.subr.mxu0 0.0
  %2862 = vmatpush1.msra.mxu0 0.0
  %2863 = vmatprep.subr.mxu0 0.0
  %2864 = vmatpush1.msra.mxu0 0.0
  %2865 = vmatprep.subr.mxu0 0.0
  %2866 = vmatpush1.msra.mxu0 0.0
  %2867 = vmatprep.subr.mxu0 0.0
  %2868 = vmatpush1.msra.mxu0 %v2832
  %2869 = vmatprep.subr.mxu0 0.0
  %2870 = vmatpush2.msra.mxu0 0.0
  %2871 = vmatprep.subr.mxu0 0.0
  %2872 = vmatpush2.msra.mxu0 0.0
  %2873 = vmatprep.subr.mxu0 0.0
  %2874 = vmatpush2.msra.mxu0 0.0
  %2875 = vmatprep.subr.mxu0 0.0
  %2876 = vmatpush2.msra.mxu0 0.0
  %2877 = vmatprep.subr.mxu0 0.0
  %2878 = vmatpush2.msra.mxu0 0.0
  %2879 = vmatprep.subr.mxu0 0.0
  %2880 = vmatpush2.msra.mxu0 0.0
  %2881 = vmatprep.subr.mxu0 0.0
  %2882 = vmatpush2.msra.mxu0 0.0
  %2883 = vmatprep.subr.mxu0 0.0
  %2884 = vmatpush2.msra.mxu0 0.0
  %2885 = vmatprep.subr.mxu0 0.0
  %2886 = vmatpush2.msra.mxu0 0.0
  %2887 = vmatprep.subr.mxu0 0.0
  %2888 = vmatpush2.msra.mxu0 0.0
  %2889 = vmatprep.subr.mxu0 0.0
  %2890 = vmatpush2.msra.mxu0 0.0
  %2891 = vmatprep.subr.mxu0 0.0
  %2892 = vmatpush2.msra.mxu0 0.0
  %2893 = vmatprep.subr.mxu0 0.0
  %2894 = vmatpush2.msra.mxu0 0.0
  %2895 = vmatprep.subr.mxu0 0.0
  %2896 = vmatpush2.msra.mxu0 0.0
  %2897 = vmatprep.subr.mxu0 0.0
  %2898 = vmatpush2.msra.mxu0 0.0
  %2899 = vmatprep.subr.mxu0 0.0
  %2900 = vmatpush2.msra.mxu0 0.0
  %2901 = vmatprep.mubr.f32.mxu0 0.0
  %2902 = vmatmul.mubr.f32.gmra.mxu0 %v2835
  %v2903 = vpop.f32.mrf.mxu0
  %v2904 = vadd.f32 0.0, %v2903
  %v2905 = vpop.f32.mrf.mxu0
  %2906 = vdwg.mxu0
  %v2907 = vld [vmem:[%s59] sm:$0xff]
  %v2908 = vld [vmem:[%s59 + $0x8] sm:$0xff]
  %v2909 = vld [vmem:[%s59 + $0x10] sm:$0xff]
  %v2910 = vld [vmem:[%s59 + $0x18] sm:$0xff]
  %v2911 = vld [vmem:[%s61] sm:$0x1]
  %v2913 = vlaneseq
  %v2914 = vshrl.u32 %v2913, 7
  %v2915 = vsub.s32 0, %v2914
  %v2916 = vrot.slane %v2911, %v2915
  %v2919 = vsel %vm1317, %v2904, 0
  %2921 = vmatprep.subr.mxu0 0.0
  %2922 = vmatpush1.msra.mxu0 0.0
  %2923 = vmatprep.subr.mxu0 0.0
  %2924 = vmatpush1.msra.mxu0 0.0
  %2925 = vmatprep.subr.mxu0 0.0
  %2926 = vmatpush1.msra.mxu0 0.0
  %2927 = vmatprep.subr.mxu0 0.0
  %2928 = vmatpush1.msra.mxu0 0.0
  %2929 = vmatprep.subr.mxu0 0.0
  %2930 = vmatpush1.msra.mxu0 0.0
  %2931 = vmatprep.subr.mxu0 0.0
  %2932 = vmatpush1.msra.mxu0 0.0
  %2933 = vmatprep.subr.mxu0 0.0
  %2934 = vmatpush1.msra.mxu0 0.0
  %2935 = vmatprep.subr.mxu0 0.0
  %2936 = vmatpush1.msra.mxu0 0.0
  %2937 = vmatprep.subr.mxu0 0.0
  %2938 = vmatpush1.msra.mxu0 0.0
  %2939 = vmatprep.subr.mxu0 0.0
  %2940 = vmatpush1.msra.mxu0 0.0
  %2941 = vmatprep.subr.mxu0 0.0
  %2942 = vmatpush1.msra.mxu0 0.0
  %2943 = vmatprep.subr.mxu0 0.0
  %2944 = vmatpush1.msra.mxu0 0.0
  %2945 = vmatprep.subr.mxu0 0.0
  %2946 = vmatpush1.msra.mxu0 %v2910
  %2947 = vmatprep.subr.mxu0 0.0
  %2948 = vmatpush1.msra.mxu0 %v2909
  %2949 = vmatprep.subr.mxu0 0.0
  %2950 = vmatpush1.msra.mxu0 %v2908
  %2951 = vmatprep.subr.mxu0 0.0
  %2952 = vmatpush1.msra.mxu0 %v2907
  %2953 = vmatprep.subr.mxu0 0.0
  %2954 = vmatpush2.msra.mxu0 0.0
  %2955 = vmatprep.subr.mxu0 0.0
  %2956 = vmatpush2.msra.mxu0 0.0
  %2957 = vmatprep.subr.mxu0 0.0
  %2958 = vmatpush2.msra.mxu0 0.0
  %2959 = vmatprep.subr.mxu0 0.0
  %2960 = vmatpush2.msra.mxu0 0.0
  %2961 = vmatprep.subr.mxu0 0.0
  %2962 = vmatpush2.msra.mxu0 0.0
  %2963 = vmatprep.subr.mxu0 0.0
  %2964 = vmatpush2.msra.mxu0 0.0
  %2965 = vmatprep.subr.mxu0 0.0
  %2966 = vmatpush2.msra.mxu0 0.0
  %2967 = vmatprep.subr.mxu0 0.0
  %2968 = vmatpush2.msra.mxu0 0.0
  %2969 = vmatprep.subr.mxu0 0.0
  %2970 = vmatpush2.msra.mxu0 0.0
  %2971 = vmatprep.subr.mxu0 0.0
  %2972 = vmatpush2.msra.mxu0 0.0
  %2973 = vmatprep.subr.mxu0 0.0
  %2974 = vmatpush2.msra.mxu0 0.0
  %2975 = vmatprep.subr.mxu0 0.0
  %2976 = vmatpush2.msra.mxu0 0.0
  %2977 = vmatprep.subr.mxu0 0.0
  %2978 = vmatpush2.msra.mxu0 0.0
  %2979 = vmatprep.subr.mxu0 0.0
  %2980 = vmatpush2.msra.mxu0 0.0
  %2981 = vmatprep.subr.mxu0 0.0
  %2982 = vmatpush2.msra.mxu0 0.0
  %2983 = vmatprep.subr.mxu0 0.0
  %2984 = vmatpush2.msra.mxu0 0.0
  %2985 = vmatprep.mubr.f32.mxu0 0.0
  %2986 = vmatmul.mubr.f32.gmra.mxu0 %v2919
  %v2987 = vpop.f32.mrf.mxu0
  %v2988 = vadd.f32 %v2916, %v2987
  %v2989 = vpop.f32.mrf.mxu0
  %2990 = vdwg.mxu0
  %v2991 = vmax.f32 %v1388, 0.0
  %v2992 = vld [vmem:[%s21] sm:$0xff]
  %v2993 = vld [vmem:[%s21 + $0x8] sm:$0xff]
  %v2994 = vld [vmem:[%s21 + $0x10] sm:$0xff]
  %v2995 = vld [vmem:[%s21 + $0x18] sm:$0xff]
  %v2996 = vmax.f32 %v2988, 0.0
  %v2997 = vld [vmem:[%s19] sm:$0xff]
  %v2998 = vld [vmem:[%s19 + $0x8] sm:$0xff]
  %v2999 = vld [vmem:[%s19 + $0x10] sm:$0xff]
  %v3000 = vld [vmem:[%s19 + $0x18] sm:$0xff]
  %v3002 = vsel %vm1317, %v2996, 0
  %3004 = vmatprep.subr.mxu0 0.0
  %3005 = vmatpush1.msra.mxu0 0.0
  %3006 = vmatprep.subr.mxu0 0.0
  %3007 = vmatpush1.msra.mxu0 0.0
  %3008 = vmatprep.subr.mxu0 0.0
  %3009 = vmatpush1.msra.mxu0 0.0
  %3010 = vmatprep.subr.mxu0 0.0
  %3011 = vmatpush1.msra.mxu0 0.0
  %3012 = vmatprep.subr.mxu0 0.0
  %3013 = vmatpush1.msra.mxu0 0.0
  %3014 = vmatprep.subr.mxu0 0.0
  %3015 = vmatpush1.msra.mxu0 0.0
  %3016 = vmatprep.subr.mxu0 0.0
  %3017 = vmatpush1.msra.mxu0 0.0
  %3018 = vmatprep.subr.mxu0 0.0
  %3019 = vmatpush1.msra.mxu0 0.0
  %3020 = vmatprep.subr.mxu0 0.0
  %3021 = vmatpush1.msra.mxu0 0.0
  %3022 = vmatprep.subr.mxu0 0.0
  %3023 = vmatpush1.msra.mxu0 0.0
  %3024 = vmatprep.subr.mxu0 0.0
  %3025 = vmatpush1.msra.mxu0 0.0
  %3026 = vmatprep.subr.mxu0 0.0
  %3027 = vmatpush1.msra.mxu0 0.0
  %3028 = vmatprep.subr.mxu0 0.0
  %3029 = vmatpush1.msra.mxu0 %v3000
  %3030 = vmatprep.subr.mxu0 0.0
  %3031 = vmatpush1.msra.mxu0 %v2999
  %3032 = vmatprep.subr.mxu0 0.0
  %3033 = vmatpush1.msra.mxu0 %v2998
  %3034 = vmatprep.subr.mxu0 0.0
  %3035 = vmatpush1.msra.mxu0 %v2997
  %3036 = vmatprep.subr.mxu0 0.0
  %3037 = vmatpush2.msra.mxu0 0.0
  %3038 = vmatprep.subr.mxu0 0.0
  %3039 = vmatpush2.msra.mxu0 0.0
  %3040 = vmatprep.subr.mxu0 0.0
  %3041 = vmatpush2.msra.mxu0 0.0
  %3042 = vmatprep.subr.mxu0 0.0
  %3043 = vmatpush2.msra.mxu0 0.0
  %3044 = vmatprep.subr.mxu0 0.0
  %3045 = vmatpush2.msra.mxu0 0.0
  %3046 = vmatprep.subr.mxu0 0.0
  %3047 = vmatpush2.msra.mxu0 0.0
  %3048 = vmatprep.subr.mxu0 0.0
  %3049 = vmatpush2.msra.mxu0 0.0
  %3050 = vmatprep.subr.mxu0 0.0
  %3051 = vmatpush2.msra.mxu0 0.0
  %3052 = vmatprep.subr.mxu0 0.0
  %3053 = vmatpush2.msra.mxu0 0.0
  %3054 = vmatprep.subr.mxu0 0.0
  %3055 = vmatpush2.msra.mxu0 0.0
  %3056 = vmatprep.subr.mxu0 0.0
  %3057 = vmatpush2.msra.mxu0 0.0
  %3058 = vmatprep.subr.mxu0 0.0
  %3059 = vmatpush2.msra.mxu0 0.0
  %3060 = vmatprep.subr.mxu0 0.0
  %3061 = vmatpush2.msra.mxu0 0.0
  %3062 = vmatprep.subr.mxu0 0.0
  %3063 = vmatpush2.msra.mxu0 0.0
  %3064 = vmatprep.subr.mxu0 0.0
  %3065 = vmatpush2.msra.mxu0 0.0
  %3066 = vmatprep.subr.mxu0 0.0
  %3067 = vmatpush2.msra.mxu0 0.0
  %3068 = vmatprep.mubr.f32.mxu0 0.0
  %3069 = vmatmul.mubr.f32.gmra.mxu0 %v3002
  %v3070 = vpop.f32.mrf.mxu0
  %v3071 = vadd.f32 0.0, %v3070
  %v3072 = vpop.f32.mrf.mxu0
  %3073 = vdwg.mxu0
  %v3075 = vsel %vm1317, %v2991, 0
  %3077 = vmatprep.subr.mxu0 0.0
  %3078 = vmatpush1.msra.mxu0 0.0
  %3079 = vmatprep.subr.mxu0 0.0
  %3080 = vmatpush1.msra.mxu0 0.0
  %3081 = vmatprep.subr.mxu0 0.0
  %3082 = vmatpush1.msra.mxu0 0.0
  %3083 = vmatprep.subr.mxu0 0.0
  %3084 = vmatpush1.msra.mxu0 0.0
  %3085 = vmatprep.subr.mxu0 0.0
  %3086 = vmatpush1.msra.mxu0 0.0
  %3087 = vmatprep.subr.mxu0 0.0
  %3088 = vmatpush1.msra.mxu0 0.0
  %3089 = vmatprep.subr.mxu0 0.0
  %3090 = vmatpush1.msra.mxu0 0.0
  %3091 = vmatprep.subr.mxu0 0.0
  %3092 = vmatpush1.msra.mxu0 0.0
  %3093 = vmatprep.subr.mxu0 0.0
  %3094 = vmatpush1.msra.mxu0 0.0
  %3095 = vmatprep.subr.mxu0 0.0
  %3096 = vmatpush1.msra.mxu0 0.0
  %3097 = vmatprep.subr.mxu0 0.0
  %3098 = vmatpush1.msra.mxu0 0.0
  %3099 = vmatprep.subr.mxu0 0.0
  %3100 = vmatpush1.msra.mxu0 0.0
  %3101 = vmatprep.subr.mxu0 0.0
  %3102 = vmatpush1.msra.mxu0 %v2995
  %3103 = vmatprep.subr.mxu0 0.0
  %3104 = vmatpush1.msra.mxu0 %v2994
  %3105 = vmatprep.subr.mxu0 0.0
  %3106 = vmatpush1.msra.mxu0 %v2993
  %3107 = vmatprep.subr.mxu0 0.0
  %3108 = vmatpush1.msra.mxu0 %v2992
  %3109 = vmatprep.subr.mxu0 0.0
  %3110 = vmatpush2.msra.mxu0 0.0
  %3111 = vmatprep.subr.mxu0 0.0
  %3112 = vmatpush2.msra.mxu0 0.0
  %3113 = vmatprep.subr.mxu0 0.0
  %3114 = vmatpush2.msra.mxu0 0.0
  %3115 = vmatprep.subr.mxu0 0.0
  %3116 = vmatpush2.msra.mxu0 0.0
  %3117 = vmatprep.subr.mxu0 0.0
  %3118 = vmatpush2.msra.mxu0 0.0
  %3119 = vmatprep.subr.mxu0 0.0
  %3120 = vmatpush2.msra.mxu0 0.0
  %3121 = vmatprep.subr.mxu0 0.0
  %3122 = vmatpush2.msra.mxu0 0.0
  %3123 = vmatprep.subr.mxu0 0.0
  %3124 = vmatpush2.msra.mxu0 0.0
  %3125 = vmatprep.subr.mxu0 0.0
  %3126 = vmatpush2.msra.mxu0 0.0
  %3127 = vmatprep.subr.mxu0 0.0
  %3128 = vmatpush2.msra.mxu0 0.0
  %3129 = vmatprep.subr.mxu0 0.0
  %3130 = vmatpush2.msra.mxu0 0.0
  %3131 = vmatprep.subr.mxu0 0.0
  %3132 = vmatpush2.msra.mxu0 0.0
  %3133 = vmatprep.subr.mxu0 0.0
  %3134 = vmatpush2.msra.mxu0 0.0
  %3135 = vmatprep.subr.mxu0 0.0
  %3136 = vmatpush2.msra.mxu0 0.0
  %3137 = vmatprep.subr.mxu0 0.0
  %3138 = vmatpush2.msra.mxu0 0.0
  %3139 = vmatprep.subr.mxu0 0.0
  %3140 = vmatpush2.msra.mxu0 0.0
  %3141 = vmatprep.mubr.f32.mxu0 0.0
  %3142 = vmatmul.mubr.f32.gmra.mxu0 %v3075
  %v3143 = vpop.f32.mrf.mxu0
  %v3144 = vadd.f32 %v3071, %v3143
  %v3145 = vpop.f32.mrf.mxu0
  %3146 = vdwg.mxu0
  %v3147 = vld [vmem:[%s17] sm:$0x1]
  %v3149 = vlaneseq
  %v3150 = vshrl.u32 %v3149, 7
  %v3151 = vsub.s32 0, %v3150
  %v3152 = vrot.slane %v3147, %v3151
  %v3154 = vadd.f32 %v3144, %v3152
  %v3155 = vld [vmem:[%s9] sm:$0xff]
  %v3156 = vld [vmem:[%s9 + $0x8] sm:$0xff]
  %v3157 = vld [vmem:[%s9 + $0x10] sm:$0xff]
  %v3158 = vld [vmem:[%s9 + $0x18] sm:$0xff]
  %v3159 = vld [vmem:[%s11] sm:$0x1]
  %v3161 = vlaneseq
  %v3162 = vshrl.u32 %v3161, 7
  %v3163 = vsub.s32 0, %v3162
  %v3164 = vrot.slane %v3159, %v3163
  %v3167 = vsel %vm1317, %v3154, 0
  %3169 = vmatprep.subr.mxu0 0.0
  %3170 = vmatpush1.msra.mxu0 0.0
  %3171 = vmatprep.subr.mxu0 0.0
  %3172 = vmatpush1.msra.mxu0 0.0
  %3173 = vmatprep.subr.mxu0 0.0
  %3174 = vmatpush1.msra.mxu0 0.0
  %3175 = vmatprep.subr.mxu0 0.0
  %3176 = vmatpush1.msra.mxu0 0.0
  %3177 = vmatprep.subr.mxu0 0.0
  %3178 = vmatpush1.msra.mxu0 0.0
  %3179 = vmatprep.subr.mxu0 0.0
  %3180 = vmatpush1.msra.mxu0 0.0
  %3181 = vmatprep.subr.mxu0 0.0
  %3182 = vmatpush1.msra.mxu0 0.0
  %3183 = vmatprep.subr.mxu0 0.0
  %3184 = vmatpush1.msra.mxu0 0.0
  %3185 = vmatprep.subr.mxu0 0.0
  %3186 = vmatpush1.msra.mxu0 0.0
  %3187 = vmatprep.subr.mxu0 0.0
  %3188 = vmatpush1.msra.mxu0 0.0
  %3189 = vmatprep.subr.mxu0 0.0
  %3190 = vmatpush1.msra.mxu0 0.0
  %3191 = vmatprep.subr.mxu0 0.0
  %3192 = vmatpush1.msra.mxu0 0.0
  %3193 = vmatprep.subr.mxu0 0.0
  %3194 = vmatpush1.msra.mxu0 %v3158
  %3195 = vmatprep.subr.mxu0 0.0
  %3196 = vmatpush1.msra.mxu0 %v3157
  %3197 = vmatprep.subr.mxu0 0.0
  %3198 = vmatpush1.msra.mxu0 %v3156
  %3199 = vmatprep.subr.mxu0 0.0
  %3200 = vmatpush1.msra.mxu0 %v3155
  %3201 = vmatprep.subr.mxu0 0.0
  %3202 = vmatpush2.msra.mxu0 0.0
  %3203 = vmatprep.subr.mxu0 0.0
  %3204 = vmatpush2.msra.mxu0 0.0
  %3205 = vmatprep.subr.mxu0 0.0
  %3206 = vmatpush2.msra.mxu0 0.0
  %3207 = vmatprep.subr.mxu0 0.0
  %3208 = vmatpush2.msra.mxu0 0.0
  %3209 = vmatprep.subr.mxu0 0.0
  %3210 = vmatpush2.msra.mxu0 0.0
  %3211 = vmatprep.subr.mxu0 0.0
  %3212 = vmatpush2.msra.mxu0 0.0
  %3213 = vmatprep.subr.mxu0 0.0
  %3214 = vmatpush2.msra.mxu0 0.0
  %3215 = vmatprep.subr.mxu0 0.0
  %3216 = vmatpush2.msra.mxu0 0.0
  %3217 = vmatprep.subr.mxu0 0.0
  %3218 = vmatpush2.msra.mxu0 0.0
  %3219 = vmatprep.subr.mxu0 0.0
  %3220 = vmatpush2.msra.mxu0 0.0
  %3221 = vmatprep.subr.mxu0 0.0
  %3222 = vmatpush2.msra.mxu0 0.0
  %3223 = vmatprep.subr.mxu0 0.0
  %3224 = vmatpush2.msra.mxu0 0.0
  %3225 = vmatprep.subr.mxu0 0.0
  %3226 = vmatpush2.msra.mxu0 0.0
  %3227 = vmatprep.subr.mxu0 0.0
  %3228 = vmatpush2.msra.mxu0 0.0
  %3229 = vmatprep.subr.mxu0 0.0
  %3230 = vmatpush2.msra.mxu0 0.0
  %3231 = vmatprep.subr.mxu0 0.0
  %3232 = vmatpush2.msra.mxu0 0.0
  %3233 = vmatprep.mubr.f32.mxu0 0.0
  %3234 = vmatmul.mubr.f32.gmra.mxu0 %v3167
  %v3235 = vpop.f32.mrf.mxu0
  %v3236 = vadd.f32 %v3164, %v3235
  %v3237 = vpop.f32.mrf.mxu0
  %3238 = vdwg.mxu0
  %v3239 = vmax.f32 %v3236, 0.0
  %v3240 = vadd.f32 %v3239, %v3154
  %v3241 = vld [vmem:[%s13] sm:$0xff]
  %v3242 = vld [vmem:[%s13 + $0x8] sm:$0xff]
  %v3243 = vld [vmem:[%s13 + $0x10] sm:$0xff]
  %v3244 = vld [vmem:[%s13 + $0x18] sm:$0xff]
  %v3245 = vld [vmem:[%s15] sm:$0x1]
  %v3247 = vlaneseq
  %v3248 = vshrl.u32 %v3247, 7
  %v3249 = vsub.s32 0, %v3248
  %v3250 = vrot.slane %v3245, %v3249
  %v3253 = vsel %vm1317, %v3240, 0
  %3255 = vmatprep.subr.mxu0 0.0
  %3256 = vmatpush1.msra.mxu0 0.0
  %3257 = vmatprep.subr.mxu0 0.0
  %3258 = vmatpush1.msra.mxu0 0.0
  %3259 = vmatprep.subr.mxu0 0.0
  %3260 = vmatpush1.msra.mxu0 0.0
  %3261 = vmatprep.subr.mxu0 0.0
  %3262 = vmatpush1.msra.mxu0 0.0
  %3263 = vmatprep.subr.mxu0 0.0
  %3264 = vmatpush1.msra.mxu0 0.0
  %3265 = vmatprep.subr.mxu0 0.0
  %3266 = vmatpush1.msra.mxu0 0.0
  %3267 = vmatprep.subr.mxu0 0.0
  %3268 = vmatpush1.msra.mxu0 0.0
  %3269 = vmatprep.subr.mxu0 0.0
  %3270 = vmatpush1.msra.mxu0 0.0
  %3271 = vmatprep.subr.mxu0 0.0
  %3272 = vmatpush1.msra.mxu0 0.0
  %3273 = vmatprep.subr.mxu0 0.0
  %3274 = vmatpush1.msra.mxu0 0.0
  %3275 = vmatprep.subr.mxu0 0.0
  %3276 = vmatpush1.msra.mxu0 0.0
  %3277 = vmatprep.subr.mxu0 0.0
  %3278 = vmatpush1.msra.mxu0 0.0
  %3279 = vmatprep.subr.mxu0 0.0
  %3280 = vmatpush1.msra.mxu0 %v3244
  %3281 = vmatprep.subr.mxu0 0.0
  %3282 = vmatpush1.msra.mxu0 %v3243
  %3283 = vmatprep.subr.mxu0 0.0
  %3284 = vmatpush1.msra.mxu0 %v3242
  %3285 = vmatprep.subr.mxu0 0.0
  %3286 = vmatpush1.msra.mxu0 %v3241
  %3287 = vmatprep.subr.mxu0 0.0
  %3288 = vmatpush2.msra.mxu0 0.0
  %3289 = vmatprep.subr.mxu0 0.0
  %3290 = vmatpush2.msra.mxu0 0.0
  %3291 = vmatprep.subr.mxu0 0.0
  %3292 = vmatpush2.msra.mxu0 0.0
  %3293 = vmatprep.subr.mxu0 0.0
  %3294 = vmatpush2.msra.mxu0 0.0
  %3295 = vmatprep.subr.mxu0 0.0
  %3296 = vmatpush2.msra.mxu0 0.0
  %3297 = vmatprep.subr.mxu0 0.0
  %3298 = vmatpush2.msra.mxu0 0.0
  %3299 = vmatprep.subr.mxu0 0.0
  %3300 = vmatpush2.msra.mxu0 0.0
  %3301 = vmatprep.subr.mxu0 0.0
  %3302 = vmatpush2.msra.mxu0 0.0
  %3303 = vmatprep.subr.mxu0 0.0
  %3304 = vmatpush2.msra.mxu0 0.0
  %3305 = vmatprep.subr.mxu0 0.0
  %3306 = vmatpush2.msra.mxu0 0.0
  %3307 = vmatprep.subr.mxu0 0.0
  %3308 = vmatpush2.msra.mxu0 0.0
  %3309 = vmatprep.subr.mxu0 0.0
  %3310 = vmatpush2.msra.mxu0 0.0
  %3311 = vmatprep.subr.mxu0 0.0
  %3312 = vmatpush2.msra.mxu0 0.0
  %3313 = vmatprep.subr.mxu0 0.0
  %3314 = vmatpush2.msra.mxu0 0.0
  %3315 = vmatprep.subr.mxu0 0.0
  %3316 = vmatpush2.msra.mxu0 0.0
  %3317 = vmatprep.subr.mxu0 0.0
  %3318 = vmatpush2.msra.mxu0 0.0
  %3319 = vmatprep.mubr.f32.mxu0 0.0
  %3320 = vmatmul.mubr.f32.gmra.mxu0 %v3253
  %v3321 = vpop.f32.mrf.mxu0
  %v3322 = vadd.f32 %v3250, %v3321
  %v3323 = vpop.f32.mrf.mxu0
  %3324 = vdwg.mxu0
  %v3325 = vmax.f32 %v3322, 0.0
  %v3326 = vadd.f32 %v3325, %v3240
  %v3327 = vld [vmem:[%s23] sm:$0xff]
  %v3328 = vld [vmem:[%s23 + $0x8] sm:$0xff]
  %v3329 = vld [vmem:[%s23 + $0x10] sm:$0xff]
  %v3330 = vld [vmem:[%s23 + $0x18] sm:$0xff]
  %v3331 = vld [vmem:[#allocation2] sm:$0x1]
  %v3333 = vlaneseq
  %v3334 = vshrl.u32 %v3333, 7
  %v3335 = vsub.s32 0, %v3334
  %v3336 = vrot.slane %v3331, %v3335
  %v3339 = vsel %vm1317, %v3326, 0
  %3341 = vmatprep.subr.mxu0 0.0
  %3342 = vmatpush1.msra.mxu0 0.0
  %3343 = vmatprep.subr.mxu0 0.0
  %3344 = vmatpush1.msra.mxu0 0.0
  %3345 = vmatprep.subr.mxu0 0.0
  %3346 = vmatpush1.msra.mxu0 0.0
  %3347 = vmatprep.subr.mxu0 0.0
  %3348 = vmatpush1.msra.mxu0 0.0
  %3349 = vmatprep.subr.mxu0 0.0
  %3350 = vmatpush1.msra.mxu0 0.0
  %3351 = vmatprep.subr.mxu0 0.0
  %3352 = vmatpush1.msra.mxu0 0.0
  %3353 = vmatprep.subr.mxu0 0.0
  %3354 = vmatpush1.msra.mxu0 0.0
  %3355 = vmatprep.subr.mxu0 0.0
  %3356 = vmatpush1.msra.mxu0 0.0
  %3357 = vmatprep.subr.mxu0 0.0
  %3358 = vmatpush1.msra.mxu0 0.0
  %3359 = vmatprep.subr.mxu0 0.0
  %3360 = vmatpush1.msra.mxu0 0.0
  %3361 = vmatprep.subr.mxu0 0.0
  %3362 = vmatpush1.msra.mxu0 0.0
  %3363 = vmatprep.subr.mxu0 0.0
  %3364 = vmatpush1.msra.mxu0 0.0
  %3365 = vmatprep.subr.mxu0 0.0
  %3366 = vmatpush1.msra.mxu0 %v3330
  %3367 = vmatprep.subr.mxu0 0.0
  %3368 = vmatpush1.msra.mxu0 %v3329
  %3369 = vmatprep.subr.mxu0 0.0
  %3370 = vmatpush1.msra.mxu0 %v3328
  %3371 = vmatprep.subr.mxu0 0.0
  %3372 = vmatpush1.msra.mxu0 %v3327
  %3373 = vmatprep.subr.mxu0 0.0
  %3374 = vmatpush2.msra.mxu0 0.0
  %3375 = vmatprep.subr.mxu0 0.0
  %3376 = vmatpush2.msra.mxu0 0.0
  %3377 = vmatprep.subr.mxu0 0.0
  %3378 = vmatpush2.msra.mxu0 0.0
  %3379 = vmatprep.subr.mxu0 0.0
  %3380 = vmatpush2.msra.mxu0 0.0
  %3381 = vmatprep.subr.mxu0 0.0
  %3382 = vmatpush2.msra.mxu0 0.0
  %3383 = vmatprep.subr.mxu0 0.0
  %3384 = vmatpush2.msra.mxu0 0.0
  %3385 = vmatprep.subr.mxu0 0.0
  %3386 = vmatpush2.msra.mxu0 0.0
  %3387 = vmatprep.subr.mxu0 0.0
  %3388 = vmatpush2.msra.mxu0 0.0
  %3389 = vmatprep.subr.mxu0 0.0
  %3390 = vmatpush2.msra.mxu0 0.0
  %3391 = vmatprep.subr.mxu0 0.0
  %3392 = vmatpush2.msra.mxu0 0.0
  %3393 = vmatprep.subr.mxu0 0.0
  %3394 = vmatpush2.msra.mxu0 0.0
  %3395 = vmatprep.subr.mxu0 0.0
  %3396 = vmatpush2.msra.mxu0 0.0
  %3397 = vmatprep.subr.mxu0 0.0
  %3398 = vmatpush2.msra.mxu0 0.0
  %3399 = vmatprep.subr.mxu0 0.0
  %3400 = vmatpush2.msra.mxu0 0.0
  %3401 = vmatprep.subr.mxu0 0.0
  %3402 = vmatpush2.msra.mxu0 0.0
  %3403 = vmatprep.subr.mxu0 0.0
  %3404 = vmatpush2.msra.mxu0 0.0
  %3405 = vmatprep.mubr.f32.mxu0 0.0
  %3406 = vmatmul.mubr.f32.gmra.mxu0 %v3339
  %v3407 = vpop.f32.mrf.mxu0
  %v3408 = vadd.f32 %v3336, %v3407
  %v3409 = vpop.f32.mrf.mxu0
  %3410 = vdwg.mxu0
  %vm3411 = vcmask 1024
  %3412 = vst.msk [vmem:[%s79] sm:$0x3] %vm3411, %v3408
  // Predicated region
  $region158: #{tpu_custom_call.1} parent=0 // pred_check
    _
  $region159: #{tpu_custom_call.1} parent=0 // pred_check_branch
    %3414 = sbr.rel (0) target = $region161
  $region160: #{tpu_custom_call.1} parent=0 // pred_region
    _
  $region161: #{tpu_custom_call.1} parent=0 // pred_fallthru
    _
  // Predicated region
  $region162: #{tpu_custom_call.1} parent=0 // pred_check
    _
  $region163: #{tpu_custom_call.1} parent=0 // pred_check_branch
    %3416 = sbr.rel (0) target = $region165
  $region164: #{tpu_custom_call.1} parent=0 // pred_region
    _
  $region165: #{tpu_custom_call.1} parent=0 // pred_fallthru
    _

</llo_original>
